<compile_context>
chip_gen: v7x
topology: tpu7x:2x2x1
jax: 0.10.0
libtpu: 0.0.40
codegen_flags: <defaults>
</compile_context>

<pallas_src>
import math
from functools import partial

import jax
import jax.numpy as jnp
from jax import lax
from jax.experimental import pallas as pl
from jax.experimental.pallas import tpu as pltpu

_BBOX_XFORM_CLIP = math.log(1000.0 / 16.0)


def _round_up(x, m):
    return ((x + m - 1) // m) * m


def _tpu_vmem_capacity():
    try:
        return int(pltpu.get_tpu_info().vmem_capacity_bytes)
    except Exception:
        return 64 << 20            # conservative (v7x-sized) fallback; safe on all parts


def _head_vmem_estimate(C, A, TH, Wp):
    bf2, f4 = 2, 4
    M = TH * Wp
    slab = (TH + 2) * Wp + 128
    xbuf = 2 * C * slab * bf2                    # manual double-buffered bf16 halo slabs
    work = C * M * (f4 + 2 * bf2)                # f32 acc + tap operand + bf16 t
    wts = (9 * C * C + 5 * A * C) * bf2 + (C + 5 * A) * f4
    outs = 2 * 5 * A * M * f4                    # double-buffered box+cls output blocks
    ctr = 2 * 2 * M * f4                         # double-buffered spatial-center blocks
    return xbuf + work + wts + outs + ctr


def _pick_row_tile(H, C, A, Wp, vmem_cap):
    budget = int(vmem_cap * 0.45)                # leave room for compiler scratch/pipeline
    cands = [th for th in range(1, H + 1) if H % th == 0]
    fit = [th for th in cands if _head_vmem_estimate(C, A, th, Wp) <= budget]
    return max(fit) if fit else min(cands)


def _head_vmem_limit(C, A, TH, Wp, vmem_cap):
    est = _head_vmem_estimate(C, A, TH, Wp)
    return int(min(max(int(1.5 * est) + (4 << 20), 32 << 20), int(vmem_cap * 0.80)))


# ------------------- fused RPN head + BoxCoder.decode kernel ------------------

def _rpn_head_kernel(C, A, TH, Wp, clip,
                     xpad_hbm, wconv_ref, bconv_ref, whead_ref, bhead_ref,
                     ctr_ref, aparams_ref,
                     box_ref, cls_ref,
                     xbuf, sem):
    n = pl.program_id(0)
    r = pl.program_id(1)
    nr = pl.num_programs(1)
    M = TH * Wp                                  # lane-dense output width of this row tile
    slab = (TH + 2) * Wp + 128                   # halo slab + 128 zero lanes of tap slack

    def start_fetch(rb, slot):
        pltpu.make_async_copy(
            xpad_hbm.at[n, :, pl.ds(rb * TH * Wp, slab)],
            xbuf.at[slot], sem.at[slot]).start()

    # prime the halo-DMA pipeline at the start of each image's row sweep
    @pl.when(r == 0)
    def _():
        start_fetch(0, 0)

    # prefetch the next row tile of this image while computing the current one
    @pl.when(r + 1 < nr)
    def _():
        start_fetch(r + 1, (r + 1) % 2)

    slot = r % 2
    pltpu.make_async_copy(
        xpad_hbm.at[n, :, pl.ds(r * TH * Wp, slab)],
        xbuf.at[slot], sem.at[slot]).wait()
    xcur = xbuf.at[slot]                         # (C, slab) bf16 ref view

    # 3x3 conv as 9 bf16 MXU matmuls into ONE f32 accumulator. Each (dy, dx) tap is a
    # static lane-slice of the flattened slab; the dx offset folds into the slice start
    # (the few lanes that spill past a row only feed padded output columns, which the
    # wrapper slices off).
    acc = jnp.zeros((C, M), jnp.float32)
    for dy in range(3):
        for dx in range(3):
            tap = xcur[:, pl.ds(dy * Wp + dx, M)]            # (C, TH*Wp) bf16
            acc = acc + jnp.dot(wconv_ref[3 * dy + dx], tap,
                                preferred_element_type=jnp.float32)
    t = jnp.maximum(acc + bconv_ref[...], 0.0).astype(jnp.bfloat16)

    # fused objectness + bbox heads: one (5A, C) @ (C, TH*Wp) bf16 matmul, f32 acc.
    out = (jnp.dot(whead_ref[...], t, preferred_element_type=jnp.float32)
           + bhead_ref[...])                     # (5A, M): rows [dx(A), dy(A), dw(A), dh(A), cls(A)]

    # fused BoxCoder.decode (weights 1,1,1,1) + sigmoid epilogue — rides in the
    # VPU/EUP slack of an MXU-bound kernel.
    w_a = aparams_ref[0:A, 0:1]                  # (A, 1) anchor widths
    h_a = aparams_ref[A:, 0:1]                   # (A, 1) anchor heights
    cxo = aparams_ref[0:A, 1:2]                  # exact base-anchor center offsets (≈0)
    cyo = aparams_ref[A:, 1:2]
    cx = ctr_ref[0:1] + cxo                      # (A, M) spatial centers per anchor
    cy = ctr_ref[1:2] + cyo
    pcx = out[0:A] * w_a + cx
    pcy = out[A:2 * A] * h_a + cy
    pw = jnp.exp(jnp.minimum(out[2 * A:3 * A], clip)) * w_a
    ph = jnp.exp(jnp.minimum(out[3 * A:4 * A], clip)) * h_a
    box_ref[0, 0:A] = pcx - 0.5 * pw
    box_ref[0, A:2 * A] = pcy - 0.5 * ph
    box_ref[0, 2 * A:3 * A] = pcx + 0.5 * pw
    box_ref[0, 3 * A:4 * A] = pcy + 0.5 * ph
    cls_ref[0] = jax.nn.sigmoid(out[4 * A:])


# ------------------------------ anchor helpers --------------------------------

def _base_anchors(size, aspect_ratios):
    ratios = jnp.asarray(aspect_ratios, jnp.float32)
    h_ratios = jnp.sqrt(ratios)
    w_ratios = 1.0 / h_ratios
    ws = w_ratios * size
    hs = h_ratios * size
    return jnp.round(jnp.stack([-ws, -hs, ws, hs], axis=1) / 2.0)        # (A, 4)


def generate_anchors(size, aspect_ratios, feat_h, feat_w, stride_h, stride_w):
    base = _base_anchors(size, aspect_ratios)
    shifts_x = jnp.arange(feat_w, dtype=jnp.float32) * stride_w
    shifts_y = jnp.arange(feat_h, dtype=jnp.float32) * stride_h
    sy, sx = jnp.meshgrid(shifts_y, shifts_x, indexing="ij")
    shifts = jnp.stack([sx.ravel(), sy.ravel(), sx.ravel(), sy.ravel()], axis=1)
    # anchor-major ordering k = a*H*W + hw to match the transposed head layout
    return (base[:, None, :] + shifts[None, :, :]).reshape(-1, 4)        # (A*H*W, 4)


# -------------------------- head+decode host wrapper ---------------------------

def rpn_head_decode(x_nchw, params, A, image_size, anchor_size, aspect_ratios,
                    row_tile=None):
    """RPNHead + BoxCoder.decode + sigmoid fused in one Pallas kernel.
    Returns boxes_t (N, 4, K) [x1,y1,x2,y2] and probs (N, K), K = A*H*W anchor-major."""
    N, C, H, W = x_nchw.shape
    Wp = _round_up(W + 2, 128)
    vmem_cap = _tpu_vmem_capacity()
    TH = _pick_row_tile(H, C, A, Wp, vmem_cap) if row_tile is None else row_tile
    assert H % TH == 0
    RT = H // TH
    img_h, img_w = image_size
    stride_h, stride_w = img_h // H, img_w // W

    # bf16 feature map, zero-padded to (H+2, Wp), flattened per (n, c) for contiguous
    # halo DMAs, plus 128 extra zero lanes of tap slack at the very end.
    xpad = jnp.pad(x_nchw.astype(jnp.bfloat16),
                   ((0, 0), (0, 0), (1, 1), (1, Wp - W - 1)))
    xpad = xpad.reshape(N, C, (H + 2) * Wp)
    xpad = jnp.pad(xpad, ((0, 0), (0, 0), (0, 128)))

    # conv weights as 9 x (Cout, Cin) bf16; fused head rows = [box coord-major ; cls]
    wconv9 = jnp.transpose(params["w_conv"], (0, 1, 3, 2)).reshape(9, C, C)
    wconv9 = wconv9.astype(jnp.bfloat16)
    bconv = params["b_conv"].reshape(C, 1).astype(jnp.float32)
    w_box_t = params["w_box"].reshape(C, A, 4).transpose(2, 1, 0).reshape(4 * A, C)
    w_head = jnp.concatenate([w_box_t, params["w_cls"].T], axis=0).astype(jnp.bfloat16)
    b_box_t = params["b_box"].reshape(A, 4).T.reshape(4 * A)
    b_head = jnp.concatenate([b_box_t, params["b_cls"]], axis=0)
    b_head = b_head.reshape(5 * A, 1).astype(jnp.float32)

    # anchor parameters: per-anchor (w, h) + exact base-center offsets; batch-invariant
    # spatial centers laid out in the kernel's padded-lane geometry.
    base = _base_anchors(anchor_size, aspect_ratios)                     # (A, 4)
    wh = jnp.concatenate([base[:, 2] - base[:, 0], base[:, 3] - base[:, 1]])
    coff = 0.5 * jnp.concatenate([base[:, 0] + base[:, 2], base[:, 1] + base[:, 3]])
    aparams = jnp.stack([wh, coff], axis=1).astype(jnp.float32)          # (2A, 2)
    cols = jnp.arange(Wp, dtype=jnp.float32) * stride_w
    rows = jnp.arange(H, dtype=jnp.float32) * stride_h
    ctr = jnp.stack([jnp.tile(cols, H), jnp.repeat(rows, Wp)], axis=0)   # (2, H*Wp)

    kernel = partial(_rpn_head_kernel, C, A, TH, Wp, _BBOX_XFORM_CLIP)
    boxes, probs = pl.pallas_call(
        kernel,
        out_shape=(jax.ShapeDtypeStruct((N, 4 * A, H * Wp), jnp.float32),
                   jax.ShapeDtypeStruct((N, A, H * Wp), jnp.float32)),
        grid=(N, RT),
        in_specs=[
            pl.BlockSpec(memory_space=pl.ANY),                 # padded feature map, HBM
            pl.BlockSpec((9, C, C), lambda n, r: (0, 0, 0)),
            pl.BlockSpec((C, 1), lambda n, r: (0, 0)),
            pl.BlockSpec((5 * A, C), lambda n, r: (0, 0)),
            pl.BlockSpec((5 * A, 1), lambda n, r: (0, 0)),
            pl.BlockSpec((2, TH * Wp), lambda n, r: (0, r)),
            pl.BlockSpec((2 * A, 2), lambda n, r: (0, 0)),
        ],
        out_specs=(pl.BlockSpec((1, 4 * A, TH * Wp), lambda n, r: (n, 0, r)),
                   pl.BlockSpec((1, A, TH * Wp), lambda n, r: (n, 0, r))),
        scratch_shapes=[pltpu.VMEM((2, C, (TH + 2) * Wp + 128), jnp.bfloat16),
                        pltpu.SemaphoreType.DMA((2,))],
        compiler_params=pltpu.CompilerParams(
            # batch axis parallel (megacore); row axis arbitrary because of the
            # manual cross-step halo prefetch chain.
            dimension_semantics=("parallel", "arbitrary"),
            vmem_limit_bytes=_head_vmem_limit(C, A, TH, Wp, vmem_cap)),
    )(xpad, wconv9, bconv, w_head, b_head, ctr, aparams)

    # strip the lane padding host-side (cheap XLA slice) and expose anchor-major K
    K = A * H * W
    boxes_t = boxes.reshape(N, 4, A, H, Wp)[:, :, :, :, :W].reshape(N, 4, K)
    probs = probs.reshape(N, A, H, Wp)[:, :, :, :W].reshape(N, K)
    return boxes_t, probs


# --------------------------- plain-JAX glue (NMS etc.) -------------------------

def _nms_keep_blocked(boxes, valid, iou_thresh, block=128):
    """Exact greedy NMS on score-sorted boxes, processed in `block`-candidate tiles.
    Cross-tile suppression is vectorized; only the intra-tile scan is sequential."""
    M = boxes.shape[0]
    nb = M // block
    x1, y1, x2, y2 = boxes[:, 0], boxes[:, 1], boxes[:, 2], boxes[:, 3]
    areas = (x2 - x1) * (y2 - y1)
    idx_all = jnp.arange(M)
    bidx = jnp.arange(block)

    def outer(b, keep):
        s = b * block
        bb = lax.dynamic_slice_in_dim(boxes, s, block, 0)               # (B, 4)
        bv = lax.dynamic_slice_in_dim(valid, s, block, 0)               # (B,)
        ba = lax.dynamic_slice_in_dim(areas, s, block, 0)               # (B,)
        xx1 = jnp.maximum(bb[:, 0:1], x1[None, :])
        yy1 = jnp.maximum(bb[:, 1:2], y1[None, :])
        xx2 = jnp.minimum(bb[:, 2:3], x2[None, :])
        yy2 = jnp.minimum(bb[:, 3:4], y2[None, :])
        inter = jnp.clip(xx2 - xx1, 0.0) * jnp.clip(yy2 - yy1, 0.0)     # (B, M)
        union = ba[:, None] + areas[None, :] - inter
        over = inter / jnp.maximum(union, 1e-8) > iou_thresh            # eps: no 0/0 NaN
        # suppression by already-decided kept boxes from earlier tiles (vectorized)
        cross = jnp.any(over & keep[None, :] & (idx_all[None, :] < s), axis=1)
        # intra-tile greedy scan on the (B, B) tile only
        tile = lax.dynamic_slice_in_dim(over, s, block, axis=1)         # (B, B)

        def inner(i, bkeep):
            sup = jnp.any(bkeep & tile[i] & (bidx < i))
            return bkeep.at[i].set(bv[i] & (~cross[i]) & (~sup))

        bkeep = lax.fori_loop(0, block, inner, jnp.zeros((block,), jnp.bool_),
                              unroll=8)
        return lax.dynamic_update_slice_in_dim(keep, bkeep, s, 0)

    return lax.fori_loop(0, nb, outer, jnp.zeros((M,), jnp.bool_))


def filter_proposals_one(boxes_t, scores, img_hw, *, pre_n, post_n,
                         nms_thresh, score_thresh, min_size, nms_block=128):
    """Per-image filter_proposals (vmapped over the batch by the caller)."""
    K = scores.shape[0]
    pre = min(pre_n, K)                                   # det_utils._topk_min
    top_scores, top_idx = lax.top_k(scores, pre)          # sigmoid is monotonic
    b = boxes_t[:, top_idx]                               # gather in (4, K) layout
    x1 = jnp.clip(b[0], 0.0, img_hw[1])                   # clip_boxes_to_image
    y1 = jnp.clip(b[1], 0.0, img_hw[0])
    x2 = jnp.clip(b[2], 0.0, img_hw[1])
    y2 = jnp.clip(b[3], 0.0, img_hw[0])
    boxes = jnp.stack([x1, y1, x2, y2], axis=1)           # (pre, 4)
    valid = ((x2 - x1) >= min_size) & ((y2 - y1) >= min_size)   # remove_small_boxes
    valid = valid & (top_scores >= score_thresh)
    M = _round_up(pre, nms_block)
    pad = M - pre
    boxes_p = jnp.pad(boxes, ((0, pad), (0, 0)))
    valid_p = jnp.pad(valid, (0, pad))
    scores_p = jnp.pad(top_scores, (0, pad))
    keep = _nms_keep_blocked(boxes_p, valid_p, nms_thresh, block=nms_block)
    perm = jnp.argsort(jnp.logical_not(keep), stable=True)      # kept first, score order kept
    post = min(post_n, M)
    sel = perm[:post]
    sel_keep = keep[sel]
    out_boxes = jnp.where(sel_keep[:, None], boxes_p[sel], 0.0)  # padded to post_nms_top_n
    out_scores = jnp.where(sel_keep, scores_p[sel], 0.0)
    return out_boxes, out_scores, sel_keep.sum()


# module-level jit (static config) so filter_proposals is traced/compiled only once
@partial(jax.jit, static_argnames=("pre_n", "post_n", "nms_thresh", "score_thresh",
                                   "min_size", "nms_block"))
def filter_proposals_batch(boxes_t, probs, img_hw, *, pre_n, post_n, nms_thresh,
                           score_thresh, min_size, nms_block=128):
    fn = partial(filter_proposals_one, pre_n=pre_n, post_n=post_n,
                 nms_thresh=nms_thresh, score_thresh=score_thresh,
                 min_size=min_size, nms_block=nms_block)
    return jax.vmap(fn)(boxes_t, probs, img_hw)


def rpn_forward(x_nchw, params, image_sizes, cfg, row_tile=None):
    """RegionProposalNetwork.forward (inference path, single FPN level)."""
    A = cfg["num_anchors"]
    # TODO(synk): anchor strides use image_sizes[0] for the whole batch (padded-batch
    # torchvision caveat); per-image clipping below uses the true per-image sizes.
    boxes_t, probs = rpn_head_decode(x_nchw, params, A, image_sizes[0],
                                     cfg["anchor_size"], cfg["aspect_ratios"],
                                     row_tile=row_tile)
    img_hw = jnp.asarray(image_sizes, dtype=jnp.float32)             # (N, 2) = (h, w)
    boxes_out, scores_out, counts = filter_proposals_batch(
        boxes_t, probs, img_hw,
        pre_n=cfg["pre_nms_top_n"], post_n=cfg["post_nms_top_n"],
        nms_thresh=cfg["nms_thresh"], score_thresh=cfg["score_thresh"],
        min_size=cfg["min_size"])
    return boxes_out, scores_out, counts              # losses == {} in eval mode


# ------------------------------- f32 reference --------------------------------

def head_decode_ref(x, params, A, image_size, anchor_size, aspect_ratios):
    """Plain-JAX f32 reference: conv3x3+ReLU, 1x1 heads, BoxCoder.decode, sigmoid."""
    N, C, H, W = x.shape
    conv = lax.conv_general_dilated(x, params["w_conv"], (1, 1), "SAME",
                                    dimension_numbers=("NCHW", "HWIO", "NCHW"))
    t = jax.nn.relu(conv + params["b_conv"][None, :, None, None])
    cls = jnp.einsum("nchw,ca->nahw", t, params["w_cls"]) + params["b_cls"][None, :, None, None]
    box = jnp.einsum("nchw,cd->ndhw", t, params["w_box"]) + params["b_box"][None, :, None, None]
    logits = cls.reshape(N, A * H * W)
    deltas = box.reshape(N, A, 4, H * W).transpose(0, 2, 1, 3).reshape(N, 4, A * H * W)
    img_h, img_w = image_size
    anchors = generate_anchors(anchor_size, aspect_ratios, H, W, img_h // H, img_w // W)
    aw = anchors[:, 2] - anchors[:, 0]
    ah = anchors[:, 3] - anchors[:, 1]
    acx = anchors[:, 0] + 0.5 * aw
    acy = anchors[:, 1] + 0.5 * ah
    dx, dy = deltas[:, 0], deltas[:, 1]
    dw = jnp.minimum(deltas[:, 2], _BBOX_XFORM_CLIP)
    dh = jnp.minimum(deltas[:, 3], _BBOX_XFORM_CLIP)
    pcx = dx * aw + acx
    pcy = dy * ah + acy
    pw = jnp.exp(dw) * aw
    ph = jnp.exp(dh) * ah
    boxes = jnp.stack([pcx - 0.5 * pw, pcy - 0.5 * ph,
                       pcx + 0.5 * pw, pcy + 0.5 * ph], axis=1)
    return boxes, jax.nn.sigmoid(logits)


if __name__ == "__main__":
    N, C, H, W = 2, 8, 16, 16
    A = 3                                             # len(aspect_ratios) per level
    img_h = img_w = 64
    image_sizes = [(img_h, img_w)] * N

    key = jax.random.PRNGKey(0)
    k_x, k1, k2, k3 = jax.random.split(key, 4)
    x = jax.random.normal(k_x, (N, C, H, W), jnp.float32)      # NCHW, like PyTorch
    # RPNHead init: normal(std=0.01), zero bias
    params = {
        "w_conv": 0.01 * jax.random.normal(k1, (3, 3, C, C), jnp.float32),
        "b_conv": jnp.zeros((C,), jnp.float32),
        "w_cls": 0.01 * jax.random.normal(k2, (C, A), jnp.float32),
        "b_cls": jnp.zeros((A,), jnp.float32),
        "w_box": 0.01 * jax.random.normal(k3, (C, 4 * A), jnp.float32),
        "b_box": jnp.zeros((4 * A,), jnp.float32),
    }
    cfg = dict(num_anchors=A, anchor_size=32.0, aspect_ratios=(0.5, 1.0, 2.0),
               pre_nms_top_n=200, post_nms_top_n=50, nms_thresh=0.7,
               score_thresh=0.0, min_size=0.001)

    # row_tile=8 deliberately exercises the halo DMA + prefetch chain (RT=2) even at
    # these small demo shapes; the VMEM-aware heuristic would otherwise pick TH = H.
    boxes_k, probs_k = rpn_head_decode(x, params, A, image_sizes[0],
                                       cfg["anchor_size"], cfg["aspect_ratios"],
                                       row_tile=8)
    boxes_r, probs_r = head_decode_ref(x, params, A, image_sizes[0],
                                       cfg["anchor_size"], cfg["aspect_ratios"])
    assert float(jnp.max(jnp.abs(boxes_k - boxes_r))) < 2e-2      # bf16 MXU tolerance
    assert float(jnp.max(jnp.abs(probs_k - probs_r))) < 2e-3

    boxes, scores, counts = rpn_forward(x, params, image_sizes, cfg, row_tile=8)
    jax.block_until_ready((boxes, scores, counts))
    print("KERNEL_OK")
</pallas_src>

<mosaic_0001>
module attributes {stable_mosaic.version = 11 : i64} {
  func.func @_rpn_head_kernel(%arg0: i32, %arg1: i32, %arg2: memref<2x8x2432xbf16, #tpu.memory_space<any>>, %arg3: memref<9x8x8xbf16, #tpu.memory_space<vmem>>, %arg4: memref<8x1xf32, #tpu.memory_space<vmem>>, %arg5: memref<15x8xbf16, #tpu.memory_space<vmem>>, %arg6: memref<15x1xf32, #tpu.memory_space<vmem>>, %arg7: memref<2x1024xf32, #tpu.memory_space<vmem>>, %arg8: memref<6x2xf32, #tpu.memory_space<vmem>>, %arg9: memref<1x12x1024xf32, #tpu.memory_space<vmem>>, %arg10: memref<1x3x1024xf32, #tpu.memory_space<vmem>>, %arg11: memref<2x8x1408xbf16, #tpu.memory_space<vmem>>, %arg12: memref<2x!tpu.dma_semaphore, #tpu.memory_space<semaphore_mem>>) attributes {dimension_semantics = [#tpu.dimension_semantics<parallel>, #tpu.dimension_semantics<arbitrary>], iteration_bounds = array<i64: 2, 2>, scalar_prefetch = 0 : i64, scratch_operands = 2 : i64, tpu.core_type = #tpu.core_type<tc>, window_params = [{}, {pipeline_mode = #tpu.pipeline_mode<synchronous>, transform_indices = @transform_1, window_bounds = array<i64: 9, 8, 8>}, {pipeline_mode = #tpu.pipeline_mode<synchronous>, transform_indices = @transform_2, window_bounds = array<i64: 8, 1>}, {pipeline_mode = #tpu.pipeline_mode<synchronous>, transform_indices = @transform_3, window_bounds = array<i64: 15, 8>}, {pipeline_mode = #tpu.pipeline_mode<synchronous>, transform_indices = @transform_4, window_bounds = array<i64: 15, 1>}, {transform_indices = @transform_5, window_bounds = array<i64: 2, 1024>}, {pipeline_mode = #tpu.pipeline_mode<synchronous>, transform_indices = @transform_6, window_bounds = array<i64: 6, 2>}, {transform_indices = @transform_7, window_bounds = array<i64: 1, 12, 1024>}, {transform_indices = @transform_8, window_bounds = array<i64: 1, 3, 1024>}]} {
    %c0_i32 = arith.constant 0 : i32
    %0 = arith.cmpi eq, %arg1, %c0_i32 : i32
    %1 = arith.extui %0 : i1 to i32
    %c0_i32_0 = arith.constant 0 : i32
    %2 = arith.cmpi ne, %1, %c0_i32_0 : i32
    scf.if %2 {
      %c0_i32_109 = arith.constant 0 : i32
      %c0_i32_110 = arith.constant 0 : i32
      %c0_i32_111 = arith.constant 0 : i32
      %c0_i32_112 = arith.constant 0 : i32
      %165 = tpu.memref_slice %arg2[%arg0, %c0_i32_111, %c0_i32_112] : memref<2x8x2432xbf16, #tpu.memory_space<any>> -> memref<1x8x1408xbf16, #tpu.memory_space<any>>
      %166 = tpu.memref_squeeze %165 : memref<1x8x1408xbf16, #tpu.memory_space<any>> -> memref<8x1408xbf16, #tpu.memory_space<any>>
      %c0_i32_113 = arith.constant 0 : i32
      %c0_i32_114 = arith.constant 0 : i32
      %167 = tpu.memref_slice %arg11[%c0_i32_109, %c0_i32_113, %c0_i32_114] : memref<2x8x1408xbf16, #tpu.memory_space<vmem>> -> memref<1x8x1408xbf16, #tpu.memory_space<vmem>>
      %168 = tpu.memref_squeeze %167 : memref<1x8x1408xbf16, #tpu.memory_space<vmem>> -> memref<8x1408xbf16, #tpu.memory_space<vmem>>
      %169 = tpu.memref_slice %arg12[%c0_i32_110] : memref<2x!tpu.dma_semaphore, #tpu.memory_space<semaphore_mem>> -> memref<1x!tpu.dma_semaphore, #tpu.memory_space<semaphore_mem>>
      %170 = tpu.memref_squeeze %169 : memref<1x!tpu.dma_semaphore, #tpu.memory_space<semaphore_mem>> -> memref<!tpu.dma_semaphore, #tpu.memory_space<semaphore_mem>>
      tpu.enqueue_dma source(%166 : memref<8x1408xbf16, #tpu.memory_space<any>>) target(%168 : memref<8x1408xbf16, #tpu.memory_space<vmem>>) target_semaphore(%170 : memref<!tpu.dma_semaphore, #tpu.memory_space<semaphore_mem>>)
    } else {
    }
    %c1_i32 = arith.constant 1 : i32
    %3 = arith.addi %arg1, %c1_i32 : i32
    %c2_i32 = arith.constant 2 : i32
    %4 = arith.cmpi slt, %3, %c2_i32 : i32
    %5 = arith.extui %4 : i1 to i32
    %c0_i32_1 = arith.constant 0 : i32
    %6 = arith.cmpi ne, %5, %c0_i32_1 : i32
    scf.if %6 {
      %c1_i32_109 = arith.constant 1 : i32
      %165 = arith.addi %arg1, %c1_i32_109 : i32
      %c1_i32_110 = arith.constant 1 : i32
      %166 = arith.addi %arg1, %c1_i32_110 : i32
      %c2_i32_111 = arith.constant 2 : i32
      %c0_i32_112 = arith.constant 0 : i32
      %167 = arith.cmpi eq, %c2_i32_111, %c0_i32_112 : i32
      %c1_i32_113 = arith.constant 1 : i32
      %168 = arith.select %167, %c1_i32_113, %c2_i32_111 : i32
      %169 = arith.remsi %166, %168 : i32
      %c0_i32_114 = arith.constant 0 : i32
      %170 = arith.cmpi ne, %169, %c0_i32_114 : i32
      %c0_i32_115 = arith.constant 0 : i32
      %171 = arith.cmpi slt, %169, %c0_i32_115 : i32
      %c0_i32_116 = arith.constant 0 : i32
      %172 = arith.cmpi slt, %168, %c0_i32_116 : i32
      %173 = arith.xori %171, %172 : i1
      %174 = arith.andi %173, %170 : i1
      %175 = arith.addi %169, %168 : i32
      %176 = arith.select %174, %175, %169 : i32
      %c8_i32_117 = arith.constant 8 : i32
      %177 = arith.muli %165, %c8_i32_117 : i32
      %c128_i32_118 = arith.constant 128 : i32
      %178 = arith.muli %177, %c128_i32_118 : i32
      %c0_i32_119 = arith.constant 0 : i32
      %179 = tpu.memref_slice %arg2[%arg0, %c0_i32_119, %178] : memref<2x8x2432xbf16, #tpu.memory_space<any>> -> memref<1x8x1408xbf16, #tpu.memory_space<any>>
      %180 = tpu.memref_squeeze %179 : memref<1x8x1408xbf16, #tpu.memory_space<any>> -> memref<8x1408xbf16, #tpu.memory_space<any>>
      %c0_i32_120 = arith.constant 0 : i32
      %c0_i32_121 = arith.constant 0 : i32
      %181 = tpu.memref_slice %arg11[%176, %c0_i32_120, %c0_i32_121] : memref<2x8x1408xbf16, #tpu.memory_space<vmem>> -> memref<1x8x1408xbf16, #tpu.memory_space<vmem>>
      %182 = tpu.memref_squeeze %181 : memref<1x8x1408xbf16, #tpu.memory_space<vmem>> -> memref<8x1408xbf16, #tpu.memory_space<vmem>>
      %183 = tpu.memref_slice %arg12[%176] : memref<2x!tpu.dma_semaphore, #tpu.memory_space<semaphore_mem>> -> memref<1x!tpu.dma_semaphore, #tpu.memory_space<semaphore_mem>>
      %184 = tpu.memref_squeeze %183 : memref<1x!tpu.dma_semaphore, #tpu.memory_space<semaphore_mem>> -> memref<!tpu.dma_semaphore, #tpu.memory_space<semaphore_mem>>
      tpu.enqueue_dma source(%180 : memref<8x1408xbf16, #tpu.memory_space<any>>) target(%182 : memref<8x1408xbf16, #tpu.memory_space<vmem>>) target_semaphore(%184 : memref<!tpu.dma_semaphore, #tpu.memory_space<semaphore_mem>>)
    } else {
    }
    %c2_i32_2 = arith.constant 2 : i32
    %c0_i32_3 = arith.constant 0 : i32
    %7 = arith.cmpi eq, %c2_i32_2, %c0_i32_3 : i32
    %c1_i32_4 = arith.constant 1 : i32
    %8 = arith.select %7, %c1_i32_4, %c2_i32_2 : i32
    %9 = arith.remsi %arg1, %8 : i32
    %c0_i32_5 = arith.constant 0 : i32
    %10 = arith.cmpi ne, %9, %c0_i32_5 : i32
    %c0_i32_6 = arith.constant 0 : i32
    %11 = arith.cmpi slt, %9, %c0_i32_6 : i32
    %c0_i32_7 = arith.constant 0 : i32
    %12 = arith.cmpi slt, %8, %c0_i32_7 : i32
    %13 = arith.xori %11, %12 : i1
    %14 = arith.andi %13, %10 : i1
    %15 = arith.addi %9, %8 : i32
    %16 = arith.select %14, %15, %9 : i32
    %c8_i32 = arith.constant 8 : i32
    %17 = arith.muli %arg1, %c8_i32 : i32
    %c128_i32 = arith.constant 128 : i32
    %18 = arith.muli %17, %c128_i32 : i32
    %c0_i32_8 = arith.constant 0 : i32
    %19 = tpu.memref_slice %arg2[%arg0, %c0_i32_8, %18] : memref<2x8x2432xbf16, #tpu.memory_space<any>> -> memref<1x8x1408xbf16, #tpu.memory_space<any>>
    %20 = tpu.memref_squeeze %19 : memref<1x8x1408xbf16, #tpu.memory_space<any>> -> memref<8x1408xbf16, #tpu.memory_space<any>>
    %c0_i32_9 = arith.constant 0 : i32
    %c0_i32_10 = arith.constant 0 : i32
    %21 = tpu.memref_slice %arg11[%16, %c0_i32_9, %c0_i32_10] : memref<2x8x1408xbf16, #tpu.memory_space<vmem>> -> memref<1x8x1408xbf16, #tpu.memory_space<vmem>>
    %22 = tpu.memref_squeeze %21 : memref<1x8x1408xbf16, #tpu.memory_space<vmem>> -> memref<8x1408xbf16, #tpu.memory_space<vmem>>
    %23 = tpu.memref_slice %arg12[%16] : memref<2x!tpu.dma_semaphore, #tpu.memory_space<semaphore_mem>> -> memref<1x!tpu.dma_semaphore, #tpu.memory_space<semaphore_mem>>
    %24 = tpu.memref_squeeze %23 : memref<1x!tpu.dma_semaphore, #tpu.memory_space<semaphore_mem>> -> memref<!tpu.dma_semaphore, #tpu.memory_space<semaphore_mem>>
    tpu.wait_dma2 semaphore(%24 : memref<!tpu.dma_semaphore, #tpu.memory_space<semaphore_mem>>) src(%20 : memref<8x1408xbf16, #tpu.memory_space<any>>) dst(%22 : memref<8x1408xbf16, #tpu.memory_space<vmem>>)
    %cst = arith.constant 0.000000e+00 : f32
    %25 = vector.broadcast %cst : f32 to vector<8x1024xf32>
    %c0_i32_11 = arith.constant 0 : i32
    %c0_i32_12 = arith.constant 0 : i32
    %26 = tpu.memref_slice %arg11[%16, %c0_i32_11, %c0_i32_12] : memref<2x8x1408xbf16, #tpu.memory_space<vmem>> -> memref<1x8x1408xbf16, #tpu.memory_space<vmem>>
    %27 = tpu.memref_squeeze %26 : memref<1x8x1408xbf16, #tpu.memory_space<vmem>> -> memref<8x1408xbf16, #tpu.memory_space<vmem>>
    %c0 = arith.constant 0 : index
    %c0_13 = arith.constant 0 : index
    %28 = vector.load %27[%c0, %c0_13] : memref<8x1408xbf16, #tpu.memory_space<vmem>>, vector<8x1024xbf16>
    %c0_14 = arith.constant 0 : index
    %c0_15 = arith.constant 0 : index
    %c0_16 = arith.constant 0 : index
    %29 = vector.load %arg3[%c0_14, %c0_15, %c0_16] : memref<9x8x8xbf16, #tpu.memory_space<vmem>>, vector<1x8x8xbf16>
    %30 = vector.shape_cast %29 : vector<1x8x8xbf16> to vector<8x8xbf16>
    %cst_17 = arith.constant dense<0.000000e+00> : vector<8x1024xf32>
    %31 = tpu.matmul %30, %28, %cst_17 {dimension_numbers = #tpu.dot_dimension_numbers<[1], [0], [0], [1], [0, 0, 1, 1], [], []>} : vector<8x8xbf16>, vector<8x1024xbf16>, vector<8x1024xf32> -> vector<8x1024xf32>
    %32 = arith.addf %25, %31 : vector<8x1024xf32>
    %c0_i32_18 = arith.constant 0 : i32
    %c0_i32_19 = arith.constant 0 : i32
    %33 = tpu.memref_slice %arg11[%16, %c0_i32_18, %c0_i32_19] : memref<2x8x1408xbf16, #tpu.memory_space<vmem>> -> memref<1x8x1408xbf16, #tpu.memory_space<vmem>>
    %34 = tpu.memref_squeeze %33 : memref<1x8x1408xbf16, #tpu.memory_space<vmem>> -> memref<8x1408xbf16, #tpu.memory_space<vmem>>
    %c0_20 = arith.constant 0 : index
    %c1 = arith.constant 1 : index
    %35 = vector.load %34[%c0_20, %c1] : memref<8x1408xbf16, #tpu.memory_space<vmem>>, vector<8x1024xbf16>
    %c1_21 = arith.constant 1 : index
    %c0_22 = arith.constant 0 : index
    %c0_23 = arith.constant 0 : index
    %36 = vector.load %arg3[%c1_21, %c0_22, %c0_23] : memref<9x8x8xbf16, #tpu.memory_space<vmem>>, vector<1x8x8xbf16>
    %37 = vector.shape_cast %36 : vector<1x8x8xbf16> to vector<8x8xbf16>
    %cst_24 = arith.constant dense<0.000000e+00> : vector<8x1024xf32>
    %38 = tpu.matmul %37, %35, %cst_24 {dimension_numbers = #tpu.dot_dimension_numbers<[1], [0], [0], [1], [0, 0, 1, 1], [], []>} : vector<8x8xbf16>, vector<8x1024xbf16>, vector<8x1024xf32> -> vector<8x1024xf32>
    %39 = arith.addf %32, %38 : vector<8x1024xf32>
    %c0_i32_25 = arith.constant 0 : i32
    %c0_i32_26 = arith.constant 0 : i32
    %40 = tpu.memref_slice %arg11[%16, %c0_i32_25, %c0_i32_26] : memref<2x8x1408xbf16, #tpu.memory_space<vmem>> -> memref<1x8x1408xbf16, #tpu.memory_space<vmem>>
    %41 = tpu.memref_squeeze %40 : memref<1x8x1408xbf16, #tpu.memory_space<vmem>> -> memref<8x1408xbf16, #tpu.memory_space<vmem>>
    %c0_27 = arith.constant 0 : index
    %c2 = arith.constant 2 : index
    %42 = vector.load %41[%c0_27, %c2] : memref<8x1408xbf16, #tpu.memory_space<vmem>>, vector<8x1024xbf16>
    %c2_28 = arith.constant 2 : index
    %c0_29 = arith.constant 0 : index
    %c0_30 = arith.constant 0 : index
    %43 = vector.load %arg3[%c2_28, %c0_29, %c0_30] : memref<9x8x8xbf16, #tpu.memory_space<vmem>>, vector<1x8x8xbf16>
    %44 = vector.shape_cast %43 : vector<1x8x8xbf16> to vector<8x8xbf16>
    %cst_31 = arith.constant dense<0.000000e+00> : vector<8x1024xf32>
    %45 = tpu.matmul %44, %42, %cst_31 {dimension_numbers = #tpu.dot_dimension_numbers<[1], [0], [0], [1], [0, 0, 1, 1], [], []>} : vector<8x8xbf16>, vector<8x1024xbf16>, vector<8x1024xf32> -> vector<8x1024xf32>
    %46 = arith.addf %39, %45 : vector<8x1024xf32>
    %c0_i32_32 = arith.constant 0 : i32
    %c0_i32_33 = arith.constant 0 : i32
    %47 = tpu.memref_slice %arg11[%16, %c0_i32_32, %c0_i32_33] : memref<2x8x1408xbf16, #tpu.memory_space<vmem>> -> memref<1x8x1408xbf16, #tpu.memory_space<vmem>>
    %48 = tpu.memref_squeeze %47 : memref<1x8x1408xbf16, #tpu.memory_space<vmem>> -> memref<8x1408xbf16, #tpu.memory_space<vmem>>
    %c0_34 = arith.constant 0 : index
    %c128 = arith.constant 128 : index
    %49 = vector.load %48[%c0_34, %c128] : memref<8x1408xbf16, #tpu.memory_space<vmem>>, vector<8x1024xbf16>
    %c3 = arith.constant 3 : index
    %c0_35 = arith.constant 0 : index
    %c0_36 = arith.constant 0 : index
    %50 = vector.load %arg3[%c3, %c0_35, %c0_36] : memref<9x8x8xbf16, #tpu.memory_space<vmem>>, vector<1x8x8xbf16>
    %51 = vector.shape_cast %50 : vector<1x8x8xbf16> to vector<8x8xbf16>
    %cst_37 = arith.constant dense<0.000000e+00> : vector<8x1024xf32>
    %52 = tpu.matmul %51, %49, %cst_37 {dimension_numbers = #tpu.dot_dimension_numbers<[1], [0], [0], [1], [0, 0, 1, 1], [], []>} : vector<8x8xbf16>, vector<8x1024xbf16>, vector<8x1024xf32> -> vector<8x1024xf32>
    %53 = arith.addf %46, %52 : vector<8x1024xf32>
    %c0_i32_38 = arith.constant 0 : i32
    %c0_i32_39 = arith.constant 0 : i32
    %54 = tpu.memref_slice %arg11[%16, %c0_i32_38, %c0_i32_39] : memref<2x8x1408xbf16, #tpu.memory_space<vmem>> -> memref<1x8x1408xbf16, #tpu.memory_space<vmem>>
    %55 = tpu.memref_squeeze %54 : memref<1x8x1408xbf16, #tpu.memory_space<vmem>> -> memref<8x1408xbf16, #tpu.memory_space<vmem>>
    %c0_40 = arith.constant 0 : index
    %c129 = arith.constant 129 : index
    %56 = vector.load %55[%c0_40, %c129] : memref<8x1408xbf16, #tpu.memory_space<vmem>>, vector<8x1024xbf16>
    %c4 = arith.constant 4 : index
    %c0_41 = arith.constant 0 : index
    %c0_42 = arith.constant 0 : index
    %57 = vector.load %arg3[%c4, %c0_41, %c0_42] : memref<9x8x8xbf16, #tpu.memory_space<vmem>>, vector<1x8x8xbf16>
    %58 = vector.shape_cast %57 : vector<1x8x8xbf16> to vector<8x8xbf16>
    %cst_43 = arith.constant dense<0.000000e+00> : vector<8x1024xf32>
    %59 = tpu.matmul %58, %56, %cst_43 {dimension_numbers = #tpu.dot_dimension_numbers<[1], [0], [0], [1], [0, 0, 1, 1], [], []>} : vector<8x8xbf16>, vector<8x1024xbf16>, vector<8x1024xf32> -> vector<8x1024xf32>
    %60 = arith.addf %53, %59 : vector<8x1024xf32>
    %c0_i32_44 = arith.constant 0 : i32
    %c0_i32_45 = arith.constant 0 : i32
    %61 = tpu.memref_slice %arg11[%16, %c0_i32_44, %c0_i32_45] : memref<2x8x1408xbf16, #tpu.memory_space<vmem>> -> memref<1x8x1408xbf16, #tpu.memory_space<vmem>>
    %62 = tpu.memref_squeeze %61 : memref<1x8x1408xbf16, #tpu.memory_space<vmem>> -> memref<8x1408xbf16, #tpu.memory_space<vmem>>
    %c0_46 = arith.constant 0 : index
    %c130 = arith.constant 130 : index
    %63 = vector.load %62[%c0_46, %c130] : memref<8x1408xbf16, #tpu.memory_space<vmem>>, vector<8x1024xbf16>
    %c5 = arith.constant 5 : index
    %c0_47 = arith.constant 0 : index
    %c0_48 = arith.constant 0 : index
    %64 = vector.load %arg3[%c5, %c0_47, %c0_48] : memref<9x8x8xbf16, #tpu.memory_space<vmem>>, vector<1x8x8xbf16>
    %65 = vector.shape_cast %64 : vector<1x8x8xbf16> to vector<8x8xbf16>
    %cst_49 = arith.constant dense<0.000000e+00> : vector<8x1024xf32>
    %66 = tpu.matmul %65, %63, %cst_49 {dimension_numbers = #tpu.dot_dimension_numbers<[1], [0], [0], [1], [0, 0, 1, 1], [], []>} : vector<8x8xbf16>, vector<8x1024xbf16>, vector<8x1024xf32> -> vector<8x1024xf32>
    %67 = arith.addf %60, %66 : vector<8x1024xf32>
    %c0_i32_50 = arith.constant 0 : i32
    %c0_i32_51 = arith.constant 0 : i32
    %68 = tpu.memref_slice %arg11[%16, %c0_i32_50, %c0_i32_51] : memref<2x8x1408xbf16, #tpu.memory_space<vmem>> -> memref<1x8x1408xbf16, #tpu.memory_space<vmem>>
    %69 = tpu.memref_squeeze %68 : memref<1x8x1408xbf16, #tpu.memory_space<vmem>> -> memref<8x1408xbf16, #tpu.memory_space<vmem>>
    %c0_52 = arith.constant 0 : index
    %c256 = arith.constant 256 : index
    %70 = vector.load %69[%c0_52, %c256] : memref<8x1408xbf16, #tpu.memory_space<vmem>>, vector<8x1024xbf16>
    %c6 = arith.constant 6 : index
    %c0_53 = arith.constant 0 : index
    %c0_54 = arith.constant 0 : index
    %71 = vector.load %arg3[%c6, %c0_53, %c0_54] : memref<9x8x8xbf16, #tpu.memory_space<vmem>>, vector<1x8x8xbf16>
    %72 = vector.shape_cast %71 : vector<1x8x8xbf16> to vector<8x8xbf16>
    %cst_55 = arith.constant dense<0.000000e+00> : vector<8x1024xf32>
    %73 = tpu.matmul %72, %70, %cst_55 {dimension_numbers = #tpu.dot_dimension_numbers<[1], [0], [0], [1], [0, 0, 1, 1], [], []>} : vector<8x8xbf16>, vector<8x1024xbf16>, vector<8x1024xf32> -> vector<8x1024xf32>
    %74 = arith.addf %67, %73 : vector<8x1024xf32>
    %c0_i32_56 = arith.constant 0 : i32
    %c0_i32_57 = arith.constant 0 : i32
    %75 = tpu.memref_slice %arg11[%16, %c0_i32_56, %c0_i32_57] : memref<2x8x1408xbf16, #tpu.memory_space<vmem>> -> memref<1x8x1408xbf16, #tpu.memory_space<vmem>>
    %76 = tpu.memref_squeeze %75 : memref<1x8x1408xbf16, #tpu.memory_space<vmem>> -> memref<8x1408xbf16, #tpu.memory_space<vmem>>
    %c0_58 = arith.constant 0 : index
    %c257 = arith.constant 257 : index
    %77 = vector.load %76[%c0_58, %c257] : memref<8x1408xbf16, #tpu.memory_space<vmem>>, vector<8x1024xbf16>
    %c7 = arith.constant 7 : index
    %c0_59 = arith.constant 0 : index
    %c0_60 = arith.constant 0 : index
    %78 = vector.load %arg3[%c7, %c0_59, %c0_60] : memref<9x8x8xbf16, #tpu.memory_space<vmem>>, vector<1x8x8xbf16>
    %79 = vector.shape_cast %78 : vector<1x8x8xbf16> to vector<8x8xbf16>
    %cst_61 = arith.constant dense<0.000000e+00> : vector<8x1024xf32>
    %80 = tpu.matmul %79, %77, %cst_61 {dimension_numbers = #tpu.dot_dimension_numbers<[1], [0], [0], [1], [0, 0, 1, 1], [], []>} : vector<8x8xbf16>, vector<8x1024xbf16>, vector<8x1024xf32> -> vector<8x1024xf32>
    %81 = arith.addf %74, %80 : vector<8x1024xf32>
    %c0_i32_62 = arith.constant 0 : i32
    %c0_i32_63 = arith.constant 0 : i32
    %82 = tpu.memref_slice %arg11[%16, %c0_i32_62, %c0_i32_63] : memref<2x8x1408xbf16, #tpu.memory_space<vmem>> -> memref<1x8x1408xbf16, #tpu.memory_space<vmem>>
    %83 = tpu.memref_squeeze %82 : memref<1x8x1408xbf16, #tpu.memory_space<vmem>> -> memref<8x1408xbf16, #tpu.memory_space<vmem>>
    %c0_64 = arith.constant 0 : index
    %c258 = arith.constant 258 : index
    %84 = vector.load %83[%c0_64, %c258] : memref<8x1408xbf16, #tpu.memory_space<vmem>>, vector<8x1024xbf16>
    %c8 = arith.constant 8 : index
    %c0_65 = arith.constant 0 : index
    %c0_66 = arith.constant 0 : index
    %85 = vector.load %arg3[%c8, %c0_65, %c0_66] : memref<9x8x8xbf16, #tpu.memory_space<vmem>>, vector<1x8x8xbf16>
    %86 = vector.shape_cast %85 : vector<1x8x8xbf16> to vector<8x8xbf16>
    %cst_67 = arith.constant dense<0.000000e+00> : vector<8x1024xf32>
    %87 = tpu.matmul %86, %84, %cst_67 {dimension_numbers = #tpu.dot_dimension_numbers<[1], [0], [0], [1], [0, 0, 1, 1], [], []>} : vector<8x8xbf16>, vector<8x1024xbf16>, vector<8x1024xf32> -> vector<8x1024xf32>
    %88 = arith.addf %81, %87 : vector<8x1024xf32>
    %c0_68 = arith.constant 0 : index
    %c0_69 = arith.constant 0 : index
    %89 = vector.load %arg4[%c0_68, %c0_69] : memref<8x1xf32, #tpu.memory_space<vmem>>, vector<8x1xf32>
    %90 = vector.broadcast %89 : vector<8x1xf32> to vector<8x1024xf32>
    %91 = arith.addf %88, %90 : vector<8x1024xf32>
    %cst_70 = arith.constant 0.000000e+00 : f32
    %92 = vector.broadcast %cst_70 : f32 to vector<8x1024xf32>
    %93 = arith.maximumf %91, %92 : vector<8x1024xf32>
    %94 = arith.truncf %93 : vector<8x1024xf32> to vector<8x1024xbf16>
    %c0_71 = arith.constant 0 : index
    %c0_72 = arith.constant 0 : index
    %95 = vector.load %arg5[%c0_71, %c0_72] : memref<15x8xbf16, #tpu.memory_space<vmem>>, vector<15x8xbf16>
    %cst_73 = arith.constant dense<0.000000e+00> : vector<15x1024xf32>
    %96 = tpu.matmul %95, %94, %cst_73 {dimension_numbers = #tpu.dot_dimension_numbers<[1], [0], [0], [1], [0, 0, 1, 1], [], []>} : vector<15x8xbf16>, vector<8x1024xbf16>, vector<15x1024xf32> -> vector<15x1024xf32>
    %c0_74 = arith.constant 0 : index
    %c0_75 = arith.constant 0 : index
    %97 = vector.load %arg6[%c0_74, %c0_75] : memref<15x1xf32, #tpu.memory_space<vmem>>, vector<15x1xf32>
    %98 = vector.broadcast %97 : vector<15x1xf32> to vector<15x1024xf32>
    %99 = arith.addf %96, %98 : vector<15x1024xf32>
    %c0_76 = arith.constant 0 : index
    %c0_77 = arith.constant 0 : index
    %100 = vector.load %arg8[%c0_76, %c0_77] : memref<6x2xf32, #tpu.memory_space<vmem>>, vector<3x1xf32>
    %c3_78 = arith.constant 3 : index
    %c0_79 = arith.constant 0 : index
    %101 = vector.load %arg8[%c3_78, %c0_79] : memref<6x2xf32, #tpu.memory_space<vmem>>, vector<3x1xf32>
    %c0_80 = arith.constant 0 : index
    %c1_81 = arith.constant 1 : index
    %102 = vector.load %arg8[%c0_80, %c1_81] : memref<6x2xf32, #tpu.memory_space<vmem>>, vector<3x1xf32>
    %c3_82 = arith.constant 3 : index
    %c1_83 = arith.constant 1 : index
    %103 = vector.load %arg8[%c3_82, %c1_83] : memref<6x2xf32, #tpu.memory_space<vmem>>, vector<3x1xf32>
    %c0_84 = arith.constant 0 : index
    %c0_85 = arith.constant 0 : index
    %104 = vector.load %arg7[%c0_84, %c0_85] : memref<2x1024xf32, #tpu.memory_space<vmem>>, vector<1x1024xf32>
    %105 = vector.broadcast %104 : vector<1x1024xf32> to vector<3x1024xf32>
    %106 = vector.broadcast %102 : vector<3x1xf32> to vector<3x1024xf32>
    %107 = arith.addf %105, %106 : vector<3x1024xf32>
    %c1_86 = arith.constant 1 : index
    %c0_87 = arith.constant 0 : index
    %108 = vector.load %arg7[%c1_86, %c0_87] : memref<2x1024xf32, #tpu.memory_space<vmem>>, vector<1x1024xf32>
    %109 = vector.broadcast %108 : vector<1x1024xf32> to vector<3x1024xf32>
    %110 = vector.broadcast %103 : vector<3x1xf32> to vector<3x1024xf32>
    %111 = arith.addf %109, %110 : vector<3x1024xf32>
    %112 = vector.extract_strided_slice %99 {offsets = [0, 0], sizes = [3, 1024], strides = [1, 1]} : vector<15x1024xf32> to vector<3x1024xf32>
    %113 = vector.broadcast %100 : vector<3x1xf32> to vector<3x1024xf32>
    %114 = arith.mulf %112, %113 : vector<3x1024xf32>
    %115 = arith.addf %114, %107 : vector<3x1024xf32>
    %116 = vector.extract_strided_slice %99 {offsets = [3, 0], sizes = [3, 1024], strides = [1, 1]} : vector<15x1024xf32> to vector<3x1024xf32>
    %117 = vector.broadcast %101 : vector<3x1xf32> to vector<3x1024xf32>
    %118 = arith.mulf %116, %117 : vector<3x1024xf32>
    %119 = arith.addf %118, %111 : vector<3x1024xf32>
    %120 = vector.extract_strided_slice %99 {offsets = [6, 0], sizes = [3, 1024], strides = [1, 1]} : vector<15x1024xf32> to vector<3x1024xf32>
    %cst_88 = arith.constant 4.13516665 : f32
    %121 = vector.broadcast %cst_88 : f32 to vector<3x1024xf32>
    %122 = arith.minimumf %120, %121 : vector<3x1024xf32>
    %123 = math.exp %122 : vector<3x1024xf32>
    %124 = vector.broadcast %100 : vector<3x1xf32> to vector<3x1024xf32>
    %125 = arith.mulf %123, %124 : vector<3x1024xf32>
    %126 = vector.extract_strided_slice %99 {offsets = [9, 0], sizes = [3, 1024], strides = [1, 1]} : vector<15x1024xf32> to vector<3x1024xf32>
    %cst_89 = arith.constant 4.13516665 : f32
    %127 = vector.broadcast %cst_89 : f32 to vector<3x1024xf32>
    %128 = arith.minimumf %126, %127 : vector<3x1024xf32>
    %129 = math.exp %128 : vector<3x1024xf32>
    %130 = vector.broadcast %101 : vector<3x1xf32> to vector<3x1024xf32>
    %131 = arith.mulf %129, %130 : vector<3x1024xf32>
    %cst_90 = arith.constant 5.000000e-01 : f32
    %132 = vector.broadcast %cst_90 : f32 to vector<3x1024xf32>
    %133 = arith.mulf %132, %125 : vector<3x1024xf32>
    %134 = arith.subf %115, %133 : vector<3x1024xf32>
    %c0_91 = arith.constant 0 : index
    %c0_92 = arith.constant 0 : index
    %c0_93 = arith.constant 0 : index
    %135 = vector.load %arg9[%c0_91, %c0_92, %c0_93] : memref<1x12x1024xf32, #tpu.memory_space<vmem>>, vector<1x3x1024xf32>
    %136 = vector.shape_cast %135 : vector<1x3x1024xf32> to vector<3x1024xf32>
    %137 = vector.shape_cast %134 : vector<3x1024xf32> to vector<1x3x1024xf32>
    tpu.vector_store %arg9[%c0_91, %c0_92, %c0_93], %137 {strides = array<i32>} : memref<1x12x1024xf32, #tpu.memory_space<vmem>>, vector<1x3x1024xf32>,
    %cst_94 = arith.constant 5.000000e-01 : f32
    %138 = vector.broadcast %cst_94 : f32 to vector<3x1024xf32>
    %139 = arith.mulf %138, %131 : vector<3x1024xf32>
    %140 = arith.subf %119, %139 : vector<3x1024xf32>
    %c0_95 = arith.constant 0 : index
    %c3_96 = arith.constant 3 : index
    %c0_97 = arith.constant 0 : index
    %141 = vector.load %arg9[%c0_95, %c3_96, %c0_97] : memref<1x12x1024xf32, #tpu.memory_space<vmem>>, vector<1x3x1024xf32>
    %142 = vector.shape_cast %141 : vector<1x3x1024xf32> to vector<3x1024xf32>
    %143 = vector.shape_cast %140 : vector<3x1024xf32> to vector<1x3x1024xf32>
    tpu.vector_store %arg9[%c0_95, %c3_96, %c0_97], %143 {strides = array<i32>} : memref<1x12x1024xf32, #tpu.memory_space<vmem>>, vector<1x3x1024xf32>,
    %cst_98 = arith.constant 5.000000e-01 : f32
    %144 = vector.broadcast %cst_98 : f32 to vector<3x1024xf32>
    %145 = arith.mulf %144, %125 : vector<3x1024xf32>
    %146 = arith.addf %115, %145 : vector<3x1024xf32>
    %c0_99 = arith.constant 0 : index
    %c6_100 = arith.constant 6 : index
    %c0_101 = arith.constant 0 : index
    %147 = vector.load %arg9[%c0_99, %c6_100, %c0_101] : memref<1x12x1024xf32, #tpu.memory_space<vmem>>, vector<1x3x1024xf32>
    %148 = vector.shape_cast %147 : vector<1x3x1024xf32> to vector<3x1024xf32>
    %149 = vector.shape_cast %146 : vector<3x1024xf32> to vector<1x3x1024xf32>
    tpu.vector_store %arg9[%c0_99, %c6_100, %c0_101], %149 {strides = array<i32>} : memref<1x12x1024xf32, #tpu.memory_space<vmem>>, vector<1x3x1024xf32>,
    %cst_102 = arith.constant 5.000000e-01 : f32
    %150 = vector.broadcast %cst_102 : f32 to vector<3x1024xf32>
    %151 = arith.mulf %150, %131 : vector<3x1024xf32>
    %152 = arith.addf %119, %151 : vector<3x1024xf32>
    %c0_103 = arith.constant 0 : index
    %c9 = arith.constant 9 : index
    %c0_104 = arith.constant 0 : index
    %153 = vector.load %arg9[%c0_103, %c9, %c0_104] : memref<1x12x1024xf32, #tpu.memory_space<vmem>>, vector<1x3x1024xf32>
    %154 = vector.shape_cast %153 : vector<1x3x1024xf32> to vector<3x1024xf32>
    %155 = vector.shape_cast %152 : vector<3x1024xf32> to vector<1x3x1024xf32>
    tpu.vector_store %arg9[%c0_103, %c9, %c0_104], %155 {strides = array<i32>} : memref<1x12x1024xf32, #tpu.memory_space<vmem>>, vector<1x3x1024xf32>,
    %156 = vector.extract_strided_slice %99 {offsets = [12, 0], sizes = [3, 1024], strides = [1, 1]} : vector<15x1024xf32> to vector<3x1024xf32>
    %157 = arith.negf %156 : vector<3x1024xf32>
    %158 = math.exp %157 : vector<3x1024xf32>
    %cst_105 = arith.constant 1.000000e+00 : f32
    %159 = vector.broadcast %cst_105 : f32 to vector<3x1024xf32>
    %160 = arith.addf %159, %158 : vector<3x1024xf32>
    %161 = arith.divf %159, %160 : vector<3x1024xf32>
    %c0_106 = arith.constant 0 : index
    %c0_107 = arith.constant 0 : index
    %c0_108 = arith.constant 0 : index
    %162 = vector.load %arg10[%c0_106, %c0_107, %c0_108] : memref<1x3x1024xf32, #tpu.memory_space<vmem>>, vector<1x3x1024xf32>
    %163 = vector.shape_cast %162 : vector<1x3x1024xf32> to vector<3x1024xf32>
    %164 = vector.shape_cast %161 : vector<3x1024xf32> to vector<1x3x1024xf32>
    tpu.vector_store %arg10[%c0_106, %c0_107, %c0_108], %164 {strides = array<i32>} : memref<1x3x1024xf32, #tpu.memory_space<vmem>>, vector<1x3x1024xf32>,
    return
  }
  func.func @transform_1(%arg0: i32, %arg1: i32) -> (i32, i32, i32) {
    %c0_i32 = arith.constant 0 : i32
    %c0_i32_0 = arith.constant 0 : i32
    %c0_i32_1 = arith.constant 0 : i32
    %c0_i32_2 = arith.constant 0 : i32
    return %c0_i32, %c0_i32_0, %c0_i32_1 : i32, i32, i32
  }
  func.func @transform_2(%arg0: i32, %arg1: i32) -> (i32, i32) {
    %c0_i32 = arith.constant 0 : i32
    %c0_i32_0 = arith.constant 0 : i32
    %c0_i32_1 = arith.constant 0 : i32
    return %c0_i32, %c0_i32_0 : i32, i32
  }
  func.func @transform_3(%arg0: i32, %arg1: i32) -> (i32, i32) {
    %c0_i32 = arith.constant 0 : i32
    %c0_i32_0 = arith.constant 0 : i32
    %c0_i32_1 = arith.constant 0 : i32
    return %c0_i32, %c0_i32_0 : i32, i32
  }
  func.func @transform_4(%arg0: i32, %arg1: i32) -> (i32, i32) {
    %c0_i32 = arith.constant 0 : i32
    %c0_i32_0 = arith.constant 0 : i32
    %c0_i32_1 = arith.constant 0 : i32
    return %c0_i32, %c0_i32_0 : i32, i32
  }
  func.func @transform_5(%arg0: i32, %arg1: i32) -> (i32, i32) {
    %c0_i32 = arith.constant 0 : i32
    %c0_i32_0 = arith.constant 0 : i32
    return %c0_i32, %arg1 : i32, i32
  }
  func.func @transform_6(%arg0: i32, %arg1: i32) -> (i32, i32) {
    %c0_i32 = arith.constant 0 : i32
    %c0_i32_0 = arith.constant 0 : i32
    %c0_i32_1 = arith.constant 0 : i32
    return %c0_i32, %c0_i32_0 : i32, i32
  }
  func.func @transform_7(%arg0: i32, %arg1: i32) -> (i32, i32, i32) {
    %c0_i32 = arith.constant 0 : i32
    %c0_i32_0 = arith.constant 0 : i32
    return %arg0, %c0_i32, %arg1 : i32, i32, i32
  }
  func.func @transform_8(%arg0: i32, %arg1: i32) -> (i32, i32, i32) {
    %c0_i32 = arith.constant 0 : i32
    %c0_i32_0 = arith.constant 0 : i32
    return %arg0, %c0_i32, %arg1 : i32, i32, i32
  }
}

</mosaic_0001>

<llo_original>
// kernel: tpu_custom_call.1
$region0: #{tpu_custom_call.1}
  #allocation0 [shape = 'u32[]', space=smem, size = 0x4, offset = 0x4, fixed_abs, tag = 'smem constant byte address 0x4 - core index']
  #allocation1 [shape = 'u32[144,128]{1,0:T(1,128)}', space=vmem, size = 0x12000, scoped, tag = 'internal scratch']
  #allocation2 [shape = 'bf16[2,8,1408]{2,1,0:T(8,128)(2,1)}', space=vmem, size = 0xb000, scoped, tag = 'scratch operand']
  #allocation3 [shape = 's32[2]{0}', space=sflag, size = 0x8, scoped, tag = 'scratch operand']
  #allocation5 [shape = 's32[]', space=sflag, size = 0x4, offset = 0, fixed_abs, tag = 'sflag constant byte address 0x0 - dummy sync flag']
  #allocation6 [shape = 's32[]', space=sflag, size = 0x4, offset = 0, fixed_abs, tag = 'sflag constant byte address 0x0 - dummy sync flag']
  #allocation7 [shape = 'u32[]', space=smem, size = 0x4, offset = 0x44, fixed_abs, tag = 'smem constant byte address 0x44 - assertion arg 0']
  #allocation8 [shape = 'u32[]', space=smem, size = 0x4, offset = 0x48, fixed_abs, tag = 'smem constant byte address 0x48 - assertion arg 1']
  #allocation9 [shape = 's32[]', space=sflag, size = 0x4, offset = 0, fixed_abs, tag = 'sflag constant byte address 0x0 - dummy sync flag']
  #allocation10 [shape = 's32[]', space=sflag, size = 0x4, offset = 0, fixed_abs, tag = 'sflag constant byte address 0x0 - dummy sync flag']
  %s0 = inlined_call_operand.hbm [shape: bf16[2,8,2432], index: 0, kind: input, shape index: {}]
  %s1 = inlined_call_operand.vmem [shape: bf16[9,8,8], index: 1, kind: input, shape index: {}]
  %s2 = inlined_call_operand.vmem [shape: f32[8,1], index: 2, kind: input, shape index: {}]
  %s3 = inlined_call_operand.vmem [shape: bf16[15,8], index: 3, kind: input, shape index: {}]
  %s4 = inlined_call_operand.vmem [shape: f32[15,1], index: 4, kind: input, shape index: {}]
  %s5 = inlined_call_operand.vmem [shape: f32[2,2048], index: 5, kind: input, shape index: {}]
  %s6 = inlined_call_operand.vmem [shape: f32[6,2], index: 6, kind: input, shape index: {}]
  %s7 = inlined_call_operand.vmem [shape: f32[2,12,2048], index: 7, kind: output, shape index: {0}]
  %s8 = inlined_call_operand.vmem [shape: f32[2,3,2048], index: 8, kind: output, shape index: {1}]
  %9 = xla_tuple %s7, %s8
  %s10 = sld [smem:[#allocation0]]
  $region100: #{tpu_custom_call.1} parent=0
    _
  %s12 = ssub.s32 1, %s10
  %s13 = scalar_select 0, %s12, %s10
  $region1: #{tpu_custom_call.1} parent=0
    #allocation4 [shape = 'u8[131072]{0}', space=vmem, size = 0x20000, scoped, tag = 'output window, operand 0']
    loop: start=0, step=1, limit=6
    $region2: #{tpu_custom_call.1} parent=1 // loop_pre_header
      _
    $region3: #{tpu_custom_call.1} parent=1 // loop_header
      %s15 = sphi 0, %s19
      %p16 = scmp.ge.s32.totalorder %s15, 6
      %s22 = sphi 0, %s34
      %s23 = sphi 0, %s30
      %s24 = sphi 0, %s22
      %s25 = sphi 0, %s23
      %s26 = sphi 0, %s24
      %s27 = sphi 0, %s25
      %s35 = sphi 0, %s35
      %s37 = sphi 0, %s35
      %s38 = sphi 0, %s37
      %s52 = sphi 0, %s38
      %s56 = sphi 0, %s56
      %s58 = sphi 0, %s56
      %s59 = sphi 0, %s58
      %s73 = sphi 0, %s59
      %s77 = sphi 0, %s77
      %s79 = sphi 0, %s77
      %s80 = sphi 0, %s79
      %s94 = sphi 0, %s80
      %s98 = sphi 0, %s98
      %s100 = sphi 0, %s98
      %s101 = sphi 0, %s100
      %s115 = sphi 0, %s101
      %s121 = sphi 0, %s123
      %s124 = sphi 0, %s121
      %s125 = sphi 0, %s124
      %s141 = sphi 0, %s125
      %s145 = sphi 0, %s145
      %s147 = sphi 0, %s145
      %s148 = sphi 0, %s147
      %s162 = sphi 0, %s148
      %s170 = sphi 0, %s172
      %s173 = sphi 0, %s170
      %s174 = sphi 0, %s173
      %s190 = sphi 0, %s174
      %s198 = sphi 0, %s200
      %s201 = sphi 0, %s198
      %s202 = sphi 0, %s201
      %s218 = sphi 0, %s202
    $region4: #{tpu_custom_call.1} parent=1 // loop_header_branch
      %18 = sbr.rel (%p16) target = $region8
    $region5: #{tpu_custom_call.1} parent=1 // loop_body
      %s20 = ssub.s32 %s15, 1
      %s21 = ssub.s32 %s15, 2
      %s28 = sadd.s32 1, %s23
      %p29 = scmp.ge.s32.totalorder %s28, 2
      %s30 = scalar_select %p29, 0, %s28
      %s31 = sadd.s32 1, %s22
      %s32 = scalar_select %p29, %s31, %s22
      %p33 = scmp.ge.s32.totalorder %s32, 2
      %s34 = scalar_select %p33, 0, %s32
      %s36 = sadd.s32 %s35, 1
      %p39 = scmp.eq.s32.totalorder %s15, 3
      %p40 = scmp.ne.s32.totalorder %s35, %s37
      %p41 = scmp.eq.s32.totalorder %s15, 0
      %p42 = por %p40, %p41
      %p43 = scmp.ne.s32.totalorder %s35, %s37
      %p44 = scmp.eq.s32.totalorder %s20, 3
      %p45 = por %p43, %p44
      %p46 = scmp.ne.s32.totalorder %s37, %s38
      %p47 = scmp.eq.s32.totalorder %s20, 0
      %p48 = por %p46, %p47
      %p49 = scmp.ne.s32.totalorder %s37, %s38
      %p50 = scmp.eq.s32.totalorder %s21, 3
      %p51 = por %p49, %p50
      %p53 = scmp.ne.s32.totalorder %s38, %s52
      %p54 = scmp.eq.s32.totalorder %s21, 0
      %p55 = por %p53, %p54
      %s57 = sadd.s32 %s56, 1
      %p60 = scmp.eq.s32.totalorder %s15, 3
      %p61 = scmp.ne.s32.totalorder %s56, %s58
      %p62 = scmp.eq.s32.totalorder %s15, 0
      %p63 = por %p61, %p62
      %p64 = scmp.ne.s32.totalorder %s56, %s58
      %p65 = scmp.eq.s32.totalorder %s20, 3
      %p66 = por %p64, %p65
      %p67 = scmp.ne.s32.totalorder %s58, %s59
      %p68 = scmp.eq.s32.totalorder %s20, 0
      %p69 = por %p67, %p68
      %p70 = scmp.ne.s32.totalorder %s58, %s59
      %p71 = scmp.eq.s32.totalorder %s21, 3
      %p72 = por %p70, %p71
      %p74 = scmp.ne.s32.totalorder %s59, %s73
      %p75 = scmp.eq.s32.totalorder %s21, 0
      %p76 = por %p74, %p75
      %s78 = sadd.s32 %s77, 1
      %p81 = scmp.eq.s32.totalorder %s15, 3
      %p82 = scmp.ne.s32.totalorder %s77, %s79
      %p83 = scmp.eq.s32.totalorder %s15, 0
      %p84 = por %p82, %p83
      %p85 = scmp.ne.s32.totalorder %s77, %s79
      %p86 = scmp.eq.s32.totalorder %s20, 3
      %p87 = por %p85, %p86
      %p88 = scmp.ne.s32.totalorder %s79, %s80
      %p89 = scmp.eq.s32.totalorder %s20, 0
      %p90 = por %p88, %p89
      %p91 = scmp.ne.s32.totalorder %s79, %s80
      %p92 = scmp.eq.s32.totalorder %s21, 3
      %p93 = por %p91, %p92
      %p95 = scmp.ne.s32.totalorder %s80, %s94
      %p96 = scmp.eq.s32.totalorder %s21, 0
      %p97 = por %p95, %p96
      %s99 = sadd.s32 %s98, 1
      %p102 = scmp.eq.s32.totalorder %s15, 3
      %p103 = scmp.ne.s32.totalorder %s98, %s100
      %p104 = scmp.eq.s32.totalorder %s15, 0
      %p105 = por %p103, %p104
      %p106 = scmp.ne.s32.totalorder %s98, %s100
      %p107 = scmp.eq.s32.totalorder %s20, 3
      %p108 = por %p106, %p107
      %p109 = scmp.ne.s32.totalorder %s100, %s101
      %p110 = scmp.eq.s32.totalorder %s20, 0
      %p111 = por %p109, %p110
      %p112 = scmp.ne.s32.totalorder %s100, %s101
      %p113 = scmp.eq.s32.totalorder %s21, 3
      %p114 = por %p112, %p113
      %p116 = scmp.ne.s32.totalorder %s101, %s115
      %p117 = scmp.eq.s32.totalorder %s21, 0
      %p118 = por %p116, %p117
      %s119 = ssub.s32 %s23, %s30
      %p120 = scmp.eq.s32.totalorder %s119, 0
      %s122 = sadd.s32 %s121, 1
      %s123 = scalar_select %p120, %s121, %s122
      %p126 = pneg %p120
      %p127 = scmp.eq.s32.totalorder %s15, 3
      %p128 = por %p126, %p127
      %p129 = scmp.ne.s32.totalorder %s121, %s124
      %p130 = scmp.eq.s32.totalorder %s15, 0
      %p131 = por %p129, %p130
      %p132 = scmp.ne.s32.totalorder %s121, %s124
      %p133 = scmp.eq.s32.totalorder %s20, 3
      %p134 = por %p132, %p133
      %p135 = scmp.ne.s32.totalorder %s124, %s125
      %p136 = scmp.eq.s32.totalorder %s20, 0
      %p137 = por %p135, %p136
      %p138 = scmp.ne.s32.totalorder %s124, %s125
      %p139 = scmp.eq.s32.totalorder %s21, 3
      %p140 = por %p138, %p139
      %p142 = scmp.ne.s32.totalorder %s125, %s141
      %p143 = scmp.eq.s32.totalorder %s21, 0
      %p144 = por %p142, %p143
      %s146 = sadd.s32 %s145, 1
      %p149 = scmp.eq.s32.totalorder %s15, 3
      %p150 = scmp.ne.s32.totalorder %s145, %s147
      %p151 = scmp.eq.s32.totalorder %s15, 0
      %p152 = por %p150, %p151
      %p153 = scmp.ne.s32.totalorder %s145, %s147
      %p154 = scmp.eq.s32.totalorder %s20, 3
      %p155 = por %p153, %p154
      %p156 = scmp.ne.s32.totalorder %s147, %s148
      %p157 = scmp.eq.s32.totalorder %s20, 0
      %p158 = por %p156, %p157
      %p159 = scmp.ne.s32.totalorder %s147, %s148
      %p160 = scmp.eq.s32.totalorder %s21, 3
      %p161 = por %p159, %p160
      %p163 = scmp.ne.s32.totalorder %s148, %s162
      %p164 = scmp.eq.s32.totalorder %s21, 0
      %p165 = por %p163, %p164
      %s166 = ssub.s32 %s22, %s34
      %s167 = ssub.s32 %s23, %s30
      %s168 = sor.u32 %s166, %s167
      %p169 = scmp.eq.s32.totalorder %s168, 0
      %s171 = sadd.s32 %s170, 1
      %s172 = scalar_select %p169, %s170, %s171
      %p175 = pneg %p169
      %p176 = scmp.eq.s32.totalorder %s15, 3
      %p177 = por %p175, %p176
      %p178 = scmp.ne.s32.totalorder %s170, %s173
      %p179 = scmp.eq.s32.totalorder %s15, 0
      %p180 = por %p178, %p179
      %p181 = scmp.ne.s32.totalorder %s170, %s173
      %p182 = scmp.eq.s32.totalorder %s20, 3
      %p183 = por %p181, %p182
      %p184 = scmp.ne.s32.totalorder %s173, %s174
      %p185 = scmp.eq.s32.totalorder %s20, 0
      %p186 = por %p184, %p185
      %p187 = scmp.ne.s32.totalorder %s173, %s174
      %p188 = scmp.eq.s32.totalorder %s21, 3
      %p189 = por %p187, %p188
      %p191 = scmp.ne.s32.totalorder %s174, %s190
      %p192 = scmp.eq.s32.totalorder %s21, 0
      %p193 = por %p191, %p192
      %s194 = ssub.s32 %s22, %s34
      %s195 = ssub.s32 %s23, %s30
      %s196 = sor.u32 %s194, %s195
      %p197 = scmp.eq.s32.totalorder %s196, 0
      %s199 = sadd.s32 %s198, 1
      %s200 = scalar_select %p197, %s198, %s199
      %p203 = pneg %p197
      %p204 = scmp.eq.s32.totalorder %s15, 3
      %p205 = por %p203, %p204
      %p206 = scmp.ne.s32.totalorder %s198, %s201
      %p207 = scmp.eq.s32.totalorder %s15, 0
      %p208 = por %p206, %p207
      %p209 = scmp.ne.s32.totalorder %s198, %s201
      %p210 = scmp.eq.s32.totalorder %s20, 3
      %p211 = por %p209, %p210
      %p212 = scmp.ne.s32.totalorder %s201, %s202
      %p213 = scmp.eq.s32.totalorder %s20, 0
      %p214 = por %p212, %p213
      %p215 = scmp.ne.s32.totalorder %s201, %s202
      %p216 = scmp.eq.s32.totalorder %s21, 3
      %p217 = por %p215, %p216
      %p219 = scmp.ne.s32.totalorder %s202, %s218
      %p220 = scmp.eq.s32.totalorder %s21, 0
      %p221 = por %p219, %p220
      %p222 = scmp.le.s32.totalorder 1, %s15
      %p223 = scmp.lt.s32.totalorder %s15, 5
      %p224 = pnand %p222, %p223
      %p225 = pneg %p224
      // Predicated region
      $region9: #{tpu_custom_call.1} parent=5 // pred_check
        _
      $region10: #{tpu_custom_call.1} parent=5 // pred_check_branch
        %227 = sbr.rel (%p224) target = $region12
      $region11: #{tpu_custom_call.1} parent=5 // pred_region
        %s228 = ssub.s32 %s15, 1
        // Predicated region
        $region13: #{tpu_custom_call.1} parent=11 // pred_check
          %p229 = pneg %p48
        $region14: #{tpu_custom_call.1} parent=11 // pred_check_branch
          %231 = sbr.rel (%p229) target = $region16
        $region15: #{tpu_custom_call.1} parent=11 // pred_region
          _
        $region16: #{tpu_custom_call.1} parent=11 // pred_fallthru
          _
        // Predicated region
        $region17: #{tpu_custom_call.1} parent=11 // pred_check
          %p232 = pneg %p69
        $region18: #{tpu_custom_call.1} parent=11 // pred_check_branch
          %234 = sbr.rel (%p232) target = $region20
        $region19: #{tpu_custom_call.1} parent=11 // pred_region
          _
        $region20: #{tpu_custom_call.1} parent=11 // pred_fallthru
          _
        // Predicated region
        $region21: #{tpu_custom_call.1} parent=11 // pred_check
          %p235 = pneg %p90
        $region22: #{tpu_custom_call.1} parent=11 // pred_check_branch
          %237 = sbr.rel (%p235) target = $region24
        $region23: #{tpu_custom_call.1} parent=11 // pred_region
          _
        $region24: #{tpu_custom_call.1} parent=11 // pred_fallthru
          _
        // Predicated region
        $region25: #{tpu_custom_call.1} parent=11 // pred_check
          %p238 = pneg %p111
        $region26: #{tpu_custom_call.1} parent=11 // pred_check_branch
          %240 = sbr.rel (%p238) target = $region28
        $region27: #{tpu_custom_call.1} parent=11 // pred_region
          _
        $region28: #{tpu_custom_call.1} parent=11 // pred_fallthru
          _
        // Predicated region
        $region29: #{tpu_custom_call.1} parent=11 // pred_check
          %p241 = pneg %p158
        $region30: #{tpu_custom_call.1} parent=11 // pred_check_branch
          %243 = sbr.rel (%p241) target = $region32
        $region31: #{tpu_custom_call.1} parent=11 // pred_region
          _
        $region32: #{tpu_custom_call.1} parent=11 // pred_fallthru
          _
      $region12: #{tpu_custom_call.1} parent=5 // pred_fallthru
        _
      %p244 = scmp.lt.s32.totalorder %s15, 4
      // Predicated region
      $region33: #{tpu_custom_call.1} parent=5 // pred_check
        %p245 = pneg %p244
      $region34: #{tpu_custom_call.1} parent=5 // pred_check_branch
        %247 = sbr.rel (%p245) target = $region36
      $region35: #{tpu_custom_call.1} parent=5 // pred_region
        // Predicated region
        $region37: #{tpu_custom_call.1} parent=35 // pred_check
          %p248 = pneg %p131
        $region38: #{tpu_custom_call.1} parent=35 // pred_check_branch
          %250 = sbr.rel (%p248) target = $region40
        $region39: #{tpu_custom_call.1} parent=35 // pred_region
          %s251 = smul.u32 8, %s23
          %p252 = scmp.lt.s32.totalorder %s251, 15
          %s253 = scalar_select %p252, %s251, 15
          %s254 = smul.addr %s253, 2
          %s255 = scalar_lea.vmem %s5, %s254
          %s256 = smul.u32 8, %s23
        $region40: #{tpu_custom_call.1} parent=35 // pred_fallthru
          _
      $region36: #{tpu_custom_call.1} parent=5 // pred_fallthru
        _
      %p257 = scmp.le.s32.totalorder 1, %s15
      %p258 = scmp.lt.s32.totalorder %s15, 5
      %p259 = pnand %p257, %p258
      %p260 = pneg %p259
      // Predicated region
      $region41: #{tpu_custom_call.1} parent=5 // pred_check
        _
      $region42: #{tpu_custom_call.1} parent=5 // pred_check_branch
        %262 = sbr.rel (%p259) target = $region44
      $region43: #{tpu_custom_call.1} parent=5 // pred_region
        %s263 = ssub.s32 %s15, 1
        %p264 = pneg %p48
        %p265 = pneg %p45
        %p266 = pneg %p69
        %p267 = pneg %p66
        %p268 = pneg %p90
        %p269 = pneg %p87
        %p270 = pneg %p111
        %p271 = pneg %p108
        %s272 = smul.u32 8, %s25
        %p273 = scmp.lt.s32.totalorder %s272, 15
        %s274 = scalar_select %p273, %s272, 15
        %s275 = smul.addr %s274, 2
        %s276 = scalar_lea.vmem %s5, %s275
        %p277 = pneg %p137
        %p278 = pneg %p134
        %p279 = pneg %p158
        %p280 = pneg %p155
        %p281 = pneg %p186
        %p282 = pneg %p183
        %s283 = sand.u32 %s173, 1
        %s284 = sand.u32 %s173, 1
        %s285 = smul.addr %s284, 128
        %s286 = scalar_lea.vmem [#allocation4], %s285
        %p287 = pneg %p214
        %p288 = pneg %p211
        %s289 = smul.u32 8, %s25
        %p290 = scmp.lt.s32.totalorder %s24, 1
        %s291 = scalar_select %p290, %s24, 1
        %p292 = scmp.lt.s32.totalorder %s289, 15
        %s293 = scalar_select %p292, %s289, 15
        %s294 = smul.addr %s291, 16
        %s295 = sadd.s32 %s293, %s294
        %s296 = smul.addr %s295, 4
        %s297 = scalar_lea.vmem %s8, %s296
        %s298 = smul.u32 8, %s25
        %p299 = scmp.lt.s32.totalorder %s298, 15
        %s300 = scalar_select %p299, %s298, 15
        %s301 = smul.addr %s300, 2
        %s302 = scalar_lea.vmem %s5, %s301
        %s303 = smul.u32 8, %s25
        %s304 = smul.u32 8, %s25
        %s305 = smul.u32 8, %s25
        %p306 = scmp.lt.s32.totalorder %s24, 1
        %s307 = scalar_select %p306, %s24, 1
        %p308 = scmp.lt.s32.totalorder %s305, 15
        %s309 = scalar_select %p308, %s305, 15
        %s310 = smul.addr %s307, 16
        %s311 = sadd.s32 %s309, %s310
        %s312 = smul.addr %s311, 4
        %s313 = scalar_lea.vmem %s8, %s312
        %s314 = smul.u32 8, %s25
        %p316 = scmp.eq.s32.totalorder %s25, 0
        // Predicated region
        $region45: #{tpu_custom_call.1} parent=43 // pred_check
          %p317 = pneg %p316
        $region46: #{tpu_custom_call.1} parent=43 // pred_check_branch
          %319 = sbr.rel (%p317) target = $region48
        $region47: #{tpu_custom_call.1} parent=43 // pred_region
          %s320 = smul.u32 %s24, 19
          %s321 = smul.addr %s320, 64
          %s322 = scalar_lea.hbm %s0, %s321
          // Predicated region
          $region49: #{tpu_custom_call.1} parent=47 // pred_check
            _
          $region50: #{tpu_custom_call.1} parent=47 // pred_check_branch
            %324 = sbr.rel target = $region52
          $region51: #{tpu_custom_call.1} parent=47 // pred_region
            %325 = sst [smem:[#allocation7]] [#allocation6]
            %326 = sst [smem:[#allocation8]] [#allocation5]
          $region52: #{tpu_custom_call.1} parent=47 // pred_fallthru
            _
          %328 = shalt.err (0)
          %s330 = sshll.u32 [#allocation2], 4
          %s331 = int_to_ptr.vmem [resolvable:$true] %s330
          %333 = dma.hbm_to_vmem [thread:$0]  %s322, 704, %s331, [#allocation3]
        $region48: #{tpu_custom_call.1} parent=43 // pred_fallthru
          _
        %s334 = sadd.s32 %s25, 1
        %p335 = scmp.lt.s32.totalorder %s334, 2
        // Predicated region
        $region53: #{tpu_custom_call.1} parent=43 // pred_check
          %p336 = pneg %p335
        $region54: #{tpu_custom_call.1} parent=43 // pred_check_branch
          %338 = sbr.rel (%p336) target = $region56
        $region55: #{tpu_custom_call.1} parent=43 // pred_region
          %p339 = scmp.lt.s32.totalorder %s334, 0
          %s340 = ssub.s32 0, %s334
          %s341 = scalar_select %p339, %s340, %s334
          %s342 = sand.u32 %s341, 1
          %s343 = ssub.s32 0, %s342
          %s344 = scalar_select %p339, %s343, %s342
          %p345 = scmp.ne.s32.totalorder %s344, 0
          %p346 = scmp.lt.s32.totalorder %s344, 0
          %p347 = pnand %p346, %p345
          %p348 = pneg %p347
          %s349 = sadd.s32 %s344, 2
          %s350 = scalar_select %p348, %s349, %s344
          %s351 = smul.u32 %s334, 1024
          %s352 = sshra.s32 %s351, 7
          %s353 = sand.u32 %s351, 127
          %s354 = smul.u32 %s24, 19
          %s355 = sadd.s32 %s352, %s354
          %s356 = smul.addr %s355, 64
          %s357 = scalar_lea.hbm %s0, %s356
          %s358 = smul.u32 %s350, 11
          %s359 = smul.addr %s358, 4
          %s360 = scalar_lea.vmem [#allocation2], %s359
          %s361 = scalar_lea.sflag [#allocation3], %s350
          // Predicated region
          $region57: #{tpu_custom_call.1} parent=55 // pred_check
            _
          $region58: #{tpu_custom_call.1} parent=55 // pred_check_branch
            %363 = sbr.rel target = $region60
          $region59: #{tpu_custom_call.1} parent=55 // pred_region
            %364 = sst [smem:[#allocation7]] [#allocation10]
            %365 = sst [smem:[#allocation8]] [#allocation9]
          $region60: #{tpu_custom_call.1} parent=55 // pred_fallthru
            _
          %367 = shalt.err (0)
          %s369 = sshll.u32 %s360, 4
          %s370 = int_to_ptr.vmem [resolvable:$true] %s369
          %372 = dma.hbm_to_vmem [thread:$0]  %s357, 704, %s370, %s361
        $region56: #{tpu_custom_call.1} parent=43 // pred_fallthru
          _
        %p373 = scmp.lt.s32.totalorder %s25, 0
        %s374 = ssub.s32 0, %s25
        %s375 = scalar_select %p373, %s374, %s25
        %s376 = sand.u32 %s375, 1
        %s377 = ssub.s32 0, %s376
        %s378 = scalar_select %p373, %s377, %s376
        %p379 = scmp.ne.s32.totalorder %s378, 0
        %p380 = scmp.lt.s32.totalorder %s378, 0
        %p381 = pnand %p380, %p379
        %p382 = pneg %p381
        %s383 = sadd.s32 %s378, 2
        %s384 = scalar_select %p382, %s383, %s378
        %s385 = smul.u32 %s384, 11
        %s386 = smul.addr %s385, 4
        %s387 = scalar_lea.vmem [#allocation2], %s386
        %s388 = scalar_lea.sflag [#allocation3], %s384
        %s389 = smul.u32 4, 1
        %s390 = smul.u32 %s389, 11
        %s391 = sshll.u32 %s390, 4
        %392 = dma.done %s388, %s391
        %v393 = vld [vmem:[%s387] sm:$0xff]
        %v394 = vld [vmem:[%s387 + $0x8] sm:$0xff]
        %v395 = vld [vmem:[%s387 + $0x10] sm:$0xff]
        %v396 = vld [vmem:[%s387 + $0x18] sm:$0xff]
        %v397 = vld [vmem:[%s1] sm:$0xf]
        %v398 = vld [vmem:[%s387 + $0x20] sm:$0xf]
        %s399 = scalar_lea.vmem %s1, 4
        %v400 = vld [vmem:[%s399] sm:$0xf]
        %v406 = vunpack.c.l.b16 %v393
        %v407 = vunpack.c.h.b16 %v393
        %v408 = vunpack.c.l.b16 %v394
        %v409 = vunpack.c.h.b16 %v394
        %v410 = vunpack.c.l.b16 %v395
        %v411 = vunpack.c.h.b16 %v395
        %v412 = vunpack.c.l.b16 %v396
        %v413 = vunpack.c.h.b16 %v396
        %v414 = vunpack.c.l.b16 %v398
        %v415 = vpack.c.b16 %v406, %v406
        %v416 = vpack.c.b16 %v407, %v407
        %v417 = vpack.c.b16 %v408, %v408
        %v418 = vpack.c.b16 %v409, %v409
        %v419 = vpack.c.b16 %v410, %v410
        %v420 = vpack.c.b16 %v411, %v411
        %v421 = vpack.c.b16 %v412, %v412
        %v422 = vpack.c.b16 %v413, %v413
        %v423 = vpack.c.b16 %v414, %v414
        %424 = vrot.lane.b32.xlu0 %v415, 127
        %v425 = vpop.permute.xlu0 %424
        %426 = vrot.lane.b32.xlu0 %v416, 127
        %v427 = vpop.permute.xlu0 %426
        %428 = vrot.lane.b32.xlu0 %v417, 127
        %v429 = vpop.permute.xlu0 %428
        %430 = vrot.lane.b32.xlu0 %v418, 127
        %v431 = vpop.permute.xlu0 %430
        %432 = vrot.lane.b32.xlu0 %v419, 127
        %v433 = vpop.permute.xlu0 %432
        %434 = vrot.lane.b32.xlu0 %v420, 127
        %v435 = vpop.permute.xlu0 %434
        %436 = vrot.lane.b32.xlu0 %v421, 127
        %v437 = vpop.permute.xlu0 %436
        %438 = vrot.lane.b32.xlu0 %v422, 127
        %v439 = vpop.permute.xlu0 %438
        %440 = vrot.lane.b32.xlu0 %v423, 127
        %v441 = vpop.permute.xlu0 %440
        %vm442 = vcmask 1039360
        %v443 = vsel %vm442, %v425, %v427
        %v444 = vsel %vm442, %v427, %v429
        %v445 = vsel %vm442, %v429, %v431
        %v446 = vsel %vm442, %v431, %v433
        %v447 = vsel %vm442, %v433, %v435
        %v448 = vsel %vm442, %v435, %v437
        %v449 = vsel %vm442, %v437, %v439
        %v450 = vsel %vm442, %v439, %v441
        %vm451 = vcmask 64512
        %v453 = vsel %vm451, %v400, 0
        %vm455 = vcmask 1043456
        %v457 = vsel %vm455, %v443, 0
        %v460 = vsel %vm455, %v444, 0
        %v463 = vsel %vm455, %v445, 0
        %v466 = vsel %vm455, %v446, 0
        %v469 = vsel %vm455, %v447, 0
        %v472 = vsel %vm455, %v448, 0
        %v475 = vsel %vm455, %v449, 0
        %v478 = vsel %vm455, %v450, 0
        %480 = vmatprep.subr.bf16.mxu0 %v460
        %481 = vmatpush1.bf16.msra.mxu0 %v457
        %482 = vmatprep.subr.bf16.mxu0 0
        %483 = vmatpush1.bf16.msra.mxu0 0
        %484 = vmatprep.subr.bf16.mxu0 0
        %485 = vmatpush1.bf16.msra.mxu0 0
        %486 = vmatprep.subr.bf16.mxu0 0
        %487 = vmatpush1.bf16.msra.mxu0 0
        %488 = vmatprep.subr.bf16.mxu0 0
        %489 = vmatpush1.bf16.msra.mxu0 0
        %490 = vmatprep.subr.bf16.mxu0 0
        %491 = vmatpush1.bf16.msra.mxu0 0
        %492 = vmatprep.subr.bf16.mxu0 0
        %493 = vmatpush1.bf16.msra.mxu0 0
        %494 = vmatprep.subr.bf16.mxu0 0
        %495 = vmatpush1.bf16.msra.mxu0 0
        %496 = vmatprep.subr.bf16.mxu0 0
        %497 = vmatpush1.bf16.msra.mxu0 0
        %498 = vmatprep.subr.bf16.mxu0 0
        %499 = vmatpush1.bf16.msra.mxu0 0
        %500 = vmatprep.subr.bf16.mxu0 0
        %501 = vmatpush1.bf16.msra.mxu0 0
        %502 = vmatprep.subr.bf16.mxu0 0
        %503 = vmatpush1.bf16.msra.mxu0 0
        %504 = vmatprep.subr.bf16.mxu0 0
        %505 = vmatpush1.bf16.msra.mxu0 0
        %506 = vmatprep.subr.bf16.mxu0 0
        %507 = vmatpush1.bf16.msra.mxu0 0
        %508 = vmatprep.subr.bf16.mxu0 0
        %509 = vmatpush1.bf16.msra.mxu0 0
        %510 = vmatprep.subr.bf16.mxu0 0
        %511 = vmatpush1.bf16.msra.mxu0 0
        %512 = vmatprep.mubr.bf16.mxu0 0
        %513 = vmatmul.mubr.bf16.gmra.mrb[0].mxu0 %v453
        %v514 = vpop.f32.mrb[0].mxu0
        %v515 = vadd.f32 0.0, %v514
        %v516 = vpop.f32.mrb[0].mxu0
        %v517 = vadd.f32 0.0, %v516
        %v518 = vpop.f32.mrb[0].mxu0
        %v519 = vpop.f32.mrb[0].mxu0
        %520 = vdwg.mxu0
        %521 = vmatprep.subr.bf16.mxu0 %v466
        %522 = vmatpush1.bf16.msra.mxu0 %v463
        %523 = vmatprep.subr.bf16.mxu0 0
        %524 = vmatpush1.bf16.msra.mxu0 0
        %525 = vmatprep.subr.bf16.mxu0 0
        %526 = vmatpush1.bf16.msra.mxu0 0
        %527 = vmatprep.subr.bf16.mxu0 0
        %528 = vmatpush1.bf16.msra.mxu0 0
        %529 = vmatprep.subr.bf16.mxu0 0
        %530 = vmatpush1.bf16.msra.mxu0 0
        %531 = vmatprep.subr.bf16.mxu0 0
        %532 = vmatpush1.bf16.msra.mxu0 0
        %533 = vmatprep.subr.bf16.mxu0 0
        %534 = vmatpush1.bf16.msra.mxu0 0
        %535 = vmatprep.subr.bf16.mxu0 0
        %536 = vmatpush1.bf16.msra.mxu0 0
        %537 = vmatprep.subr.bf16.mxu0 0
        %538 = vmatpush1.bf16.msra.mxu0 0
        %539 = vmatprep.subr.bf16.mxu0 0
        %540 = vmatpush1.bf16.msra.mxu0 0
        %541 = vmatprep.subr.bf16.mxu0 0
        %542 = vmatpush1.bf16.msra.mxu0 0
        %543 = vmatprep.subr.bf16.mxu0 0
        %544 = vmatpush1.bf16.msra.mxu0 0
        %545 = vmatprep.subr.bf16.mxu0 0
        %546 = vmatpush1.bf16.msra.mxu0 0
        %547 = vmatprep.subr.bf16.mxu0 0
        %548 = vmatpush1.bf16.msra.mxu0 0
        %549 = vmatprep.subr.bf16.mxu0 0
        %550 = vmatpush1.bf16.msra.mxu0 0
        %551 = vmatprep.subr.bf16.mxu0 0
        %552 = vmatpush1.bf16.msra.mxu0 0
        %553 = vmatprep.mubr.bf16.mxu0 0
        %554 = vmatmul.mubr.bf16.gmra.mrb[0].mxu0 %v453
        %v555 = vpop.f32.mrb[0].mxu0
        %v556 = vadd.f32 0.0, %v555
        %v557 = vpop.f32.mrb[0].mxu0
        %v558 = vadd.f32 0.0, %v557
        %v559 = vpop.f32.mrb[0].mxu0
        %v560 = vpop.f32.mrb[0].mxu0
        %561 = vdwg.mxu0
        %562 = vmatprep.subr.bf16.mxu0 %v472
        %563 = vmatpush1.bf16.msra.mxu0 %v469
        %564 = vmatprep.subr.bf16.mxu0 0
        %565 = vmatpush1.bf16.msra.mxu0 0
        %566 = vmatprep.subr.bf16.mxu0 0
        %567 = vmatpush1.bf16.msra.mxu0 0
        %568 = vmatprep.subr.bf16.mxu0 0
        %569 = vmatpush1.bf16.msra.mxu0 0
        %570 = vmatprep.subr.bf16.mxu0 0
        %571 = vmatpush1.bf16.msra.mxu0 0
        %572 = vmatprep.subr.bf16.mxu0 0
        %573 = vmatpush1.bf16.msra.mxu0 0
        %574 = vmatprep.subr.bf16.mxu0 0
        %575 = vmatpush1.bf16.msra.mxu0 0
        %576 = vmatprep.subr.bf16.mxu0 0
        %577 = vmatpush1.bf16.msra.mxu0 0
        %578 = vmatprep.subr.bf16.mxu0 0
        %579 = vmatpush1.bf16.msra.mxu0 0
        %580 = vmatprep.subr.bf16.mxu0 0
        %581 = vmatpush1.bf16.msra.mxu0 0
        %582 = vmatprep.subr.bf16.mxu0 0
        %583 = vmatpush1.bf16.msra.mxu0 0
        %584 = vmatprep.subr.bf16.mxu0 0
        %585 = vmatpush1.bf16.msra.mxu0 0
        %586 = vmatprep.subr.bf16.mxu0 0
        %587 = vmatpush1.bf16.msra.mxu0 0
        %588 = vmatprep.subr.bf16.mxu0 0
        %589 = vmatpush1.bf16.msra.mxu0 0
        %590 = vmatprep.subr.bf16.mxu0 0
        %591 = vmatpush1.bf16.msra.mxu0 0
        %592 = vmatprep.subr.bf16.mxu0 0
        %593 = vmatpush1.bf16.msra.mxu0 0
        %594 = vmatprep.mubr.bf16.mxu0 0
        %595 = vmatmul.mubr.bf16.gmra.mrb[0].mxu0 %v453
        %v596 = vpop.f32.mrb[0].mxu0
        %v597 = vadd.f32 0.0, %v596
        %v598 = vpop.f32.mrb[0].mxu0
        %v599 = vadd.f32 0.0, %v598
        %v600 = vpop.f32.mrb[0].mxu0
        %v601 = vpop.f32.mrb[0].mxu0
        %602 = vdwg.mxu0
        %603 = vmatprep.subr.bf16.mxu0 %v478
        %604 = vmatpush1.bf16.msra.mxu0 %v475
        %605 = vmatprep.subr.bf16.mxu0 0
        %606 = vmatpush1.bf16.msra.mxu0 0
        %607 = vmatprep.subr.bf16.mxu0 0
        %608 = vmatpush1.bf16.msra.mxu0 0
        %609 = vmatprep.subr.bf16.mxu0 0
        %610 = vmatpush1.bf16.msra.mxu0 0
        %611 = vmatprep.subr.bf16.mxu0 0
        %612 = vmatpush1.bf16.msra.mxu0 0
        %613 = vmatprep.subr.bf16.mxu0 0
        %614 = vmatpush1.bf16.msra.mxu0 0
        %615 = vmatprep.subr.bf16.mxu0 0
        %616 = vmatpush1.bf16.msra.mxu0 0
        %617 = vmatprep.subr.bf16.mxu0 0
        %618 = vmatpush1.bf16.msra.mxu0 0
        %619 = vmatprep.subr.bf16.mxu0 0
        %620 = vmatpush1.bf16.msra.mxu0 0
        %621 = vmatprep.subr.bf16.mxu0 0
        %622 = vmatpush1.bf16.msra.mxu0 0
        %623 = vmatprep.subr.bf16.mxu0 0
        %624 = vmatpush1.bf16.msra.mxu0 0
        %625 = vmatprep.subr.bf16.mxu0 0
        %626 = vmatpush1.bf16.msra.mxu0 0
        %627 = vmatprep.subr.bf16.mxu0 0
        %628 = vmatpush1.bf16.msra.mxu0 0
        %629 = vmatprep.subr.bf16.mxu0 0
        %630 = vmatpush1.bf16.msra.mxu0 0
        %631 = vmatprep.subr.bf16.mxu0 0
        %632 = vmatpush1.bf16.msra.mxu0 0
        %633 = vmatprep.subr.bf16.mxu0 0
        %634 = vmatpush1.bf16.msra.mxu0 0
        %635 = vmatprep.mubr.bf16.mxu0 0
        %636 = vmatmul.mubr.bf16.gmra.mrb[0].mxu0 %v453
        %v637 = vpop.f32.mrb[0].mxu0
        %v638 = vadd.f32 0.0, %v637
        %v639 = vpop.f32.mrb[0].mxu0
        %v640 = vadd.f32 0.0, %v639
        %v641 = vpop.f32.mrb[0].mxu0
        %v642 = vpop.f32.mrb[0].mxu0
        %643 = vdwg.mxu0
        %v645 = vsel %vm451, %v397, 0
        %v648 = vsel %vm455, %v415, 0
        %v651 = vsel %vm455, %v416, 0
        %v654 = vsel %vm455, %v417, 0
        %v657 = vsel %vm455, %v418, 0
        %v660 = vsel %vm455, %v419, 0
        %v663 = vsel %vm455, %v420, 0
        %v666 = vsel %vm455, %v421, 0
        %v669 = vsel %vm455, %v422, 0
        %671 = vmatprep.subr.bf16.mxu0 %v651
        %672 = vmatpush1.bf16.msra.mxu0 %v648
        %673 = vmatprep.subr.bf16.mxu0 0
        %674 = vmatpush1.bf16.msra.mxu0 0
        %675 = vmatprep.subr.bf16.mxu0 0
        %676 = vmatpush1.bf16.msra.mxu0 0
        %677 = vmatprep.subr.bf16.mxu0 0
        %678 = vmatpush1.bf16.msra.mxu0 0
        %679 = vmatprep.subr.bf16.mxu0 0
        %680 = vmatpush1.bf16.msra.mxu0 0
        %681 = vmatprep.subr.bf16.mxu0 0
        %682 = vmatpush1.bf16.msra.mxu0 0
        %683 = vmatprep.subr.bf16.mxu0 0
        %684 = vmatpush1.bf16.msra.mxu0 0
        %685 = vmatprep.subr.bf16.mxu0 0
        %686 = vmatpush1.bf16.msra.mxu0 0
        %687 = vmatprep.subr.bf16.mxu0 0
        %688 = vmatpush1.bf16.msra.mxu0 0
        %689 = vmatprep.subr.bf16.mxu0 0
        %690 = vmatpush1.bf16.msra.mxu0 0
        %691 = vmatprep.subr.bf16.mxu0 0
        %692 = vmatpush1.bf16.msra.mxu0 0
        %693 = vmatprep.subr.bf16.mxu0 0
        %694 = vmatpush1.bf16.msra.mxu0 0
        %695 = vmatprep.subr.bf16.mxu0 0
        %696 = vmatpush1.bf16.msra.mxu0 0
        %697 = vmatprep.subr.bf16.mxu0 0
        %698 = vmatpush1.bf16.msra.mxu0 0
        %699 = vmatprep.subr.bf16.mxu0 0
        %700 = vmatpush1.bf16.msra.mxu0 0
        %701 = vmatprep.subr.bf16.mxu0 0
        %702 = vmatpush1.bf16.msra.mxu0 0
        %703 = vmatprep.mubr.bf16.mxu0 0
        %704 = vmatmul.mubr.bf16.gmra.mrb[0].mxu0 %v645
        %v705 = vpop.f32.mrb[0].mxu0
        %v706 = vadd.f32 %v515, %v705
        %v707 = vpop.f32.mrb[0].mxu0
        %v708 = vadd.f32 %v517, %v707
        %v709 = vpop.f32.mrb[0].mxu0
        %v710 = vpop.f32.mrb[0].mxu0
        %711 = vdwg.mxu0
        %712 = vmatprep.subr.bf16.mxu0 %v657
        %713 = vmatpush1.bf16.msra.mxu0 %v654
        %714 = vmatprep.subr.bf16.mxu0 0
        %715 = vmatpush1.bf16.msra.mxu0 0
        %716 = vmatprep.subr.bf16.mxu0 0
        %717 = vmatpush1.bf16.msra.mxu0 0
        %718 = vmatprep.subr.bf16.mxu0 0
        %719 = vmatpush1.bf16.msra.mxu0 0
        %720 = vmatprep.subr.bf16.mxu0 0
        %721 = vmatpush1.bf16.msra.mxu0 0
        %722 = vmatprep.subr.bf16.mxu0 0
        %723 = vmatpush1.bf16.msra.mxu0 0
        %724 = vmatprep.subr.bf16.mxu0 0
        %725 = vmatpush1.bf16.msra.mxu0 0
        %726 = vmatprep.subr.bf16.mxu0 0
        %727 = vmatpush1.bf16.msra.mxu0 0
        %728 = vmatprep.subr.bf16.mxu0 0
        %729 = vmatpush1.bf16.msra.mxu0 0
        %730 = vmatprep.subr.bf16.mxu0 0
        %731 = vmatpush1.bf16.msra.mxu0 0
        %732 = vmatprep.subr.bf16.mxu0 0
        %733 = vmatpush1.bf16.msra.mxu0 0
        %734 = vmatprep.subr.bf16.mxu0 0
        %735 = vmatpush1.bf16.msra.mxu0 0
        %736 = vmatprep.subr.bf16.mxu0 0
        %737 = vmatpush1.bf16.msra.mxu0 0
        %738 = vmatprep.subr.bf16.mxu0 0
        %739 = vmatpush1.bf16.msra.mxu0 0
        %740 = vmatprep.subr.bf16.mxu0 0
        %741 = vmatpush1.bf16.msra.mxu0 0
        %742 = vmatprep.subr.bf16.mxu0 0
        %743 = vmatpush1.bf16.msra.mxu0 0
        %744 = vmatprep.mubr.bf16.mxu0 0
        %745 = vmatmul.mubr.bf16.gmra.mrb[0].mxu0 %v645
        %v746 = vpop.f32.mrb[0].mxu0
        %v747 = vadd.f32 %v556, %v746
        %v748 = vpop.f32.mrb[0].mxu0
        %v749 = vadd.f32 %v558, %v748
        %v750 = vpop.f32.mrb[0].mxu0
        %v751 = vpop.f32.mrb[0].mxu0
        %752 = vdwg.mxu0
        %753 = vmatprep.subr.bf16.mxu0 %v663
        %754 = vmatpush1.bf16.msra.mxu0 %v660
        %755 = vmatprep.subr.bf16.mxu0 0
        %756 = vmatpush1.bf16.msra.mxu0 0
        %757 = vmatprep.subr.bf16.mxu0 0
        %758 = vmatpush1.bf16.msra.mxu0 0
        %759 = vmatprep.subr.bf16.mxu0 0
        %760 = vmatpush1.bf16.msra.mxu0 0
        %761 = vmatprep.subr.bf16.mxu0 0
        %762 = vmatpush1.bf16.msra.mxu0 0
        %763 = vmatprep.subr.bf16.mxu0 0
        %764 = vmatpush1.bf16.msra.mxu0 0
        %765 = vmatprep.subr.bf16.mxu0 0
        %766 = vmatpush1.bf16.msra.mxu0 0
        %767 = vmatprep.subr.bf16.mxu0 0
        %768 = vmatpush1.bf16.msra.mxu0 0
        %769 = vmatprep.subr.bf16.mxu0 0
        %770 = vmatpush1.bf16.msra.mxu0 0
        %771 = vmatprep.subr.bf16.mxu0 0
        %772 = vmatpush1.bf16.msra.mxu0 0
        %773 = vmatprep.subr.bf16.mxu0 0
        %774 = vmatpush1.bf16.msra.mxu0 0
        %775 = vmatprep.subr.bf16.mxu0 0
        %776 = vmatpush1.bf16.msra.mxu0 0
        %777 = vmatprep.subr.bf16.mxu0 0
        %778 = vmatpush1.bf16.msra.mxu0 0
        %779 = vmatprep.subr.bf16.mxu0 0
        %780 = vmatpush1.bf16.msra.mxu0 0
        %781 = vmatprep.subr.bf16.mxu0 0
        %782 = vmatpush1.bf16.msra.mxu0 0
        %783 = vmatprep.subr.bf16.mxu0 0
        %784 = vmatpush1.bf16.msra.mxu0 0
        %785 = vmatprep.mubr.bf16.mxu0 0
        %786 = vmatmul.mubr.bf16.gmra.mrb[0].mxu0 %v645
        %v787 = vpop.f32.mrb[0].mxu0
        %v788 = vadd.f32 %v597, %v787
        %v789 = vpop.f32.mrb[0].mxu0
        %v790 = vadd.f32 %v599, %v789
        %v791 = vpop.f32.mrb[0].mxu0
        %v792 = vpop.f32.mrb[0].mxu0
        %793 = vdwg.mxu0
        %794 = vmatprep.subr.bf16.mxu0 %v669
        %795 = vmatpush1.bf16.msra.mxu0 %v666
        %796 = vmatprep.subr.bf16.mxu0 0
        %797 = vmatpush1.bf16.msra.mxu0 0
        %798 = vmatprep.subr.bf16.mxu0 0
        %799 = vmatpush1.bf16.msra.mxu0 0
        %800 = vmatprep.subr.bf16.mxu0 0
        %801 = vmatpush1.bf16.msra.mxu0 0
        %802 = vmatprep.subr.bf16.mxu0 0
        %803 = vmatpush1.bf16.msra.mxu0 0
        %804 = vmatprep.subr.bf16.mxu0 0
        %805 = vmatpush1.bf16.msra.mxu0 0
        %806 = vmatprep.subr.bf16.mxu0 0
        %807 = vmatpush1.bf16.msra.mxu0 0
        %808 = vmatprep.subr.bf16.mxu0 0
        %809 = vmatpush1.bf16.msra.mxu0 0
        %810 = vmatprep.subr.bf16.mxu0 0
        %811 = vmatpush1.bf16.msra.mxu0 0
        %812 = vmatprep.subr.bf16.mxu0 0
        %813 = vmatpush1.bf16.msra.mxu0 0
        %814 = vmatprep.subr.bf16.mxu0 0
        %815 = vmatpush1.bf16.msra.mxu0 0
        %816 = vmatprep.subr.bf16.mxu0 0
        %817 = vmatpush1.bf16.msra.mxu0 0
        %818 = vmatprep.subr.bf16.mxu0 0
        %819 = vmatpush1.bf16.msra.mxu0 0
        %820 = vmatprep.subr.bf16.mxu0 0
        %821 = vmatpush1.bf16.msra.mxu0 0
        %822 = vmatprep.subr.bf16.mxu0 0
        %823 = vmatpush1.bf16.msra.mxu0 0
        %824 = vmatprep.subr.bf16.mxu0 0
        %825 = vmatpush1.bf16.msra.mxu0 0
        %826 = vmatprep.mubr.bf16.mxu0 0
        %827 = vmatmul.mubr.bf16.gmra.mrb[0].mxu0 %v645
        %v828 = vpop.f32.mrb[0].mxu0
        %v829 = vadd.f32 %v638, %v828
        %v830 = vpop.f32.mrb[0].mxu0
        %v831 = vadd.f32 %v640, %v830
        %v832 = vpop.f32.mrb[0].mxu0
        %v833 = vpop.f32.mrb[0].mxu0
        %834 = vdwg.mxu0
        %s835 = scalar_lea.vmem %s1, 8
        %v836 = vld [vmem:[%s835] sm:$0xf]
        %837 = vrot.lane.b32.xlu0 %v415, 126
        %v838 = vpop.permute.xlu0 %837
        %839 = vrot.lane.b32.xlu0 %v416, 126
        %v840 = vpop.permute.xlu0 %839
        %841 = vrot.lane.b32.xlu0 %v417, 126
        %v842 = vpop.permute.xlu0 %841
        %843 = vrot.lane.b32.xlu0 %v418, 126
        %v844 = vpop.permute.xlu0 %843
        %845 = vrot.lane.b32.xlu0 %v419, 126
        %v846 = vpop.permute.xlu0 %845
        %847 = vrot.lane.b32.xlu0 %v420, 126
        %v848 = vpop.permute.xlu0 %847
        %849 = vrot.lane.b32.xlu0 %v421, 126
        %v850 = vpop.permute.xlu0 %849
        %851 = vrot.lane.b32.xlu0 %v422, 126
        %v852 = vpop.permute.xlu0 %851
        %853 = vrot.lane.b32.xlu0 %v423, 126
        %v854 = vpop.permute.xlu0 %853
        %vm855 = vcmask 1031168
        %v856 = vsel %vm855, %v838, %v840
        %v857 = vsel %vm855, %v840, %v842
        %v858 = vsel %vm855, %v842, %v844
        %v859 = vsel %vm855, %v844, %v846
        %v860 = vsel %vm855, %v846, %v848
        %v861 = vsel %vm855, %v848, %v850
        %v862 = vsel %vm855, %v850, %v852
        %v863 = vsel %vm855, %v852, %v854
        %v865 = vsel %vm451, %v836, 0
        %v868 = vsel %vm455, %v856, 0
        %v871 = vsel %vm455, %v857, 0
        %v874 = vsel %vm455, %v858, 0
        %v877 = vsel %vm455, %v859, 0
        %v880 = vsel %vm455, %v860, 0
        %v883 = vsel %vm455, %v861, 0
        %v886 = vsel %vm455, %v862, 0
        %v889 = vsel %vm455, %v863, 0
        %891 = vmatprep.subr.bf16.mxu0 %v871
        %892 = vmatpush1.bf16.msra.mxu0 %v868
        %893 = vmatprep.subr.bf16.mxu0 0
        %894 = vmatpush1.bf16.msra.mxu0 0
        %895 = vmatprep.subr.bf16.mxu0 0
        %896 = vmatpush1.bf16.msra.mxu0 0
        %897 = vmatprep.subr.bf16.mxu0 0
        %898 = vmatpush1.bf16.msra.mxu0 0
        %899 = vmatprep.subr.bf16.mxu0 0
        %900 = vmatpush1.bf16.msra.mxu0 0
        %901 = vmatprep.subr.bf16.mxu0 0
        %902 = vmatpush1.bf16.msra.mxu0 0
        %903 = vmatprep.subr.bf16.mxu0 0
        %904 = vmatpush1.bf16.msra.mxu0 0
        %905 = vmatprep.subr.bf16.mxu0 0
        %906 = vmatpush1.bf16.msra.mxu0 0
        %907 = vmatprep.subr.bf16.mxu0 0
        %908 = vmatpush1.bf16.msra.mxu0 0
        %909 = vmatprep.subr.bf16.mxu0 0
        %910 = vmatpush1.bf16.msra.mxu0 0
        %911 = vmatprep.subr.bf16.mxu0 0
        %912 = vmatpush1.bf16.msra.mxu0 0
        %913 = vmatprep.subr.bf16.mxu0 0
        %914 = vmatpush1.bf16.msra.mxu0 0
        %915 = vmatprep.subr.bf16.mxu0 0
        %916 = vmatpush1.bf16.msra.mxu0 0
        %917 = vmatprep.subr.bf16.mxu0 0
        %918 = vmatpush1.bf16.msra.mxu0 0
        %919 = vmatprep.subr.bf16.mxu0 0
        %920 = vmatpush1.bf16.msra.mxu0 0
        %921 = vmatprep.subr.bf16.mxu0 0
        %922 = vmatpush1.bf16.msra.mxu0 0
        %923 = vmatprep.mubr.bf16.mxu0 0
        %924 = vmatmul.mubr.bf16.gmra.mrb[0].mxu0 %v865
        %v925 = vpop.f32.mrb[0].mxu0
        %v926 = vadd.f32 0.0, %v925
        %v927 = vpop.f32.mrb[0].mxu0
        %v928 = vadd.f32 0.0, %v927
        %v929 = vpop.f32.mrb[0].mxu0
        %v930 = vpop.f32.mrb[0].mxu0
        %931 = vdwg.mxu0
        %932 = vmatprep.subr.bf16.mxu0 %v877
        %933 = vmatpush1.bf16.msra.mxu0 %v874
        %934 = vmatprep.subr.bf16.mxu0 0
        %935 = vmatpush1.bf16.msra.mxu0 0
        %936 = vmatprep.subr.bf16.mxu0 0
        %937 = vmatpush1.bf16.msra.mxu0 0
        %938 = vmatprep.subr.bf16.mxu0 0
        %939 = vmatpush1.bf16.msra.mxu0 0
        %940 = vmatprep.subr.bf16.mxu0 0
        %941 = vmatpush1.bf16.msra.mxu0 0
        %942 = vmatprep.subr.bf16.mxu0 0
        %943 = vmatpush1.bf16.msra.mxu0 0
        %944 = vmatprep.subr.bf16.mxu0 0
        %945 = vmatpush1.bf16.msra.mxu0 0
        %946 = vmatprep.subr.bf16.mxu0 0
        %947 = vmatpush1.bf16.msra.mxu0 0
        %948 = vmatprep.subr.bf16.mxu0 0
        %949 = vmatpush1.bf16.msra.mxu0 0
        %950 = vmatprep.subr.bf16.mxu0 0
        %951 = vmatpush1.bf16.msra.mxu0 0
        %952 = vmatprep.subr.bf16.mxu0 0
        %953 = vmatpush1.bf16.msra.mxu0 0
        %954 = vmatprep.subr.bf16.mxu0 0
        %955 = vmatpush1.bf16.msra.mxu0 0
        %956 = vmatprep.subr.bf16.mxu0 0
        %957 = vmatpush1.bf16.msra.mxu0 0
        %958 = vmatprep.subr.bf16.mxu0 0
        %959 = vmatpush1.bf16.msra.mxu0 0
        %960 = vmatprep.subr.bf16.mxu0 0
        %961 = vmatpush1.bf16.msra.mxu0 0
        %962 = vmatprep.subr.bf16.mxu0 0
        %963 = vmatpush1.bf16.msra.mxu0 0
        %964 = vmatprep.mubr.bf16.mxu0 0
        %965 = vmatmul.mubr.bf16.gmra.mrb[0].mxu0 %v865
        %v966 = vpop.f32.mrb[0].mxu0
        %v967 = vadd.f32 0.0, %v966
        %v968 = vpop.f32.mrb[0].mxu0
        %v969 = vadd.f32 0.0, %v968
        %v970 = vpop.f32.mrb[0].mxu0
        %v971 = vpop.f32.mrb[0].mxu0
        %972 = vdwg.mxu0
        %973 = vmatprep.subr.bf16.mxu0 %v883
        %974 = vmatpush1.bf16.msra.mxu0 %v880
        %975 = vmatprep.subr.bf16.mxu0 0
        %976 = vmatpush1.bf16.msra.mxu0 0
        %977 = vmatprep.subr.bf16.mxu0 0
        %978 = vmatpush1.bf16.msra.mxu0 0
        %979 = vmatprep.subr.bf16.mxu0 0
        %980 = vmatpush1.bf16.msra.mxu0 0
        %981 = vmatprep.subr.bf16.mxu0 0
        %982 = vmatpush1.bf16.msra.mxu0 0
        %983 = vmatprep.subr.bf16.mxu0 0
        %984 = vmatpush1.bf16.msra.mxu0 0
        %985 = vmatprep.subr.bf16.mxu0 0
        %986 = vmatpush1.bf16.msra.mxu0 0
        %987 = vmatprep.subr.bf16.mxu0 0
        %988 = vmatpush1.bf16.msra.mxu0 0
        %989 = vmatprep.subr.bf16.mxu0 0
        %990 = vmatpush1.bf16.msra.mxu0 0
        %991 = vmatprep.subr.bf16.mxu0 0
        %992 = vmatpush1.bf16.msra.mxu0 0
        %993 = vmatprep.subr.bf16.mxu0 0
        %994 = vmatpush1.bf16.msra.mxu0 0
        %995 = vmatprep.subr.bf16.mxu0 0
        %996 = vmatpush1.bf16.msra.mxu0 0
        %997 = vmatprep.subr.bf16.mxu0 0
        %998 = vmatpush1.bf16.msra.mxu0 0
        %999 = vmatprep.subr.bf16.mxu0 0
        %1000 = vmatpush1.bf16.msra.mxu0 0
        %1001 = vmatprep.subr.bf16.mxu0 0
        %1002 = vmatpush1.bf16.msra.mxu0 0
        %1003 = vmatprep.subr.bf16.mxu0 0
        %1004 = vmatpush1.bf16.msra.mxu0 0
        %1005 = vmatprep.mubr.bf16.mxu0 0
        %1006 = vmatmul.mubr.bf16.gmra.mrb[0].mxu0 %v865
        %v1007 = vpop.f32.mrb[0].mxu0
        %v1008 = vadd.f32 0.0, %v1007
        %v1009 = vpop.f32.mrb[0].mxu0
        %v1010 = vadd.f32 0.0, %v1009
        %v1011 = vpop.f32.mrb[0].mxu0
        %v1012 = vpop.f32.mrb[0].mxu0
        %1013 = vdwg.mxu0
        %1014 = vmatprep.subr.bf16.mxu0 %v889
        %1015 = vmatpush1.bf16.msra.mxu0 %v886
        %1016 = vmatprep.subr.bf16.mxu0 0
        %1017 = vmatpush1.bf16.msra.mxu0 0
        %1018 = vmatprep.subr.bf16.mxu0 0
        %1019 = vmatpush1.bf16.msra.mxu0 0
        %1020 = vmatprep.subr.bf16.mxu0 0
        %1021 = vmatpush1.bf16.msra.mxu0 0
        %1022 = vmatprep.subr.bf16.mxu0 0
        %1023 = vmatpush1.bf16.msra.mxu0 0
        %1024 = vmatprep.subr.bf16.mxu0 0
        %1025 = vmatpush1.bf16.msra.mxu0 0
        %1026 = vmatprep.subr.bf16.mxu0 0
        %1027 = vmatpush1.bf16.msra.mxu0 0
        %1028 = vmatprep.subr.bf16.mxu0 0
        %1029 = vmatpush1.bf16.msra.mxu0 0
        %1030 = vmatprep.subr.bf16.mxu0 0
        %1031 = vmatpush1.bf16.msra.mxu0 0
        %1032 = vmatprep.subr.bf16.mxu0 0
        %1033 = vmatpush1.bf16.msra.mxu0 0
        %1034 = vmatprep.subr.bf16.mxu0 0
        %1035 = vmatpush1.bf16.msra.mxu0 0
        %1036 = vmatprep.subr.bf16.mxu0 0
        %1037 = vmatpush1.bf16.msra.mxu0 0
        %1038 = vmatprep.subr.bf16.mxu0 0
        %1039 = vmatpush1.bf16.msra.mxu0 0
        %1040 = vmatprep.subr.bf16.mxu0 0
        %1041 = vmatpush1.bf16.msra.mxu0 0
        %1042 = vmatprep.subr.bf16.mxu0 0
        %1043 = vmatpush1.bf16.msra.mxu0 0
        %1044 = vmatprep.subr.bf16.mxu0 0
        %1045 = vmatpush1.bf16.msra.mxu0 0
        %1046 = vmatprep.mubr.bf16.mxu0 0
        %1047 = vmatmul.mubr.bf16.gmra.mrb[0].mxu0 %v865
        %v1048 = vpop.f32.mrb[0].mxu0
        %v1049 = vadd.f32 0.0, %v1048
        %v1050 = vpop.f32.mrb[0].mxu0
        %v1051 = vadd.f32 0.0, %v1050
        %v1052 = vpop.f32.mrb[0].mxu0
        %v1053 = vpop.f32.mrb[0].mxu0
        %1054 = vdwg.mxu0
        %v1055 = vadd.f32 %v706, %v926
        %v1056 = vadd.f32 %v708, %v928
        %v1057 = vadd.f32 %v747, %v967
        %v1058 = vadd.f32 %v749, %v969
        %v1059 = vadd.f32 %v788, %v1008
        %v1060 = vadd.f32 %v790, %v1010
        %v1061 = vadd.f32 %v829, %v1049
        %v1062 = vadd.f32 %v831, %v1051
        %v1063 = vld [vmem:[%s387 + $0x4] sm:$0xff]
        %v1064 = vld [vmem:[%s387 + $0xc] sm:$0xff]
        %v1065 = vld [vmem:[%s387 + $0x14] sm:$0xff]
        %v1066 = vld [vmem:[%s387 + $0x1c] sm:$0xff]
        %s1067 = scalar_lea.vmem %s1, 12
        %v1068 = vld [vmem:[%s1067] sm:$0xf]
        %v1073 = vunpack.c.l.b16 %v1063
        %v1074 = vunpack.c.h.b16 %v1063
        %v1075 = vunpack.c.l.b16 %v1064
        %v1076 = vunpack.c.h.b16 %v1064
        %v1077 = vunpack.c.l.b16 %v1065
        %v1078 = vunpack.c.h.b16 %v1065
        %v1079 = vunpack.c.l.b16 %v1066
        %v1080 = vunpack.c.h.b16 %v1066
        %v1081 = vpack.c.b16 %v1073, %v1073
        %v1082 = vpack.c.b16 %v1074, %v1074
        %v1083 = vpack.c.b16 %v1075, %v1075
        %v1084 = vpack.c.b16 %v1076, %v1076
        %v1085 = vpack.c.b16 %v1077, %v1077
        %v1086 = vpack.c.b16 %v1078, %v1078
        %v1087 = vpack.c.b16 %v1079, %v1079
        %v1088 = vpack.c.b16 %v1080, %v1080
        %v1090 = vsel %vm451, %v1068, 0
        %v1093 = vsel %vm455, %v1081, 0
        %v1096 = vsel %vm455, %v1082, 0
        %v1099 = vsel %vm455, %v1083, 0
        %v1102 = vsel %vm455, %v1084, 0
        %v1105 = vsel %vm455, %v1085, 0
        %v1108 = vsel %vm455, %v1086, 0
        %v1111 = vsel %vm455, %v1087, 0
        %v1114 = vsel %vm455, %v1088, 0
        %1116 = vmatprep.subr.bf16.mxu0 %v1096
        %1117 = vmatpush1.bf16.msra.mxu0 %v1093
        %1118 = vmatprep.subr.bf16.mxu0 0
        %1119 = vmatpush1.bf16.msra.mxu0 0
        %1120 = vmatprep.subr.bf16.mxu0 0
        %1121 = vmatpush1.bf16.msra.mxu0 0
        %1122 = vmatprep.subr.bf16.mxu0 0
        %1123 = vmatpush1.bf16.msra.mxu0 0
        %1124 = vmatprep.subr.bf16.mxu0 0
        %1125 = vmatpush1.bf16.msra.mxu0 0
        %1126 = vmatprep.subr.bf16.mxu0 0
        %1127 = vmatpush1.bf16.msra.mxu0 0
        %1128 = vmatprep.subr.bf16.mxu0 0
        %1129 = vmatpush1.bf16.msra.mxu0 0
        %1130 = vmatprep.subr.bf16.mxu0 0
        %1131 = vmatpush1.bf16.msra.mxu0 0
        %1132 = vmatprep.subr.bf16.mxu0 0
        %1133 = vmatpush1.bf16.msra.mxu0 0
        %1134 = vmatprep.subr.bf16.mxu0 0
        %1135 = vmatpush1.bf16.msra.mxu0 0
        %1136 = vmatprep.subr.bf16.mxu0 0
        %1137 = vmatpush1.bf16.msra.mxu0 0
        %1138 = vmatprep.subr.bf16.mxu0 0
        %1139 = vmatpush1.bf16.msra.mxu0 0
        %1140 = vmatprep.subr.bf16.mxu0 0
        %1141 = vmatpush1.bf16.msra.mxu0 0
        %1142 = vmatprep.subr.bf16.mxu0 0
        %1143 = vmatpush1.bf16.msra.mxu0 0
        %1144 = vmatprep.subr.bf16.mxu0 0
        %1145 = vmatpush1.bf16.msra.mxu0 0
        %1146 = vmatprep.subr.bf16.mxu0 0
        %1147 = vmatpush1.bf16.msra.mxu0 0
        %1148 = vmatprep.mubr.bf16.mxu0 0
        %1149 = vmatmul.mubr.bf16.gmra.mrb[0].mxu0 %v1090
        %v1150 = vpop.f32.mrb[0].mxu0
        %v1151 = vadd.f32 0.0, %v1150
        %v1152 = vpop.f32.mrb[0].mxu0
        %v1153 = vadd.f32 0.0, %v1152
        %v1154 = vpop.f32.mrb[0].mxu0
        %v1155 = vpop.f32.mrb[0].mxu0
        %1156 = vdwg.mxu0
        %1157 = vmatprep.subr.bf16.mxu0 %v1102
        %1158 = vmatpush1.bf16.msra.mxu0 %v1099
        %1159 = vmatprep.subr.bf16.mxu0 0
        %1160 = vmatpush1.bf16.msra.mxu0 0
        %1161 = vmatprep.subr.bf16.mxu0 0
        %1162 = vmatpush1.bf16.msra.mxu0 0
        %1163 = vmatprep.subr.bf16.mxu0 0
        %1164 = vmatpush1.bf16.msra.mxu0 0
        %1165 = vmatprep.subr.bf16.mxu0 0
        %1166 = vmatpush1.bf16.msra.mxu0 0
        %1167 = vmatprep.subr.bf16.mxu0 0
        %1168 = vmatpush1.bf16.msra.mxu0 0
        %1169 = vmatprep.subr.bf16.mxu0 0
        %1170 = vmatpush1.bf16.msra.mxu0 0
        %1171 = vmatprep.subr.bf16.mxu0 0
        %1172 = vmatpush1.bf16.msra.mxu0 0
        %1173 = vmatprep.subr.bf16.mxu0 0
        %1174 = vmatpush1.bf16.msra.mxu0 0
        %1175 = vmatprep.subr.bf16.mxu0 0
        %1176 = vmatpush1.bf16.msra.mxu0 0
        %1177 = vmatprep.subr.bf16.mxu0 0
        %1178 = vmatpush1.bf16.msra.mxu0 0
        %1179 = vmatprep.subr.bf16.mxu0 0
        %1180 = vmatpush1.bf16.msra.mxu0 0
        %1181 = vmatprep.subr.bf16.mxu0 0
        %1182 = vmatpush1.bf16.msra.mxu0 0
        %1183 = vmatprep.subr.bf16.mxu0 0
        %1184 = vmatpush1.bf16.msra.mxu0 0
        %1185 = vmatprep.subr.bf16.mxu0 0
        %1186 = vmatpush1.bf16.msra.mxu0 0
        %1187 = vmatprep.subr.bf16.mxu0 0
        %1188 = vmatpush1.bf16.msra.mxu0 0
        %1189 = vmatprep.mubr.bf16.mxu0 0
        %1190 = vmatmul.mubr.bf16.gmra.mrb[0].mxu0 %v1090
        %v1191 = vpop.f32.mrb[0].mxu0
        %v1192 = vadd.f32 0.0, %v1191
        %v1193 = vpop.f32.mrb[0].mxu0
        %v1194 = vadd.f32 0.0, %v1193
        %v1195 = vpop.f32.mrb[0].mxu0
        %v1196 = vpop.f32.mrb[0].mxu0
        %1197 = vdwg.mxu0
        %1198 = vmatprep.subr.bf16.mxu0 %v1108
        %1199 = vmatpush1.bf16.msra.mxu0 %v1105
        %1200 = vmatprep.subr.bf16.mxu0 0
        %1201 = vmatpush1.bf16.msra.mxu0 0
        %1202 = vmatprep.subr.bf16.mxu0 0
        %1203 = vmatpush1.bf16.msra.mxu0 0
        %1204 = vmatprep.subr.bf16.mxu0 0
        %1205 = vmatpush1.bf16.msra.mxu0 0
        %1206 = vmatprep.subr.bf16.mxu0 0
        %1207 = vmatpush1.bf16.msra.mxu0 0
        %1208 = vmatprep.subr.bf16.mxu0 0
        %1209 = vmatpush1.bf16.msra.mxu0 0
        %1210 = vmatprep.subr.bf16.mxu0 0
        %1211 = vmatpush1.bf16.msra.mxu0 0
        %1212 = vmatprep.subr.bf16.mxu0 0
        %1213 = vmatpush1.bf16.msra.mxu0 0
        %1214 = vmatprep.subr.bf16.mxu0 0
        %1215 = vmatpush1.bf16.msra.mxu0 0
        %1216 = vmatprep.subr.bf16.mxu0 0
        %1217 = vmatpush1.bf16.msra.mxu0 0
        %1218 = vmatprep.subr.bf16.mxu0 0
        %1219 = vmatpush1.bf16.msra.mxu0 0
        %1220 = vmatprep.subr.bf16.mxu0 0
        %1221 = vmatpush1.bf16.msra.mxu0 0
        %1222 = vmatprep.subr.bf16.mxu0 0
        %1223 = vmatpush1.bf16.msra.mxu0 0
        %1224 = vmatprep.subr.bf16.mxu0 0
        %1225 = vmatpush1.bf16.msra.mxu0 0
        %1226 = vmatprep.subr.bf16.mxu0 0
        %1227 = vmatpush1.bf16.msra.mxu0 0
        %1228 = vmatprep.subr.bf16.mxu0 0
        %1229 = vmatpush1.bf16.msra.mxu0 0
        %1230 = vmatprep.mubr.bf16.mxu0 0
        %1231 = vmatmul.mubr.bf16.gmra.mrb[0].mxu0 %v1090
        %v1232 = vpop.f32.mrb[0].mxu0
        %v1233 = vadd.f32 0.0, %v1232
        %v1234 = vpop.f32.mrb[0].mxu0
        %v1235 = vadd.f32 0.0, %v1234
        %v1236 = vpop.f32.mrb[0].mxu0
        %v1237 = vpop.f32.mrb[0].mxu0
        %1238 = vdwg.mxu0
        %1239 = vmatprep.subr.bf16.mxu0 %v1114
        %1240 = vmatpush1.bf16.msra.mxu0 %v1111
        %1241 = vmatprep.subr.bf16.mxu0 0
        %1242 = vmatpush1.bf16.msra.mxu0 0
        %1243 = vmatprep.subr.bf16.mxu0 0
        %1244 = vmatpush1.bf16.msra.mxu0 0
        %1245 = vmatprep.subr.bf16.mxu0 0
        %1246 = vmatpush1.bf16.msra.mxu0 0
        %1247 = vmatprep.subr.bf16.mxu0 0
        %1248 = vmatpush1.bf16.msra.mxu0 0
        %1249 = vmatprep.subr.bf16.mxu0 0
        %1250 = vmatpush1.bf16.msra.mxu0 0
        %1251 = vmatprep.subr.bf16.mxu0 0
        %1252 = vmatpush1.bf16.msra.mxu0 0
        %1253 = vmatprep.subr.bf16.mxu0 0
        %1254 = vmatpush1.bf16.msra.mxu0 0
        %1255 = vmatprep.subr.bf16.mxu0 0
        %1256 = vmatpush1.bf16.msra.mxu0 0
        %1257 = vmatprep.subr.bf16.mxu0 0
        %1258 = vmatpush1.bf16.msra.mxu0 0
        %1259 = vmatprep.subr.bf16.mxu0 0
        %1260 = vmatpush1.bf16.msra.mxu0 0
        %1261 = vmatprep.subr.bf16.mxu0 0
        %1262 = vmatpush1.bf16.msra.mxu0 0
        %1263 = vmatprep.subr.bf16.mxu0 0
        %1264 = vmatpush1.bf16.msra.mxu0 0
        %1265 = vmatprep.subr.bf16.mxu0 0
        %1266 = vmatpush1.bf16.msra.mxu0 0
        %1267 = vmatprep.subr.bf16.mxu0 0
        %1268 = vmatpush1.bf16.msra.mxu0 0
        %1269 = vmatprep.subr.bf16.mxu0 0
        %1270 = vmatpush1.bf16.msra.mxu0 0
        %1271 = vmatprep.mubr.bf16.mxu0 0
        %1272 = vmatmul.mubr.bf16.gmra.mrb[0].mxu0 %v1090
        %v1273 = vpop.f32.mrb[0].mxu0
        %v1274 = vadd.f32 0.0, %v1273
        %v1275 = vpop.f32.mrb[0].mxu0
        %v1276 = vadd.f32 0.0, %v1275
        %v1277 = vpop.f32.mrb[0].mxu0
        %v1278 = vpop.f32.mrb[0].mxu0
        %1279 = vdwg.mxu0
        %v1280 = vadd.f32 %v1055, %v1151
        %v1281 = vadd.f32 %v1056, %v1153
        %v1282 = vadd.f32 %v1057, %v1192
        %v1283 = vadd.f32 %v1058, %v1194
        %v1284 = vadd.f32 %v1059, %v1233
        %v1285 = vadd.f32 %v1060, %v1235
        %v1286 = vadd.f32 %v1061, %v1274
        %v1287 = vadd.f32 %v1062, %v1276
        %v1288 = vld [vmem:[%s387 + $0x4] sm:$0xff]
        %v1289 = vld [vmem:[%s387 + $0xc] sm:$0xff]
        %v1290 = vld [vmem:[%s387 + $0x14] sm:$0xff]
        %v1291 = vld [vmem:[%s387 + $0x1c] sm:$0xff]
        %v1292 = vld [vmem:[%s387 + $0x24] sm:$0xf]
        %s1293 = scalar_lea.vmem %s1, 16
        %v1294 = vld [vmem:[%s1293] sm:$0xf]
        %v1300 = vunpack.c.l.b16 %v1288
        %v1301 = vunpack.c.h.b16 %v1288
        %v1302 = vunpack.c.l.b16 %v1289
        %v1303 = vunpack.c.h.b16 %v1289
        %v1304 = vunpack.c.l.b16 %v1290
        %v1305 = vunpack.c.h.b16 %v1290
        %v1306 = vunpack.c.l.b16 %v1291
        %v1307 = vunpack.c.h.b16 %v1291
        %v1308 = vunpack.c.l.b16 %v1292
        %v1309 = vpack.c.b16 %v1300, %v1300
        %v1310 = vpack.c.b16 %v1301, %v1301
        %v1311 = vpack.c.b16 %v1302, %v1302
        %v1312 = vpack.c.b16 %v1303, %v1303
        %v1313 = vpack.c.b16 %v1304, %v1304
        %v1314 = vpack.c.b16 %v1305, %v1305
        %v1315 = vpack.c.b16 %v1306, %v1306
        %v1316 = vpack.c.b16 %v1307, %v1307
        %v1317 = vpack.c.b16 %v1308, %v1308
        %1318 = vrot.lane.b32.xlu0 %v1309, 127
        %v1319 = vpop.permute.xlu0 %1318
        %1320 = vrot.lane.b32.xlu0 %v1310, 127
        %v1321 = vpop.permute.xlu0 %1320
        %1322 = vrot.lane.b32.xlu0 %v1311, 127
        %v1323 = vpop.permute.xlu0 %1322
        %1324 = vrot.lane.b32.xlu0 %v1312, 127
        %v1325 = vpop.permute.xlu0 %1324
        %1326 = vrot.lane.b32.xlu0 %v1313, 127
        %v1327 = vpop.permute.xlu0 %1326
        %1328 = vrot.lane.b32.xlu0 %v1314, 127
        %v1329 = vpop.permute.xlu0 %1328
        %1330 = vrot.lane.b32.xlu0 %v1315, 127
        %v1331 = vpop.permute.xlu0 %1330
        %1332 = vrot.lane.b32.xlu0 %v1316, 127
        %v1333 = vpop.permute.xlu0 %1332
        %1334 = vrot.lane.b32.xlu0 %v1317, 127
        %v1335 = vpop.permute.xlu0 %1334
        %v1336 = vsel %vm442, %v1319, %v1321
        %v1337 = vsel %vm442, %v1321, %v1323
        %v1338 = vsel %vm442, %v1323, %v1325
        %v1339 = vsel %vm442, %v1325, %v1327
        %v1340 = vsel %vm442, %v1327, %v1329
        %v1341 = vsel %vm442, %v1329, %v1331
        %v1342 = vsel %vm442, %v1331, %v1333
        %v1343 = vsel %vm442, %v1333, %v1335
        %v1345 = vsel %vm451, %v1294, 0
        %v1348 = vsel %vm455, %v1336, 0
        %v1351 = vsel %vm455, %v1337, 0
        %v1354 = vsel %vm455, %v1338, 0
        %v1357 = vsel %vm455, %v1339, 0
        %v1360 = vsel %vm455, %v1340, 0
        %v1363 = vsel %vm455, %v1341, 0
        %v1366 = vsel %vm455, %v1342, 0
        %v1369 = vsel %vm455, %v1343, 0
        %1371 = vmatprep.subr.bf16.mxu0 %v1351
        %1372 = vmatpush1.bf16.msra.mxu0 %v1348
        %1373 = vmatprep.subr.bf16.mxu0 0
        %1374 = vmatpush1.bf16.msra.mxu0 0
        %1375 = vmatprep.subr.bf16.mxu0 0
        %1376 = vmatpush1.bf16.msra.mxu0 0
        %1377 = vmatprep.subr.bf16.mxu0 0
        %1378 = vmatpush1.bf16.msra.mxu0 0
        %1379 = vmatprep.subr.bf16.mxu0 0
        %1380 = vmatpush1.bf16.msra.mxu0 0
        %1381 = vmatprep.subr.bf16.mxu0 0
        %1382 = vmatpush1.bf16.msra.mxu0 0
        %1383 = vmatprep.subr.bf16.mxu0 0
        %1384 = vmatpush1.bf16.msra.mxu0 0
        %1385 = vmatprep.subr.bf16.mxu0 0
        %1386 = vmatpush1.bf16.msra.mxu0 0
        %1387 = vmatprep.subr.bf16.mxu0 0
        %1388 = vmatpush1.bf16.msra.mxu0 0
        %1389 = vmatprep.subr.bf16.mxu0 0
        %1390 = vmatpush1.bf16.msra.mxu0 0
        %1391 = vmatprep.subr.bf16.mxu0 0
        %1392 = vmatpush1.bf16.msra.mxu0 0
        %1393 = vmatprep.subr.bf16.mxu0 0
        %1394 = vmatpush1.bf16.msra.mxu0 0
        %1395 = vmatprep.subr.bf16.mxu0 0
        %1396 = vmatpush1.bf16.msra.mxu0 0
        %1397 = vmatprep.subr.bf16.mxu0 0
        %1398 = vmatpush1.bf16.msra.mxu0 0
        %1399 = vmatprep.subr.bf16.mxu0 0
        %1400 = vmatpush1.bf16.msra.mxu0 0
        %1401 = vmatprep.subr.bf16.mxu0 0
        %1402 = vmatpush1.bf16.msra.mxu0 0
        %1403 = vmatprep.mubr.bf16.mxu0 0
        %1404 = vmatmul.mubr.bf16.gmra.mrb[0].mxu0 %v1345
        %v1405 = vpop.f32.mrb[0].mxu0
        %v1406 = vadd.f32 0.0, %v1405
        %v1407 = vpop.f32.mrb[0].mxu0
        %v1408 = vadd.f32 0.0, %v1407
        %v1409 = vpop.f32.mrb[0].mxu0
        %v1410 = vpop.f32.mrb[0].mxu0
        %1411 = vdwg.mxu0
        %1412 = vmatprep.subr.bf16.mxu0 %v1357
        %1413 = vmatpush1.bf16.msra.mxu0 %v1354
        %1414 = vmatprep.subr.bf16.mxu0 0
        %1415 = vmatpush1.bf16.msra.mxu0 0
        %1416 = vmatprep.subr.bf16.mxu0 0
        %1417 = vmatpush1.bf16.msra.mxu0 0
        %1418 = vmatprep.subr.bf16.mxu0 0
        %1419 = vmatpush1.bf16.msra.mxu0 0
        %1420 = vmatprep.subr.bf16.mxu0 0
        %1421 = vmatpush1.bf16.msra.mxu0 0
        %1422 = vmatprep.subr.bf16.mxu0 0
        %1423 = vmatpush1.bf16.msra.mxu0 0
        %1424 = vmatprep.subr.bf16.mxu0 0
        %1425 = vmatpush1.bf16.msra.mxu0 0
        %1426 = vmatprep.subr.bf16.mxu0 0
        %1427 = vmatpush1.bf16.msra.mxu0 0
        %1428 = vmatprep.subr.bf16.mxu0 0
        %1429 = vmatpush1.bf16.msra.mxu0 0
        %1430 = vmatprep.subr.bf16.mxu0 0
        %1431 = vmatpush1.bf16.msra.mxu0 0
        %1432 = vmatprep.subr.bf16.mxu0 0
        %1433 = vmatpush1.bf16.msra.mxu0 0
        %1434 = vmatprep.subr.bf16.mxu0 0
        %1435 = vmatpush1.bf16.msra.mxu0 0
        %1436 = vmatprep.subr.bf16.mxu0 0
        %1437 = vmatpush1.bf16.msra.mxu0 0
        %1438 = vmatprep.subr.bf16.mxu0 0
        %1439 = vmatpush1.bf16.msra.mxu0 0
        %1440 = vmatprep.subr.bf16.mxu0 0
        %1441 = vmatpush1.bf16.msra.mxu0 0
        %1442 = vmatprep.subr.bf16.mxu0 0
        %1443 = vmatpush1.bf16.msra.mxu0 0
        %1444 = vmatprep.mubr.bf16.mxu0 0
        %1445 = vmatmul.mubr.bf16.gmra.mrb[0].mxu0 %v1345
        %v1446 = vpop.f32.mrb[0].mxu0
        %v1447 = vadd.f32 0.0, %v1446
        %v1448 = vpop.f32.mrb[0].mxu0
        %v1449 = vadd.f32 0.0, %v1448
        %v1450 = vpop.f32.mrb[0].mxu0
        %v1451 = vpop.f32.mrb[0].mxu0
        %1452 = vdwg.mxu0
        %1453 = vmatprep.subr.bf16.mxu0 %v1363
        %1454 = vmatpush1.bf16.msra.mxu0 %v1360
        %1455 = vmatprep.subr.bf16.mxu0 0
        %1456 = vmatpush1.bf16.msra.mxu0 0
        %1457 = vmatprep.subr.bf16.mxu0 0
        %1458 = vmatpush1.bf16.msra.mxu0 0
        %1459 = vmatprep.subr.bf16.mxu0 0
        %1460 = vmatpush1.bf16.msra.mxu0 0
        %1461 = vmatprep.subr.bf16.mxu0 0
        %1462 = vmatpush1.bf16.msra.mxu0 0
        %1463 = vmatprep.subr.bf16.mxu0 0
        %1464 = vmatpush1.bf16.msra.mxu0 0
        %1465 = vmatprep.subr.bf16.mxu0 0
        %1466 = vmatpush1.bf16.msra.mxu0 0
        %1467 = vmatprep.subr.bf16.mxu0 0
        %1468 = vmatpush1.bf16.msra.mxu0 0
        %1469 = vmatprep.subr.bf16.mxu0 0
        %1470 = vmatpush1.bf16.msra.mxu0 0
        %1471 = vmatprep.subr.bf16.mxu0 0
        %1472 = vmatpush1.bf16.msra.mxu0 0
        %1473 = vmatprep.subr.bf16.mxu0 0
        %1474 = vmatpush1.bf16.msra.mxu0 0
        %1475 = vmatprep.subr.bf16.mxu0 0
        %1476 = vmatpush1.bf16.msra.mxu0 0
        %1477 = vmatprep.subr.bf16.mxu0 0
        %1478 = vmatpush1.bf16.msra.mxu0 0
        %1479 = vmatprep.subr.bf16.mxu0 0
        %1480 = vmatpush1.bf16.msra.mxu0 0
        %1481 = vmatprep.subr.bf16.mxu0 0
        %1482 = vmatpush1.bf16.msra.mxu0 0
        %1483 = vmatprep.subr.bf16.mxu0 0
        %1484 = vmatpush1.bf16.msra.mxu0 0
        %1485 = vmatprep.mubr.bf16.mxu0 0
        %1486 = vmatmul.mubr.bf16.gmra.mrb[0].mxu0 %v1345
        %v1487 = vpop.f32.mrb[0].mxu0
        %v1488 = vadd.f32 0.0, %v1487
        %v1489 = vpop.f32.mrb[0].mxu0
        %v1490 = vadd.f32 0.0, %v1489
        %v1491 = vpop.f32.mrb[0].mxu0
        %v1492 = vpop.f32.mrb[0].mxu0
        %1493 = vdwg.mxu0
        %1494 = vmatprep.subr.bf16.mxu0 %v1369
        %1495 = vmatpush1.bf16.msra.mxu0 %v1366
        %1496 = vmatprep.subr.bf16.mxu0 0
        %1497 = vmatpush1.bf16.msra.mxu0 0
        %1498 = vmatprep.subr.bf16.mxu0 0
        %1499 = vmatpush1.bf16.msra.mxu0 0
        %1500 = vmatprep.subr.bf16.mxu0 0
        %1501 = vmatpush1.bf16.msra.mxu0 0
        %1502 = vmatprep.subr.bf16.mxu0 0
        %1503 = vmatpush1.bf16.msra.mxu0 0
        %1504 = vmatprep.subr.bf16.mxu0 0
        %1505 = vmatpush1.bf16.msra.mxu0 0
        %1506 = vmatprep.subr.bf16.mxu0 0
        %1507 = vmatpush1.bf16.msra.mxu0 0
        %1508 = vmatprep.subr.bf16.mxu0 0
        %1509 = vmatpush1.bf16.msra.mxu0 0
        %1510 = vmatprep.subr.bf16.mxu0 0
        %1511 = vmatpush1.bf16.msra.mxu0 0
        %1512 = vmatprep.subr.bf16.mxu0 0
        %1513 = vmatpush1.bf16.msra.mxu0 0
        %1514 = vmatprep.subr.bf16.mxu0 0
        %1515 = vmatpush1.bf16.msra.mxu0 0
        %1516 = vmatprep.subr.bf16.mxu0 0
        %1517 = vmatpush1.bf16.msra.mxu0 0
        %1518 = vmatprep.subr.bf16.mxu0 0
        %1519 = vmatpush1.bf16.msra.mxu0 0
        %1520 = vmatprep.subr.bf16.mxu0 0
        %1521 = vmatpush1.bf16.msra.mxu0 0
        %1522 = vmatprep.subr.bf16.mxu0 0
        %1523 = vmatpush1.bf16.msra.mxu0 0
        %1524 = vmatprep.subr.bf16.mxu0 0
        %1525 = vmatpush1.bf16.msra.mxu0 0
        %1526 = vmatprep.mubr.bf16.mxu0 0
        %1527 = vmatmul.mubr.bf16.gmra.mrb[0].mxu0 %v1345
        %v1528 = vpop.f32.mrb[0].mxu0
        %v1529 = vadd.f32 0.0, %v1528
        %v1530 = vpop.f32.mrb[0].mxu0
        %v1531 = vadd.f32 0.0, %v1530
        %v1532 = vpop.f32.mrb[0].mxu0
        %v1533 = vpop.f32.mrb[0].mxu0
        %1534 = vdwg.mxu0
        %v1535 = vadd.f32 %v1280, %v1406
        %v1536 = vadd.f32 %v1281, %v1408
        %v1537 = vadd.f32 %v1282, %v1447
        %v1538 = vadd.f32 %v1283, %v1449
        %v1539 = vadd.f32 %v1284, %v1488
        %v1540 = vadd.f32 %v1285, %v1490
        %v1541 = vadd.f32 %v1286, %v1529
        %v1542 = vadd.f32 %v1287, %v1531
        %s1543 = scalar_lea.vmem %s1, 20
        %v1544 = vld [vmem:[%s1543] sm:$0xf]
        %1545 = vrot.lane.b32.xlu0 %v1309, 126
        %v1546 = vpop.permute.xlu0 %1545
        %1547 = vrot.lane.b32.xlu0 %v1310, 126
        %v1548 = vpop.permute.xlu0 %1547
        %1549 = vrot.lane.b32.xlu0 %v1311, 126
        %v1550 = vpop.permute.xlu0 %1549
        %1551 = vrot.lane.b32.xlu0 %v1312, 126
        %v1552 = vpop.permute.xlu0 %1551
        %1553 = vrot.lane.b32.xlu0 %v1313, 126
        %v1554 = vpop.permute.xlu0 %1553
        %1555 = vrot.lane.b32.xlu0 %v1314, 126
        %v1556 = vpop.permute.xlu0 %1555
        %1557 = vrot.lane.b32.xlu0 %v1315, 126
        %v1558 = vpop.permute.xlu0 %1557
        %1559 = vrot.lane.b32.xlu0 %v1316, 126
        %v1560 = vpop.permute.xlu0 %1559
        %1561 = vrot.lane.b32.xlu0 %v1317, 126
        %v1562 = vpop.permute.xlu0 %1561
        %v1563 = vsel %vm855, %v1546, %v1548
        %v1564 = vsel %vm855, %v1548, %v1550
        %v1565 = vsel %vm855, %v1550, %v1552
        %v1566 = vsel %vm855, %v1552, %v1554
        %v1567 = vsel %vm855, %v1554, %v1556
        %v1568 = vsel %vm855, %v1556, %v1558
        %v1569 = vsel %vm855, %v1558, %v1560
        %v1570 = vsel %vm855, %v1560, %v1562
        %v1572 = vsel %vm451, %v1544, 0
        %v1575 = vsel %vm455, %v1563, 0
        %v1578 = vsel %vm455, %v1564, 0
        %v1581 = vsel %vm455, %v1565, 0
        %v1584 = vsel %vm455, %v1566, 0
        %v1587 = vsel %vm455, %v1567, 0
        %v1590 = vsel %vm455, %v1568, 0
        %v1593 = vsel %vm455, %v1569, 0
        %v1596 = vsel %vm455, %v1570, 0
        %1598 = vmatprep.subr.bf16.mxu0 %v1578
        %1599 = vmatpush1.bf16.msra.mxu0 %v1575
        %1600 = vmatprep.subr.bf16.mxu0 0
        %1601 = vmatpush1.bf16.msra.mxu0 0
        %1602 = vmatprep.subr.bf16.mxu0 0
        %1603 = vmatpush1.bf16.msra.mxu0 0
        %1604 = vmatprep.subr.bf16.mxu0 0
        %1605 = vmatpush1.bf16.msra.mxu0 0
        %1606 = vmatprep.subr.bf16.mxu0 0
        %1607 = vmatpush1.bf16.msra.mxu0 0
        %1608 = vmatprep.subr.bf16.mxu0 0
        %1609 = vmatpush1.bf16.msra.mxu0 0
        %1610 = vmatprep.subr.bf16.mxu0 0
        %1611 = vmatpush1.bf16.msra.mxu0 0
        %1612 = vmatprep.subr.bf16.mxu0 0
        %1613 = vmatpush1.bf16.msra.mxu0 0
        %1614 = vmatprep.subr.bf16.mxu0 0
        %1615 = vmatpush1.bf16.msra.mxu0 0
        %1616 = vmatprep.subr.bf16.mxu0 0
        %1617 = vmatpush1.bf16.msra.mxu0 0
        %1618 = vmatprep.subr.bf16.mxu0 0
        %1619 = vmatpush1.bf16.msra.mxu0 0
        %1620 = vmatprep.subr.bf16.mxu0 0
        %1621 = vmatpush1.bf16.msra.mxu0 0
        %1622 = vmatprep.subr.bf16.mxu0 0
        %1623 = vmatpush1.bf16.msra.mxu0 0
        %1624 = vmatprep.subr.bf16.mxu0 0
        %1625 = vmatpush1.bf16.msra.mxu0 0
        %1626 = vmatprep.subr.bf16.mxu0 0
        %1627 = vmatpush1.bf16.msra.mxu0 0
        %1628 = vmatprep.subr.bf16.mxu0 0
        %1629 = vmatpush1.bf16.msra.mxu0 0
        %1630 = vmatprep.mubr.bf16.mxu0 0
        %1631 = vmatmul.mubr.bf16.gmra.mrb[0].mxu0 %v1572
        %v1632 = vpop.f32.mrb[0].mxu0
        %v1633 = vadd.f32 0.0, %v1632
        %v1634 = vpop.f32.mrb[0].mxu0
        %v1635 = vadd.f32 0.0, %v1634
        %v1636 = vpop.f32.mrb[0].mxu0
        %v1637 = vpop.f32.mrb[0].mxu0
        %1638 = vdwg.mxu0
        %1639 = vmatprep.subr.bf16.mxu0 %v1584
        %1640 = vmatpush1.bf16.msra.mxu0 %v1581
        %1641 = vmatprep.subr.bf16.mxu0 0
        %1642 = vmatpush1.bf16.msra.mxu0 0
        %1643 = vmatprep.subr.bf16.mxu0 0
        %1644 = vmatpush1.bf16.msra.mxu0 0
        %1645 = vmatprep.subr.bf16.mxu0 0
        %1646 = vmatpush1.bf16.msra.mxu0 0
        %1647 = vmatprep.subr.bf16.mxu0 0
        %1648 = vmatpush1.bf16.msra.mxu0 0
        %1649 = vmatprep.subr.bf16.mxu0 0
        %1650 = vmatpush1.bf16.msra.mxu0 0
        %1651 = vmatprep.subr.bf16.mxu0 0
        %1652 = vmatpush1.bf16.msra.mxu0 0
        %1653 = vmatprep.subr.bf16.mxu0 0
        %1654 = vmatpush1.bf16.msra.mxu0 0
        %1655 = vmatprep.subr.bf16.mxu0 0
        %1656 = vmatpush1.bf16.msra.mxu0 0
        %1657 = vmatprep.subr.bf16.mxu0 0
        %1658 = vmatpush1.bf16.msra.mxu0 0
        %1659 = vmatprep.subr.bf16.mxu0 0
        %1660 = vmatpush1.bf16.msra.mxu0 0
        %1661 = vmatprep.subr.bf16.mxu0 0
        %1662 = vmatpush1.bf16.msra.mxu0 0
        %1663 = vmatprep.subr.bf16.mxu0 0
        %1664 = vmatpush1.bf16.msra.mxu0 0
        %1665 = vmatprep.subr.bf16.mxu0 0
        %1666 = vmatpush1.bf16.msra.mxu0 0
        %1667 = vmatprep.subr.bf16.mxu0 0
        %1668 = vmatpush1.bf16.msra.mxu0 0
        %1669 = vmatprep.subr.bf16.mxu0 0
        %1670 = vmatpush1.bf16.msra.mxu0 0
        %1671 = vmatprep.mubr.bf16.mxu0 0
        %1672 = vmatmul.mubr.bf16.gmra.mrb[0].mxu0 %v1572
        %v1673 = vpop.f32.mrb[0].mxu0
        %v1674 = vadd.f32 0.0, %v1673
        %v1675 = vpop.f32.mrb[0].mxu0
        %v1676 = vadd.f32 0.0, %v1675
        %v1677 = vpop.f32.mrb[0].mxu0
        %v1678 = vpop.f32.mrb[0].mxu0
        %1679 = vdwg.mxu0
        %1680 = vmatprep.subr.bf16.mxu0 %v1590
        %1681 = vmatpush1.bf16.msra.mxu0 %v1587
        %1682 = vmatprep.subr.bf16.mxu0 0
        %1683 = vmatpush1.bf16.msra.mxu0 0
        %1684 = vmatprep.subr.bf16.mxu0 0
        %1685 = vmatpush1.bf16.msra.mxu0 0
        %1686 = vmatprep.subr.bf16.mxu0 0
        %1687 = vmatpush1.bf16.msra.mxu0 0
        %1688 = vmatprep.subr.bf16.mxu0 0
        %1689 = vmatpush1.bf16.msra.mxu0 0
        %1690 = vmatprep.subr.bf16.mxu0 0
        %1691 = vmatpush1.bf16.msra.mxu0 0
        %1692 = vmatprep.subr.bf16.mxu0 0
        %1693 = vmatpush1.bf16.msra.mxu0 0
        %1694 = vmatprep.subr.bf16.mxu0 0
        %1695 = vmatpush1.bf16.msra.mxu0 0
        %1696 = vmatprep.subr.bf16.mxu0 0
        %1697 = vmatpush1.bf16.msra.mxu0 0
        %1698 = vmatprep.subr.bf16.mxu0 0
        %1699 = vmatpush1.bf16.msra.mxu0 0
        %1700 = vmatprep.subr.bf16.mxu0 0
        %1701 = vmatpush1.bf16.msra.mxu0 0
        %1702 = vmatprep.subr.bf16.mxu0 0
        %1703 = vmatpush1.bf16.msra.mxu0 0
        %1704 = vmatprep.subr.bf16.mxu0 0
        %1705 = vmatpush1.bf16.msra.mxu0 0
        %1706 = vmatprep.subr.bf16.mxu0 0
        %1707 = vmatpush1.bf16.msra.mxu0 0
        %1708 = vmatprep.subr.bf16.mxu0 0
        %1709 = vmatpush1.bf16.msra.mxu0 0
        %1710 = vmatprep.subr.bf16.mxu0 0
        %1711 = vmatpush1.bf16.msra.mxu0 0
        %1712 = vmatprep.mubr.bf16.mxu0 0
        %1713 = vmatmul.mubr.bf16.gmra.mrb[0].mxu0 %v1572
        %v1714 = vpop.f32.mrb[0].mxu0
        %v1715 = vadd.f32 0.0, %v1714
        %v1716 = vpop.f32.mrb[0].mxu0
        %v1717 = vadd.f32 0.0, %v1716
        %v1718 = vpop.f32.mrb[0].mxu0
        %v1719 = vpop.f32.mrb[0].mxu0
        %1720 = vdwg.mxu0
        %1721 = vmatprep.subr.bf16.mxu0 %v1596
        %1722 = vmatpush1.bf16.msra.mxu0 %v1593
        %1723 = vmatprep.subr.bf16.mxu0 0
        %1724 = vmatpush1.bf16.msra.mxu0 0
        %1725 = vmatprep.subr.bf16.mxu0 0
        %1726 = vmatpush1.bf16.msra.mxu0 0
        %1727 = vmatprep.subr.bf16.mxu0 0
        %1728 = vmatpush1.bf16.msra.mxu0 0
        %1729 = vmatprep.subr.bf16.mxu0 0
        %1730 = vmatpush1.bf16.msra.mxu0 0
        %1731 = vmatprep.subr.bf16.mxu0 0
        %1732 = vmatpush1.bf16.msra.mxu0 0
        %1733 = vmatprep.subr.bf16.mxu0 0
        %1734 = vmatpush1.bf16.msra.mxu0 0
        %1735 = vmatprep.subr.bf16.mxu0 0
        %1736 = vmatpush1.bf16.msra.mxu0 0
        %1737 = vmatprep.subr.bf16.mxu0 0
        %1738 = vmatpush1.bf16.msra.mxu0 0
        %1739 = vmatprep.subr.bf16.mxu0 0
        %1740 = vmatpush1.bf16.msra.mxu0 0
        %1741 = vmatprep.subr.bf16.mxu0 0
        %1742 = vmatpush1.bf16.msra.mxu0 0
        %1743 = vmatprep.subr.bf16.mxu0 0
        %1744 = vmatpush1.bf16.msra.mxu0 0
        %1745 = vmatprep.subr.bf16.mxu0 0
        %1746 = vmatpush1.bf16.msra.mxu0 0
        %1747 = vmatprep.subr.bf16.mxu0 0
        %1748 = vmatpush1.bf16.msra.mxu0 0
        %1749 = vmatprep.subr.bf16.mxu0 0
        %1750 = vmatpush1.bf16.msra.mxu0 0
        %1751 = vmatprep.subr.bf16.mxu0 0
        %1752 = vmatpush1.bf16.msra.mxu0 0
        %1753 = vmatprep.mubr.bf16.mxu0 0
        %1754 = vmatmul.mubr.bf16.gmra.mrb[0].mxu0 %v1572
        %v1755 = vpop.f32.mrb[0].mxu0
        %v1756 = vadd.f32 0.0, %v1755
        %v1757 = vpop.f32.mrb[0].mxu0
        %v1758 = vadd.f32 0.0, %v1757
        %v1759 = vpop.f32.mrb[0].mxu0
        %v1760 = vpop.f32.mrb[0].mxu0
        %1761 = vdwg.mxu0
        %v1762 = vadd.f32 %v1535, %v1633
        %v1763 = vadd.f32 %v1536, %v1635
        %v1764 = vadd.f32 %v1537, %v1674
        %v1765 = vadd.f32 %v1538, %v1676
        %v1766 = vadd.f32 %v1539, %v1715
        %v1767 = vadd.f32 %v1540, %v1717
        %v1768 = vadd.f32 %v1541, %v1756
        %v1769 = vadd.f32 %v1542, %v1758
        %v1770 = vld [vmem:[%s387 + $0x8] sm:$0xff]
        %v1771 = vld [vmem:[%s387 + $0x10] sm:$0xff]
        %v1772 = vld [vmem:[%s387 + $0x18] sm:$0xff]
        %v1773 = vld [vmem:[%s387 + $0x20] sm:$0xff]
        %s1774 = scalar_lea.vmem %s1, 24
        %v1775 = vld [vmem:[%s1774] sm:$0xf]
        %v1780 = vunpack.c.l.b16 %v1770
        %v1781 = vunpack.c.h.b16 %v1770
        %v1782 = vunpack.c.l.b16 %v1771
        %v1783 = vunpack.c.h.b16 %v1771
        %v1784 = vunpack.c.l.b16 %v1772
        %v1785 = vunpack.c.h.b16 %v1772
        %v1786 = vunpack.c.l.b16 %v1773
        %v1787 = vunpack.c.h.b16 %v1773
        %v1788 = vpack.c.b16 %v1780, %v1780
        %v1789 = vpack.c.b16 %v1781, %v1781
        %v1790 = vpack.c.b16 %v1782, %v1782
        %v1791 = vpack.c.b16 %v1783, %v1783
        %v1792 = vpack.c.b16 %v1784, %v1784
        %v1793 = vpack.c.b16 %v1785, %v1785
        %v1794 = vpack.c.b16 %v1786, %v1786
        %v1795 = vpack.c.b16 %v1787, %v1787
        %v1797 = vsel %vm451, %v1775, 0
        %v1800 = vsel %vm455, %v1788, 0
        %v1803 = vsel %vm455, %v1789, 0
        %v1806 = vsel %vm455, %v1790, 0
        %v1809 = vsel %vm455, %v1791, 0
        %v1812 = vsel %vm455, %v1792, 0
        %v1815 = vsel %vm455, %v1793, 0
        %v1818 = vsel %vm455, %v1794, 0
        %v1821 = vsel %vm455, %v1795, 0
        %1823 = vmatprep.subr.bf16.mxu0 %v1803
        %1824 = vmatpush1.bf16.msra.mxu0 %v1800
        %1825 = vmatprep.subr.bf16.mxu0 0
        %1826 = vmatpush1.bf16.msra.mxu0 0
        %1827 = vmatprep.subr.bf16.mxu0 0
        %1828 = vmatpush1.bf16.msra.mxu0 0
        %1829 = vmatprep.subr.bf16.mxu0 0
        %1830 = vmatpush1.bf16.msra.mxu0 0
        %1831 = vmatprep.subr.bf16.mxu0 0
        %1832 = vmatpush1.bf16.msra.mxu0 0
        %1833 = vmatprep.subr.bf16.mxu0 0
        %1834 = vmatpush1.bf16.msra.mxu0 0
        %1835 = vmatprep.subr.bf16.mxu0 0
        %1836 = vmatpush1.bf16.msra.mxu0 0
        %1837 = vmatprep.subr.bf16.mxu0 0
        %1838 = vmatpush1.bf16.msra.mxu0 0
        %1839 = vmatprep.subr.bf16.mxu0 0
        %1840 = vmatpush1.bf16.msra.mxu0 0
        %1841 = vmatprep.subr.bf16.mxu0 0
        %1842 = vmatpush1.bf16.msra.mxu0 0
        %1843 = vmatprep.subr.bf16.mxu0 0
        %1844 = vmatpush1.bf16.msra.mxu0 0
        %1845 = vmatprep.subr.bf16.mxu0 0
        %1846 = vmatpush1.bf16.msra.mxu0 0
        %1847 = vmatprep.subr.bf16.mxu0 0
        %1848 = vmatpush1.bf16.msra.mxu0 0
        %1849 = vmatprep.subr.bf16.mxu0 0
        %1850 = vmatpush1.bf16.msra.mxu0 0
        %1851 = vmatprep.subr.bf16.mxu0 0
        %1852 = vmatpush1.bf16.msra.mxu0 0
        %1853 = vmatprep.subr.bf16.mxu0 0
        %1854 = vmatpush1.bf16.msra.mxu0 0
        %1855 = vmatprep.mubr.bf16.mxu0 0
        %1856 = vmatmul.mubr.bf16.gmra.mrb[0].mxu0 %v1797
        %v1857 = vpop.f32.mrb[0].mxu0
        %v1858 = vadd.f32 0.0, %v1857
        %v1859 = vpop.f32.mrb[0].mxu0
        %v1860 = vadd.f32 0.0, %v1859
        %v1861 = vpop.f32.mrb[0].mxu0
        %v1862 = vpop.f32.mrb[0].mxu0
        %1863 = vdwg.mxu0
        %1864 = vmatprep.subr.bf16.mxu0 %v1809
        %1865 = vmatpush1.bf16.msra.mxu0 %v1806
        %1866 = vmatprep.subr.bf16.mxu0 0
        %1867 = vmatpush1.bf16.msra.mxu0 0
        %1868 = vmatprep.subr.bf16.mxu0 0
        %1869 = vmatpush1.bf16.msra.mxu0 0
        %1870 = vmatprep.subr.bf16.mxu0 0
        %1871 = vmatpush1.bf16.msra.mxu0 0
        %1872 = vmatprep.subr.bf16.mxu0 0
        %1873 = vmatpush1.bf16.msra.mxu0 0
        %1874 = vmatprep.subr.bf16.mxu0 0
        %1875 = vmatpush1.bf16.msra.mxu0 0
        %1876 = vmatprep.subr.bf16.mxu0 0
        %1877 = vmatpush1.bf16.msra.mxu0 0
        %1878 = vmatprep.subr.bf16.mxu0 0
        %1879 = vmatpush1.bf16.msra.mxu0 0
        %1880 = vmatprep.subr.bf16.mxu0 0
        %1881 = vmatpush1.bf16.msra.mxu0 0
        %1882 = vmatprep.subr.bf16.mxu0 0
        %1883 = vmatpush1.bf16.msra.mxu0 0
        %1884 = vmatprep.subr.bf16.mxu0 0
        %1885 = vmatpush1.bf16.msra.mxu0 0
        %1886 = vmatprep.subr.bf16.mxu0 0
        %1887 = vmatpush1.bf16.msra.mxu0 0
        %1888 = vmatprep.subr.bf16.mxu0 0
        %1889 = vmatpush1.bf16.msra.mxu0 0
        %1890 = vmatprep.subr.bf16.mxu0 0
        %1891 = vmatpush1.bf16.msra.mxu0 0
        %1892 = vmatprep.subr.bf16.mxu0 0
        %1893 = vmatpush1.bf16.msra.mxu0 0
        %1894 = vmatprep.subr.bf16.mxu0 0
        %1895 = vmatpush1.bf16.msra.mxu0 0
        %1896 = vmatprep.mubr.bf16.mxu0 0
        %1897 = vmatmul.mubr.bf16.gmra.mrb[0].mxu0 %v1797
        %v1898 = vpop.f32.mrb[0].mxu0
        %v1899 = vadd.f32 0.0, %v1898
        %v1900 = vpop.f32.mrb[0].mxu0
        %v1901 = vadd.f32 0.0, %v1900
        %v1902 = vpop.f32.mrb[0].mxu0
        %v1903 = vpop.f32.mrb[0].mxu0
        %1904 = vdwg.mxu0
        %1905 = vmatprep.subr.bf16.mxu0 %v1815
        %1906 = vmatpush1.bf16.msra.mxu0 %v1812
        %1907 = vmatprep.subr.bf16.mxu0 0
        %1908 = vmatpush1.bf16.msra.mxu0 0
        %1909 = vmatprep.subr.bf16.mxu0 0
        %1910 = vmatpush1.bf16.msra.mxu0 0
        %1911 = vmatprep.subr.bf16.mxu0 0
        %1912 = vmatpush1.bf16.msra.mxu0 0
        %1913 = vmatprep.subr.bf16.mxu0 0
        %1914 = vmatpush1.bf16.msra.mxu0 0
        %1915 = vmatprep.subr.bf16.mxu0 0
        %1916 = vmatpush1.bf16.msra.mxu0 0
        %1917 = vmatprep.subr.bf16.mxu0 0
        %1918 = vmatpush1.bf16.msra.mxu0 0
        %1919 = vmatprep.subr.bf16.mxu0 0
        %1920 = vmatpush1.bf16.msra.mxu0 0
        %1921 = vmatprep.subr.bf16.mxu0 0
        %1922 = vmatpush1.bf16.msra.mxu0 0
        %1923 = vmatprep.subr.bf16.mxu0 0
        %1924 = vmatpush1.bf16.msra.mxu0 0
        %1925 = vmatprep.subr.bf16.mxu0 0
        %1926 = vmatpush1.bf16.msra.mxu0 0
        %1927 = vmatprep.subr.bf16.mxu0 0
        %1928 = vmatpush1.bf16.msra.mxu0 0
        %1929 = vmatprep.subr.bf16.mxu0 0
        %1930 = vmatpush1.bf16.msra.mxu0 0
        %1931 = vmatprep.subr.bf16.mxu0 0
        %1932 = vmatpush1.bf16.msra.mxu0 0
        %1933 = vmatprep.subr.bf16.mxu0 0
        %1934 = vmatpush1.bf16.msra.mxu0 0
        %1935 = vmatprep.subr.bf16.mxu0 0
        %1936 = vmatpush1.bf16.msra.mxu0 0
        %1937 = vmatprep.mubr.bf16.mxu0 0
        %1938 = vmatmul.mubr.bf16.gmra.mrb[0].mxu0 %v1797
        %v1939 = vpop.f32.mrb[0].mxu0
        %v1940 = vadd.f32 0.0, %v1939
        %v1941 = vpop.f32.mrb[0].mxu0
        %v1942 = vadd.f32 0.0, %v1941
        %v1943 = vpop.f32.mrb[0].mxu0
        %v1944 = vpop.f32.mrb[0].mxu0
        %1945 = vdwg.mxu0
        %1946 = vmatprep.subr.bf16.mxu0 %v1821
        %1947 = vmatpush1.bf16.msra.mxu0 %v1818
        %1948 = vmatprep.subr.bf16.mxu0 0
        %1949 = vmatpush1.bf16.msra.mxu0 0
        %1950 = vmatprep.subr.bf16.mxu0 0
        %1951 = vmatpush1.bf16.msra.mxu0 0
        %1952 = vmatprep.subr.bf16.mxu0 0
        %1953 = vmatpush1.bf16.msra.mxu0 0
        %1954 = vmatprep.subr.bf16.mxu0 0
        %1955 = vmatpush1.bf16.msra.mxu0 0
        %1956 = vmatprep.subr.bf16.mxu0 0
        %1957 = vmatpush1.bf16.msra.mxu0 0
        %1958 = vmatprep.subr.bf16.mxu0 0
        %1959 = vmatpush1.bf16.msra.mxu0 0
        %1960 = vmatprep.subr.bf16.mxu0 0
        %1961 = vmatpush1.bf16.msra.mxu0 0
        %1962 = vmatprep.subr.bf16.mxu0 0
        %1963 = vmatpush1.bf16.msra.mxu0 0
        %1964 = vmatprep.subr.bf16.mxu0 0
        %1965 = vmatpush1.bf16.msra.mxu0 0
        %1966 = vmatprep.subr.bf16.mxu0 0
        %1967 = vmatpush1.bf16.msra.mxu0 0
        %1968 = vmatprep.subr.bf16.mxu0 0
        %1969 = vmatpush1.bf16.msra.mxu0 0
        %1970 = vmatprep.subr.bf16.mxu0 0
        %1971 = vmatpush1.bf16.msra.mxu0 0
        %1972 = vmatprep.subr.bf16.mxu0 0
        %1973 = vmatpush1.bf16.msra.mxu0 0
        %1974 = vmatprep.subr.bf16.mxu0 0
        %1975 = vmatpush1.bf16.msra.mxu0 0
        %1976 = vmatprep.subr.bf16.mxu0 0
        %1977 = vmatpush1.bf16.msra.mxu0 0
        %1978 = vmatprep.mubr.bf16.mxu0 0
        %1979 = vmatmul.mubr.bf16.gmra.mrb[0].mxu0 %v1797
        %v1980 = vpop.f32.mrb[0].mxu0
        %v1981 = vadd.f32 0.0, %v1980
        %v1982 = vpop.f32.mrb[0].mxu0
        %v1983 = vadd.f32 0.0, %v1982
        %v1984 = vpop.f32.mrb[0].mxu0
        %v1985 = vpop.f32.mrb[0].mxu0
        %1986 = vdwg.mxu0
        %v1987 = vadd.f32 %v1762, %v1858
        %v1988 = vadd.f32 %v1763, %v1860
        %v1989 = vadd.f32 %v1764, %v1899
        %v1990 = vadd.f32 %v1765, %v1901
        %v1991 = vadd.f32 %v1766, %v1940
        %v1992 = vadd.f32 %v1767, %v1942
        %v1993 = vadd.f32 %v1768, %v1981
        %v1994 = vadd.f32 %v1769, %v1983
        %v1995 = vld [vmem:[%s387 + $0x8] sm:$0xff]
        %v1996 = vld [vmem:[%s387 + $0x10] sm:$0xff]
        %v1997 = vld [vmem:[%s387 + $0x18] sm:$0xff]
        %v1998 = vld [vmem:[%s387 + $0x20] sm:$0xff]
        %v1999 = vld [vmem:[%s387 + $0x28] sm:$0xf]
        %s2000 = scalar_lea.vmem %s1, 28
        %v2001 = vld [vmem:[%s2000] sm:$0xf]
        %v2007 = vunpack.c.l.b16 %v1995
        %v2008 = vunpack.c.h.b16 %v1995
        %v2009 = vunpack.c.l.b16 %v1996
        %v2010 = vunpack.c.h.b16 %v1996
        %v2011 = vunpack.c.l.b16 %v1997
        %v2012 = vunpack.c.h.b16 %v1997
        %v2013 = vunpack.c.l.b16 %v1998
        %v2014 = vunpack.c.h.b16 %v1998
        %v2015 = vunpack.c.l.b16 %v1999
        %v2016 = vpack.c.b16 %v2007, %v2007
        %v2017 = vpack.c.b16 %v2008, %v2008
        %v2018 = vpack.c.b16 %v2009, %v2009
        %v2019 = vpack.c.b16 %v2010, %v2010
        %v2020 = vpack.c.b16 %v2011, %v2011
        %v2021 = vpack.c.b16 %v2012, %v2012
        %v2022 = vpack.c.b16 %v2013, %v2013
        %v2023 = vpack.c.b16 %v2014, %v2014
        %v2024 = vpack.c.b16 %v2015, %v2015
        %2025 = vrot.lane.b32.xlu0 %v2016, 127
        %v2026 = vpop.permute.xlu0 %2025
        %2027 = vrot.lane.b32.xlu0 %v2017, 127
        %v2028 = vpop.permute.xlu0 %2027
        %2029 = vrot.lane.b32.xlu0 %v2018, 127
        %v2030 = vpop.permute.xlu0 %2029
        %2031 = vrot.lane.b32.xlu0 %v2019, 127
        %v2032 = vpop.permute.xlu0 %2031
        %2033 = vrot.lane.b32.xlu0 %v2020, 127
        %v2034 = vpop.permute.xlu0 %2033
        %2035 = vrot.lane.b32.xlu0 %v2021, 127
        %v2036 = vpop.permute.xlu0 %2035
        %2037 = vrot.lane.b32.xlu0 %v2022, 127
        %v2038 = vpop.permute.xlu0 %2037
        %2039 = vrot.lane.b32.xlu0 %v2023, 127
        %v2040 = vpop.permute.xlu0 %2039
        %2041 = vrot.lane.b32.xlu0 %v2024, 127
        %v2042 = vpop.permute.xlu0 %2041
        %v2043 = vsel %vm442, %v2026, %v2028
        %v2044 = vsel %vm442, %v2028, %v2030
        %v2045 = vsel %vm442, %v2030, %v2032
        %v2046 = vsel %vm442, %v2032, %v2034
        %v2047 = vsel %vm442, %v2034, %v2036
        %v2048 = vsel %vm442, %v2036, %v2038
        %v2049 = vsel %vm442, %v2038, %v2040
        %v2050 = vsel %vm442, %v2040, %v2042
        %v2052 = vsel %vm451, %v2001, 0
        %v2055 = vsel %vm455, %v2043, 0
        %v2058 = vsel %vm455, %v2044, 0
        %v2061 = vsel %vm455, %v2045, 0
        %v2064 = vsel %vm455, %v2046, 0
        %v2067 = vsel %vm455, %v2047, 0
        %v2070 = vsel %vm455, %v2048, 0
        %v2073 = vsel %vm455, %v2049, 0
        %v2076 = vsel %vm455, %v2050, 0
        %2078 = vmatprep.subr.bf16.mxu0 %v2058
        %2079 = vmatpush1.bf16.msra.mxu0 %v2055
        %2080 = vmatprep.subr.bf16.mxu0 0
        %2081 = vmatpush1.bf16.msra.mxu0 0
        %2082 = vmatprep.subr.bf16.mxu0 0
        %2083 = vmatpush1.bf16.msra.mxu0 0
        %2084 = vmatprep.subr.bf16.mxu0 0
        %2085 = vmatpush1.bf16.msra.mxu0 0
        %2086 = vmatprep.subr.bf16.mxu0 0
        %2087 = vmatpush1.bf16.msra.mxu0 0
        %2088 = vmatprep.subr.bf16.mxu0 0
        %2089 = vmatpush1.bf16.msra.mxu0 0
        %2090 = vmatprep.subr.bf16.mxu0 0
        %2091 = vmatpush1.bf16.msra.mxu0 0
        %2092 = vmatprep.subr.bf16.mxu0 0
        %2093 = vmatpush1.bf16.msra.mxu0 0
        %2094 = vmatprep.subr.bf16.mxu0 0
        %2095 = vmatpush1.bf16.msra.mxu0 0
        %2096 = vmatprep.subr.bf16.mxu0 0
        %2097 = vmatpush1.bf16.msra.mxu0 0
        %2098 = vmatprep.subr.bf16.mxu0 0
        %2099 = vmatpush1.bf16.msra.mxu0 0
        %2100 = vmatprep.subr.bf16.mxu0 0
        %2101 = vmatpush1.bf16.msra.mxu0 0
        %2102 = vmatprep.subr.bf16.mxu0 0
        %2103 = vmatpush1.bf16.msra.mxu0 0
        %2104 = vmatprep.subr.bf16.mxu0 0
        %2105 = vmatpush1.bf16.msra.mxu0 0
        %2106 = vmatprep.subr.bf16.mxu0 0
        %2107 = vmatpush1.bf16.msra.mxu0 0
        %2108 = vmatprep.subr.bf16.mxu0 0
        %2109 = vmatpush1.bf16.msra.mxu0 0
        %2110 = vmatprep.mubr.bf16.mxu0 0
        %2111 = vmatmul.mubr.bf16.gmra.mrb[0].mxu0 %v2052
        %v2112 = vpop.f32.mrb[0].mxu0
        %v2113 = vadd.f32 0.0, %v2112
        %v2114 = vpop.f32.mrb[0].mxu0
        %v2115 = vadd.f32 0.0, %v2114
        %v2116 = vpop.f32.mrb[0].mxu0
        %v2117 = vpop.f32.mrb[0].mxu0
        %2118 = vdwg.mxu0
        %2119 = vmatprep.subr.bf16.mxu0 %v2064
        %2120 = vmatpush1.bf16.msra.mxu0 %v2061
        %2121 = vmatprep.subr.bf16.mxu0 0
        %2122 = vmatpush1.bf16.msra.mxu0 0
        %2123 = vmatprep.subr.bf16.mxu0 0
        %2124 = vmatpush1.bf16.msra.mxu0 0
        %2125 = vmatprep.subr.bf16.mxu0 0
        %2126 = vmatpush1.bf16.msra.mxu0 0
        %2127 = vmatprep.subr.bf16.mxu0 0
        %2128 = vmatpush1.bf16.msra.mxu0 0
        %2129 = vmatprep.subr.bf16.mxu0 0
        %2130 = vmatpush1.bf16.msra.mxu0 0
        %2131 = vmatprep.subr.bf16.mxu0 0
        %2132 = vmatpush1.bf16.msra.mxu0 0
        %2133 = vmatprep.subr.bf16.mxu0 0
        %2134 = vmatpush1.bf16.msra.mxu0 0
        %2135 = vmatprep.subr.bf16.mxu0 0
        %2136 = vmatpush1.bf16.msra.mxu0 0
        %2137 = vmatprep.subr.bf16.mxu0 0
        %2138 = vmatpush1.bf16.msra.mxu0 0
        %2139 = vmatprep.subr.bf16.mxu0 0
        %2140 = vmatpush1.bf16.msra.mxu0 0
        %2141 = vmatprep.subr.bf16.mxu0 0
        %2142 = vmatpush1.bf16.msra.mxu0 0
        %2143 = vmatprep.subr.bf16.mxu0 0
        %2144 = vmatpush1.bf16.msra.mxu0 0
        %2145 = vmatprep.subr.bf16.mxu0 0
        %2146 = vmatpush1.bf16.msra.mxu0 0
        %2147 = vmatprep.subr.bf16.mxu0 0
        %2148 = vmatpush1.bf16.msra.mxu0 0
        %2149 = vmatprep.subr.bf16.mxu0 0
        %2150 = vmatpush1.bf16.msra.mxu0 0
        %2151 = vmatprep.mubr.bf16.mxu0 0
        %2152 = vmatmul.mubr.bf16.gmra.mrb[0].mxu0 %v2052
        %v2153 = vpop.f32.mrb[0].mxu0
        %v2154 = vadd.f32 0.0, %v2153
        %v2155 = vpop.f32.mrb[0].mxu0
        %v2156 = vadd.f32 0.0, %v2155
        %v2157 = vpop.f32.mrb[0].mxu0
        %v2158 = vpop.f32.mrb[0].mxu0
        %2159 = vdwg.mxu0
        %2160 = vmatprep.subr.bf16.mxu0 %v2070
        %2161 = vmatpush1.bf16.msra.mxu0 %v2067
        %2162 = vmatprep.subr.bf16.mxu0 0
        %2163 = vmatpush1.bf16.msra.mxu0 0
        %2164 = vmatprep.subr.bf16.mxu0 0
        %2165 = vmatpush1.bf16.msra.mxu0 0
        %2166 = vmatprep.subr.bf16.mxu0 0
        %2167 = vmatpush1.bf16.msra.mxu0 0
        %2168 = vmatprep.subr.bf16.mxu0 0
        %2169 = vmatpush1.bf16.msra.mxu0 0
        %2170 = vmatprep.subr.bf16.mxu0 0
        %2171 = vmatpush1.bf16.msra.mxu0 0
        %2172 = vmatprep.subr.bf16.mxu0 0
        %2173 = vmatpush1.bf16.msra.mxu0 0
        %2174 = vmatprep.subr.bf16.mxu0 0
        %2175 = vmatpush1.bf16.msra.mxu0 0
        %2176 = vmatprep.subr.bf16.mxu0 0
        %2177 = vmatpush1.bf16.msra.mxu0 0
        %2178 = vmatprep.subr.bf16.mxu0 0
        %2179 = vmatpush1.bf16.msra.mxu0 0
        %2180 = vmatprep.subr.bf16.mxu0 0
        %2181 = vmatpush1.bf16.msra.mxu0 0
        %2182 = vmatprep.subr.bf16.mxu0 0
        %2183 = vmatpush1.bf16.msra.mxu0 0
        %2184 = vmatprep.subr.bf16.mxu0 0
        %2185 = vmatpush1.bf16.msra.mxu0 0
        %2186 = vmatprep.subr.bf16.mxu0 0
        %2187 = vmatpush1.bf16.msra.mxu0 0
        %2188 = vmatprep.subr.bf16.mxu0 0
        %2189 = vmatpush1.bf16.msra.mxu0 0
        %2190 = vmatprep.subr.bf16.mxu0 0
        %2191 = vmatpush1.bf16.msra.mxu0 0
        %2192 = vmatprep.mubr.bf16.mxu0 0
        %2193 = vmatmul.mubr.bf16.gmra.mrb[0].mxu0 %v2052
        %v2194 = vpop.f32.mrb[0].mxu0
        %v2195 = vadd.f32 0.0, %v2194
        %v2196 = vpop.f32.mrb[0].mxu0
        %v2197 = vadd.f32 0.0, %v2196
        %v2198 = vpop.f32.mrb[0].mxu0
        %v2199 = vpop.f32.mrb[0].mxu0
        %2200 = vdwg.mxu0
        %2201 = vmatprep.subr.bf16.mxu0 %v2076
        %2202 = vmatpush1.bf16.msra.mxu0 %v2073
        %2203 = vmatprep.subr.bf16.mxu0 0
        %2204 = vmatpush1.bf16.msra.mxu0 0
        %2205 = vmatprep.subr.bf16.mxu0 0
        %2206 = vmatpush1.bf16.msra.mxu0 0
        %2207 = vmatprep.subr.bf16.mxu0 0
        %2208 = vmatpush1.bf16.msra.mxu0 0
        %2209 = vmatprep.subr.bf16.mxu0 0
        %2210 = vmatpush1.bf16.msra.mxu0 0
        %2211 = vmatprep.subr.bf16.mxu0 0
        %2212 = vmatpush1.bf16.msra.mxu0 0
        %2213 = vmatprep.subr.bf16.mxu0 0
        %2214 = vmatpush1.bf16.msra.mxu0 0
        %2215 = vmatprep.subr.bf16.mxu0 0
        %2216 = vmatpush1.bf16.msra.mxu0 0
        %2217 = vmatprep.subr.bf16.mxu0 0
        %2218 = vmatpush1.bf16.msra.mxu0 0
        %2219 = vmatprep.subr.bf16.mxu0 0
        %2220 = vmatpush1.bf16.msra.mxu0 0
        %2221 = vmatprep.subr.bf16.mxu0 0
        %2222 = vmatpush1.bf16.msra.mxu0 0
        %2223 = vmatprep.subr.bf16.mxu0 0
        %2224 = vmatpush1.bf16.msra.mxu0 0
        %2225 = vmatprep.subr.bf16.mxu0 0
        %2226 = vmatpush1.bf16.msra.mxu0 0
        %2227 = vmatprep.subr.bf16.mxu0 0
        %2228 = vmatpush1.bf16.msra.mxu0 0
        %2229 = vmatprep.subr.bf16.mxu0 0
        %2230 = vmatpush1.bf16.msra.mxu0 0
        %2231 = vmatprep.subr.bf16.mxu0 0
        %2232 = vmatpush1.bf16.msra.mxu0 0
        %2233 = vmatprep.mubr.bf16.mxu0 0
        %2234 = vmatmul.mubr.bf16.gmra.mrb[0].mxu0 %v2052
        %v2235 = vpop.f32.mrb[0].mxu0
        %v2236 = vadd.f32 0.0, %v2235
        %v2237 = vpop.f32.mrb[0].mxu0
        %v2238 = vadd.f32 0.0, %v2237
        %v2239 = vpop.f32.mrb[0].mxu0
        %v2240 = vpop.f32.mrb[0].mxu0
        %2241 = vdwg.mxu0
        %v2242 = vadd.f32 %v1987, %v2113
        %v2243 = vadd.f32 %v1988, %v2115
        %v2244 = vadd.f32 %v1989, %v2154
        %v2245 = vadd.f32 %v1990, %v2156
        %v2246 = vadd.f32 %v1991, %v2195
        %v2247 = vadd.f32 %v1992, %v2197
        %v2248 = vadd.f32 %v1993, %v2236
        %v2249 = vadd.f32 %v1994, %v2238
        %s2250 = scalar_lea.vmem %s1, 32
        %v2251 = vld [vmem:[%s2250] sm:$0xf]
        %2252 = vrot.lane.b32.xlu0 %v2016, 126
        %v2253 = vpop.permute.xlu0 %2252
        %2254 = vrot.lane.b32.xlu0 %v2017, 126
        %v2255 = vpop.permute.xlu0 %2254
        %2256 = vrot.lane.b32.xlu0 %v2018, 126
        %v2257 = vpop.permute.xlu0 %2256
        %2258 = vrot.lane.b32.xlu0 %v2019, 126
        %v2259 = vpop.permute.xlu0 %2258
        %2260 = vrot.lane.b32.xlu0 %v2020, 126
        %v2261 = vpop.permute.xlu0 %2260
        %2262 = vrot.lane.b32.xlu0 %v2021, 126
        %v2263 = vpop.permute.xlu0 %2262
        %2264 = vrot.lane.b32.xlu0 %v2022, 126
        %v2265 = vpop.permute.xlu0 %2264
        %2266 = vrot.lane.b32.xlu0 %v2023, 126
        %v2267 = vpop.permute.xlu0 %2266
        %2268 = vrot.lane.b32.xlu0 %v2024, 126
        %v2269 = vpop.permute.xlu0 %2268
        %v2270 = vsel %vm855, %v2253, %v2255
        %v2271 = vsel %vm855, %v2255, %v2257
        %v2272 = vsel %vm855, %v2257, %v2259
        %v2273 = vsel %vm855, %v2259, %v2261
        %v2274 = vsel %vm855, %v2261, %v2263
        %v2275 = vsel %vm855, %v2263, %v2265
        %v2276 = vsel %vm855, %v2265, %v2267
        %v2277 = vsel %vm855, %v2267, %v2269
        %v2279 = vsel %vm451, %v2251, 0
        %v2282 = vsel %vm455, %v2270, 0
        %v2285 = vsel %vm455, %v2271, 0
        %v2288 = vsel %vm455, %v2272, 0
        %v2291 = vsel %vm455, %v2273, 0
        %v2294 = vsel %vm455, %v2274, 0
        %v2297 = vsel %vm455, %v2275, 0
        %v2300 = vsel %vm455, %v2276, 0
        %v2303 = vsel %vm455, %v2277, 0
        %2305 = vmatprep.subr.bf16.mxu0 %v2285
        %2306 = vmatpush1.bf16.msra.mxu0 %v2282
        %2307 = vmatprep.subr.bf16.mxu0 0
        %2308 = vmatpush1.bf16.msra.mxu0 0
        %2309 = vmatprep.subr.bf16.mxu0 0
        %2310 = vmatpush1.bf16.msra.mxu0 0
        %2311 = vmatprep.subr.bf16.mxu0 0
        %2312 = vmatpush1.bf16.msra.mxu0 0
        %2313 = vmatprep.subr.bf16.mxu0 0
        %2314 = vmatpush1.bf16.msra.mxu0 0
        %2315 = vmatprep.subr.bf16.mxu0 0
        %2316 = vmatpush1.bf16.msra.mxu0 0
        %2317 = vmatprep.subr.bf16.mxu0 0
        %2318 = vmatpush1.bf16.msra.mxu0 0
        %2319 = vmatprep.subr.bf16.mxu0 0
        %2320 = vmatpush1.bf16.msra.mxu0 0
        %2321 = vmatprep.subr.bf16.mxu0 0
        %2322 = vmatpush1.bf16.msra.mxu0 0
        %2323 = vmatprep.subr.bf16.mxu0 0
        %2324 = vmatpush1.bf16.msra.mxu0 0
        %2325 = vmatprep.subr.bf16.mxu0 0
        %2326 = vmatpush1.bf16.msra.mxu0 0
        %2327 = vmatprep.subr.bf16.mxu0 0
        %2328 = vmatpush1.bf16.msra.mxu0 0
        %2329 = vmatprep.subr.bf16.mxu0 0
        %2330 = vmatpush1.bf16.msra.mxu0 0
        %2331 = vmatprep.subr.bf16.mxu0 0
        %2332 = vmatpush1.bf16.msra.mxu0 0
        %2333 = vmatprep.subr.bf16.mxu0 0
        %2334 = vmatpush1.bf16.msra.mxu0 0
        %2335 = vmatprep.subr.bf16.mxu0 0
        %2336 = vmatpush1.bf16.msra.mxu0 0
        %2337 = vmatprep.mubr.bf16.mxu0 0
        %2338 = vmatmul.mubr.bf16.gmra.mrb[0].mxu0 %v2279
        %v2339 = vpop.f32.mrb[0].mxu0
        %v2340 = vadd.f32 0.0, %v2339
        %v2341 = vpop.f32.mrb[0].mxu0
        %v2342 = vadd.f32 0.0, %v2341
        %v2343 = vpop.f32.mrb[0].mxu0
        %v2344 = vpop.f32.mrb[0].mxu0
        %2345 = vdwg.mxu0
        %2346 = vmatprep.subr.bf16.mxu0 %v2291
        %2347 = vmatpush1.bf16.msra.mxu0 %v2288
        %2348 = vmatprep.subr.bf16.mxu0 0
        %2349 = vmatpush1.bf16.msra.mxu0 0
        %2350 = vmatprep.subr.bf16.mxu0 0
        %2351 = vmatpush1.bf16.msra.mxu0 0
        %2352 = vmatprep.subr.bf16.mxu0 0
        %2353 = vmatpush1.bf16.msra.mxu0 0
        %2354 = vmatprep.subr.bf16.mxu0 0
        %2355 = vmatpush1.bf16.msra.mxu0 0
        %2356 = vmatprep.subr.bf16.mxu0 0
        %2357 = vmatpush1.bf16.msra.mxu0 0
        %2358 = vmatprep.subr.bf16.mxu0 0
        %2359 = vmatpush1.bf16.msra.mxu0 0
        %2360 = vmatprep.subr.bf16.mxu0 0
        %2361 = vmatpush1.bf16.msra.mxu0 0
        %2362 = vmatprep.subr.bf16.mxu0 0
        %2363 = vmatpush1.bf16.msra.mxu0 0
        %2364 = vmatprep.subr.bf16.mxu0 0
        %2365 = vmatpush1.bf16.msra.mxu0 0
        %2366 = vmatprep.subr.bf16.mxu0 0
        %2367 = vmatpush1.bf16.msra.mxu0 0
        %2368 = vmatprep.subr.bf16.mxu0 0
        %2369 = vmatpush1.bf16.msra.mxu0 0
        %2370 = vmatprep.subr.bf16.mxu0 0
        %2371 = vmatpush1.bf16.msra.mxu0 0
        %2372 = vmatprep.subr.bf16.mxu0 0
        %2373 = vmatpush1.bf16.msra.mxu0 0
        %2374 = vmatprep.subr.bf16.mxu0 0
        %2375 = vmatpush1.bf16.msra.mxu0 0
        %2376 = vmatprep.subr.bf16.mxu0 0
        %2377 = vmatpush1.bf16.msra.mxu0 0
        %2378 = vmatprep.mubr.bf16.mxu0 0
        %2379 = vmatmul.mubr.bf16.gmra.mrb[0].mxu0 %v2279
        %v2380 = vpop.f32.mrb[0].mxu0
        %v2381 = vadd.f32 0.0, %v2380
        %v2382 = vpop.f32.mrb[0].mxu0
        %v2383 = vadd.f32 0.0, %v2382
        %v2384 = vpop.f32.mrb[0].mxu0
        %v2385 = vpop.f32.mrb[0].mxu0
        %2386 = vdwg.mxu0
        %2387 = vmatprep.subr.bf16.mxu0 %v2297
        %2388 = vmatpush1.bf16.msra.mxu0 %v2294
        %2389 = vmatprep.subr.bf16.mxu0 0
        %2390 = vmatpush1.bf16.msra.mxu0 0
        %2391 = vmatprep.subr.bf16.mxu0 0
        %2392 = vmatpush1.bf16.msra.mxu0 0
        %2393 = vmatprep.subr.bf16.mxu0 0
        %2394 = vmatpush1.bf16.msra.mxu0 0
        %2395 = vmatprep.subr.bf16.mxu0 0
        %2396 = vmatpush1.bf16.msra.mxu0 0
        %2397 = vmatprep.subr.bf16.mxu0 0
        %2398 = vmatpush1.bf16.msra.mxu0 0
        %2399 = vmatprep.subr.bf16.mxu0 0
        %2400 = vmatpush1.bf16.msra.mxu0 0
        %2401 = vmatprep.subr.bf16.mxu0 0
        %2402 = vmatpush1.bf16.msra.mxu0 0
        %2403 = vmatprep.subr.bf16.mxu0 0
        %2404 = vmatpush1.bf16.msra.mxu0 0
        %2405 = vmatprep.subr.bf16.mxu0 0
        %2406 = vmatpush1.bf16.msra.mxu0 0
        %2407 = vmatprep.subr.bf16.mxu0 0
        %2408 = vmatpush1.bf16.msra.mxu0 0
        %2409 = vmatprep.subr.bf16.mxu0 0
        %2410 = vmatpush1.bf16.msra.mxu0 0
        %2411 = vmatprep.subr.bf16.mxu0 0
        %2412 = vmatpush1.bf16.msra.mxu0 0
        %2413 = vmatprep.subr.bf16.mxu0 0
        %2414 = vmatpush1.bf16.msra.mxu0 0
        %2415 = vmatprep.subr.bf16.mxu0 0
        %2416 = vmatpush1.bf16.msra.mxu0 0
        %2417 = vmatprep.subr.bf16.mxu0 0
        %2418 = vmatpush1.bf16.msra.mxu0 0
        %2419 = vmatprep.mubr.bf16.mxu0 0
        %2420 = vmatmul.mubr.bf16.gmra.mrb[0].mxu0 %v2279
        %v2421 = vpop.f32.mrb[0].mxu0
        %v2422 = vadd.f32 0.0, %v2421
        %v2423 = vpop.f32.mrb[0].mxu0
        %v2424 = vadd.f32 0.0, %v2423
        %v2425 = vpop.f32.mrb[0].mxu0
        %v2426 = vpop.f32.mrb[0].mxu0
        %2427 = vdwg.mxu0
        %2428 = vmatprep.subr.bf16.mxu0 %v2303
        %2429 = vmatpush1.bf16.msra.mxu0 %v2300
        %2430 = vmatprep.subr.bf16.mxu0 0
        %2431 = vmatpush1.bf16.msra.mxu0 0
        %2432 = vmatprep.subr.bf16.mxu0 0
        %2433 = vmatpush1.bf16.msra.mxu0 0
        %2434 = vmatprep.subr.bf16.mxu0 0
        %2435 = vmatpush1.bf16.msra.mxu0 0
        %2436 = vmatprep.subr.bf16.mxu0 0
        %2437 = vmatpush1.bf16.msra.mxu0 0
        %2438 = vmatprep.subr.bf16.mxu0 0
        %2439 = vmatpush1.bf16.msra.mxu0 0
        %2440 = vmatprep.subr.bf16.mxu0 0
        %2441 = vmatpush1.bf16.msra.mxu0 0
        %2442 = vmatprep.subr.bf16.mxu0 0
        %2443 = vmatpush1.bf16.msra.mxu0 0
        %2444 = vmatprep.subr.bf16.mxu0 0
        %2445 = vmatpush1.bf16.msra.mxu0 0
        %2446 = vmatprep.subr.bf16.mxu0 0
        %2447 = vmatpush1.bf16.msra.mxu0 0
        %2448 = vmatprep.subr.bf16.mxu0 0
        %2449 = vmatpush1.bf16.msra.mxu0 0
        %2450 = vmatprep.subr.bf16.mxu0 0
        %2451 = vmatpush1.bf16.msra.mxu0 0
        %2452 = vmatprep.subr.bf16.mxu0 0
        %2453 = vmatpush1.bf16.msra.mxu0 0
        %2454 = vmatprep.subr.bf16.mxu0 0
        %2455 = vmatpush1.bf16.msra.mxu0 0
        %2456 = vmatprep.subr.bf16.mxu0 0
        %2457 = vmatpush1.bf16.msra.mxu0 0
        %2458 = vmatprep.subr.bf16.mxu0 0
        %2459 = vmatpush1.bf16.msra.mxu0 0
        %2460 = vmatprep.mubr.bf16.mxu0 0
        %2461 = vmatmul.mubr.bf16.gmra.mrb[0].mxu0 %v2279
        %v2462 = vpop.f32.mrb[0].mxu0
        %v2463 = vadd.f32 0.0, %v2462
        %v2464 = vpop.f32.mrb[0].mxu0
        %v2465 = vadd.f32 0.0, %v2464
        %v2466 = vpop.f32.mrb[0].mxu0
        %v2467 = vpop.f32.mrb[0].mxu0
        %2468 = vdwg.mxu0
        %v2469 = vadd.f32 %v2242, %v2340
        %v2470 = vadd.f32 %v2243, %v2342
        %v2471 = vadd.f32 %v2244, %v2381
        %v2472 = vadd.f32 %v2245, %v2383
        %v2473 = vadd.f32 %v2246, %v2422
        %v2474 = vadd.f32 %v2247, %v2424
        %v2475 = vadd.f32 %v2248, %v2463
        %v2476 = vadd.f32 %v2249, %v2465
        %v2477 = vld [vmem:[%s2] sm:$0xff]
        %2479 = vset.pattern.permute.xlu0 0
        %2480 = vperm.xlu0 %2479, %v2477
        %v2481 = vpop.permute.xlu0 %2480
        %v2483 = vadd.f32 %v2469, %v2481
        %v2484 = vadd.f32 %v2470, %v2481
        %v2485 = vadd.f32 %v2471, %v2481
        %v2486 = vadd.f32 %v2472, %v2481
        %v2487 = vadd.f32 %v2473, %v2481
        %v2488 = vadd.f32 %v2474, %v2481
        %v2489 = vadd.f32 %v2475, %v2481
        %v2490 = vadd.f32 %v2476, %v2481
        %v2491 = vmax.f32 %v2483, 0.0
        %v2492 = vmax.f32 %v2484, 0.0
        %v2493 = vmax.f32 %v2485, 0.0
        %v2494 = vmax.f32 %v2486, 0.0
        %v2495 = vmax.f32 %v2487, 0.0
        %v2496 = vmax.f32 %v2488, 0.0
        %v2497 = vmax.f32 %v2489, 0.0
        %v2498 = vmax.f32 %v2490, 0.0
        %v2499 = vpack.c.bf16 %v2491, %v2491
        %v2500 = vpack.c.bf16 %v2492, %v2492
        %v2501 = vpack.c.bf16 %v2493, %v2493
        %v2502 = vpack.c.bf16 %v2494, %v2494
        %v2503 = vpack.c.bf16 %v2495, %v2495
        %v2504 = vpack.c.bf16 %v2496, %v2496
        %v2505 = vpack.c.bf16 %v2497, %v2497
        %v2506 = vpack.c.bf16 %v2498, %v2498
        %v2507 = vld [vmem:[%s3] sm:$0xf]
        %v2508 = vld [vmem:[%s3 + $0x4] sm:$0xf]
        %v2509 = vld [vmem:[%s4] sm:$0xff]
        %v2510 = vld [vmem:[%s4 + $0x8] sm:$0x7f]
        %2512 = vset.pattern.permute.xlu0 0
        %2513 = vperm.xlu0 %2512, %v2509
        %v2514 = vpop.permute.xlu0 %2513
        %2517 = vset.pattern.permute.xlu0 0
        %2518 = vperm.xlu0 %2517, %v2510
        %v2519 = vpop.permute.xlu0 %2518
        %v2523 = vunpack.c.l.b16 %v2507
        %v2524 = vunpack.c.l.b16 %v2508
        %v2525 = vpack.c.b16 %v2524, %v2523
        %v2527 = vsel %vm451, %v2525, 0
        %v2530 = vsel %vm455, %v2499, 0
        %v2533 = vsel %vm455, %v2500, 0
        %v2536 = vsel %vm455, %v2501, 0
        %v2539 = vsel %vm455, %v2502, 0
        %v2542 = vsel %vm455, %v2503, 0
        %v2545 = vsel %vm455, %v2504, 0
        %v2548 = vsel %vm455, %v2505, 0
        %v2551 = vsel %vm455, %v2506, 0
        %2553 = vmatprep.subr.bf16.mxu0 %v2533
        %2554 = vmatpush1.bf16.msra.mxu0 %v2530
        %2555 = vmatprep.subr.bf16.mxu0 0
        %2556 = vmatpush1.bf16.msra.mxu0 0
        %2557 = vmatprep.subr.bf16.mxu0 0
        %2558 = vmatpush1.bf16.msra.mxu0 0
        %2559 = vmatprep.subr.bf16.mxu0 0
        %2560 = vmatpush1.bf16.msra.mxu0 0
        %2561 = vmatprep.subr.bf16.mxu0 0
        %2562 = vmatpush1.bf16.msra.mxu0 0
        %2563 = vmatprep.subr.bf16.mxu0 0
        %2564 = vmatpush1.bf16.msra.mxu0 0
        %2565 = vmatprep.subr.bf16.mxu0 0
        %2566 = vmatpush1.bf16.msra.mxu0 0
        %2567 = vmatprep.subr.bf16.mxu0 0
        %2568 = vmatpush1.bf16.msra.mxu0 0
        %2569 = vmatprep.subr.bf16.mxu0 0
        %2570 = vmatpush1.bf16.msra.mxu0 0
        %2571 = vmatprep.subr.bf16.mxu0 0
        %2572 = vmatpush1.bf16.msra.mxu0 0
        %2573 = vmatprep.subr.bf16.mxu0 0
        %2574 = vmatpush1.bf16.msra.mxu0 0
        %2575 = vmatprep.subr.bf16.mxu0 0
        %2576 = vmatpush1.bf16.msra.mxu0 0
        %2577 = vmatprep.subr.bf16.mxu0 0
        %2578 = vmatpush1.bf16.msra.mxu0 0
        %2579 = vmatprep.subr.bf16.mxu0 0
        %2580 = vmatpush1.bf16.msra.mxu0 0
        %2581 = vmatprep.subr.bf16.mxu0 0
        %2582 = vmatpush1.bf16.msra.mxu0 0
        %2583 = vmatprep.subr.bf16.mxu0 0
        %2584 = vmatpush1.bf16.msra.mxu0 0
        %2585 = vmatprep.mubr.bf16.mxu0 0
        %2586 = vmatmul.mubr.bf16.gmra.mrb[0].mxu0 %v2527
        %v2587 = vpop.f32.mrb[0].mxu0
        %v2588 = vadd.f32 %v2514, %v2587
        %v2589 = vpop.f32.mrb[0].mxu0
        %v2590 = vadd.f32 %v2514, %v2589
        %v2591 = vpop.f32.mrb[0].mxu0
        %v2592 = vadd.f32 %v2519, %v2591
        %v2593 = vpop.f32.mrb[0].mxu0
        %v2594 = vadd.f32 %v2519, %v2593
        %2595 = vdwg.mxu0
        %2596 = vmatprep.subr.bf16.mxu0 %v2539
        %2597 = vmatpush1.bf16.msra.mxu0 %v2536
        %2598 = vmatprep.subr.bf16.mxu0 0
        %2599 = vmatpush1.bf16.msra.mxu0 0
        %2600 = vmatprep.subr.bf16.mxu0 0
        %2601 = vmatpush1.bf16.msra.mxu0 0
        %2602 = vmatprep.subr.bf16.mxu0 0
        %2603 = vmatpush1.bf16.msra.mxu0 0
        %2604 = vmatprep.subr.bf16.mxu0 0
        %2605 = vmatpush1.bf16.msra.mxu0 0
        %2606 = vmatprep.subr.bf16.mxu0 0
        %2607 = vmatpush1.bf16.msra.mxu0 0
        %2608 = vmatprep.subr.bf16.mxu0 0
        %2609 = vmatpush1.bf16.msra.mxu0 0
        %2610 = vmatprep.subr.bf16.mxu0 0
        %2611 = vmatpush1.bf16.msra.mxu0 0
        %2612 = vmatprep.subr.bf16.mxu0 0
        %2613 = vmatpush1.bf16.msra.mxu0 0
        %2614 = vmatprep.subr.bf16.mxu0 0
        %2615 = vmatpush1.bf16.msra.mxu0 0
        %2616 = vmatprep.subr.bf16.mxu0 0
        %2617 = vmatpush1.bf16.msra.mxu0 0
        %2618 = vmatprep.subr.bf16.mxu0 0
        %2619 = vmatpush1.bf16.msra.mxu0 0
        %2620 = vmatprep.subr.bf16.mxu0 0
        %2621 = vmatpush1.bf16.msra.mxu0 0
        %2622 = vmatprep.subr.bf16.mxu0 0
        %2623 = vmatpush1.bf16.msra.mxu0 0
        %2624 = vmatprep.subr.bf16.mxu0 0
        %2625 = vmatpush1.bf16.msra.mxu0 0
        %2626 = vmatprep.subr.bf16.mxu0 0
        %2627 = vmatpush1.bf16.msra.mxu0 0
        %2628 = vmatprep.mubr.bf16.mxu0 0
        %2629 = vmatmul.mubr.bf16.gmra.mrb[0].mxu0 %v2527
        %v2630 = vpop.f32.mrb[0].mxu0
        %v2631 = vadd.f32 %v2514, %v2630
        %v2632 = vpop.f32.mrb[0].mxu0
        %v2633 = vadd.f32 %v2514, %v2632
        %v2634 = vpop.f32.mrb[0].mxu0
        %v2635 = vadd.f32 %v2519, %v2634
        %v2636 = vpop.f32.mrb[0].mxu0
        %v2637 = vadd.f32 %v2519, %v2636
        %2638 = vdwg.mxu0
        %2639 = vmatprep.subr.bf16.mxu0 %v2545
        %2640 = vmatpush1.bf16.msra.mxu0 %v2542
        %2641 = vmatprep.subr.bf16.mxu0 0
        %2642 = vmatpush1.bf16.msra.mxu0 0
        %2643 = vmatprep.subr.bf16.mxu0 0
        %2644 = vmatpush1.bf16.msra.mxu0 0
        %2645 = vmatprep.subr.bf16.mxu0 0
        %2646 = vmatpush1.bf16.msra.mxu0 0
        %2647 = vmatprep.subr.bf16.mxu0 0
        %2648 = vmatpush1.bf16.msra.mxu0 0
        %2649 = vmatprep.subr.bf16.mxu0 0
        %2650 = vmatpush1.bf16.msra.mxu0 0
        %2651 = vmatprep.subr.bf16.mxu0 0
        %2652 = vmatpush1.bf16.msra.mxu0 0
        %2653 = vmatprep.subr.bf16.mxu0 0
        %2654 = vmatpush1.bf16.msra.mxu0 0
        %2655 = vmatprep.subr.bf16.mxu0 0
        %2656 = vmatpush1.bf16.msra.mxu0 0
        %2657 = vmatprep.subr.bf16.mxu0 0
        %2658 = vmatpush1.bf16.msra.mxu0 0
        %2659 = vmatprep.subr.bf16.mxu0 0
        %2660 = vmatpush1.bf16.msra.mxu0 0
        %2661 = vmatprep.subr.bf16.mxu0 0
        %2662 = vmatpush1.bf16.msra.mxu0 0
        %2663 = vmatprep.subr.bf16.mxu0 0
        %2664 = vmatpush1.bf16.msra.mxu0 0
        %2665 = vmatprep.subr.bf16.mxu0 0
        %2666 = vmatpush1.bf16.msra.mxu0 0
        %2667 = vmatprep.subr.bf16.mxu0 0
        %2668 = vmatpush1.bf16.msra.mxu0 0
        %2669 = vmatprep.subr.bf16.mxu0 0
        %2670 = vmatpush1.bf16.msra.mxu0 0
        %2671 = vmatprep.mubr.bf16.mxu0 0
        %2672 = vmatmul.mubr.bf16.gmra.mrb[0].mxu0 %v2527
        %v2673 = vpop.f32.mrb[0].mxu0
        %v2674 = vadd.f32 %v2514, %v2673
        %v2675 = vpop.f32.mrb[0].mxu0
        %v2676 = vadd.f32 %v2514, %v2675
        %v2677 = vpop.f32.mrb[0].mxu0
        %v2678 = vadd.f32 %v2519, %v2677
        %v2679 = vpop.f32.mrb[0].mxu0
        %v2680 = vadd.f32 %v2519, %v2679
        %2681 = vdwg.mxu0
        %2682 = vmatprep.subr.bf16.mxu0 %v2551
        %2683 = vmatpush1.bf16.msra.mxu0 %v2548
        %2684 = vmatprep.subr.bf16.mxu0 0
        %2685 = vmatpush1.bf16.msra.mxu0 0
        %2686 = vmatprep.subr.bf16.mxu0 0
        %2687 = vmatpush1.bf16.msra.mxu0 0
        %2688 = vmatprep.subr.bf16.mxu0 0
        %2689 = vmatpush1.bf16.msra.mxu0 0
        %2690 = vmatprep.subr.bf16.mxu0 0
        %2691 = vmatpush1.bf16.msra.mxu0 0
        %2692 = vmatprep.subr.bf16.mxu0 0
        %2693 = vmatpush1.bf16.msra.mxu0 0
        %2694 = vmatprep.subr.bf16.mxu0 0
        %2695 = vmatpush1.bf16.msra.mxu0 0
        %2696 = vmatprep.subr.bf16.mxu0 0
        %2697 = vmatpush1.bf16.msra.mxu0 0
        %2698 = vmatprep.subr.bf16.mxu0 0
        %2699 = vmatpush1.bf16.msra.mxu0 0
        %2700 = vmatprep.subr.bf16.mxu0 0
        %2701 = vmatpush1.bf16.msra.mxu0 0
        %2702 = vmatprep.subr.bf16.mxu0 0
        %2703 = vmatpush1.bf16.msra.mxu0 0
        %2704 = vmatprep.subr.bf16.mxu0 0
        %2705 = vmatpush1.bf16.msra.mxu0 0
        %2706 = vmatprep.subr.bf16.mxu0 0
        %2707 = vmatpush1.bf16.msra.mxu0 0
        %2708 = vmatprep.subr.bf16.mxu0 0
        %2709 = vmatpush1.bf16.msra.mxu0 0
        %2710 = vmatprep.subr.bf16.mxu0 0
        %2711 = vmatpush1.bf16.msra.mxu0 0
        %2712 = vmatprep.subr.bf16.mxu0 0
        %2713 = vmatpush1.bf16.msra.mxu0 0
        %2714 = vmatprep.mubr.bf16.mxu0 0
        %2715 = vmatmul.mubr.bf16.gmra.mrb[0].mxu0 %v2527
        %v2716 = vpop.f32.mrb[0].mxu0
        %v2717 = vadd.f32 %v2514, %v2716
        %v2718 = vpop.f32.mrb[0].mxu0
        %v2719 = vadd.f32 %v2514, %v2718
        %v2720 = vpop.f32.mrb[0].mxu0
        %v2721 = vadd.f32 %v2519, %v2720
        %v2722 = vpop.f32.mrb[0].mxu0
        %v2723 = vadd.f32 %v2519, %v2722
        %2724 = vdwg.mxu0
        %v2725 = vld [vmem:[%s6] sm:$0x7]
        %v2726 = vld [vmem:[%s6 + $0x3] sm:$0x7]
        %v2727 = vld [vmem:[%s302] ss:$2 sm:$0xff]
        %v2729 = vlaneseq
        %v2730 = vshrl.u32 %v2729, 7
        %v2731 = vsub.s32 0, %v2730
        %v2732 = vrot.slane %v2727, %v2731
        %v2733 = vlaneseq
        %v2734 = vshrl.u32 %v2733, 7
        %v2735 = vsub.s32 1, %v2734
        %v2736 = vrot.slane %v2727, %v2735
        %v2737 = vlaneseq
        %v2738 = vshrl.u32 %v2737, 7
        %v2739 = vsub.s32 2, %v2738
        %v2740 = vrot.slane %v2727, %v2739
        %v2741 = vlaneseq
        %v2742 = vshrl.u32 %v2741, 7
        %v2743 = vsub.s32 3, %v2742
        %v2744 = vrot.slane %v2727, %v2743
        %v2745 = vlaneseq
        %v2746 = vshrl.u32 %v2745, 7
        %v2747 = vsub.s32 4, %v2746
        %v2748 = vrot.slane %v2727, %v2747
        %v2749 = vlaneseq
        %v2750 = vshrl.u32 %v2749, 7
        %v2751 = vsub.s32 5, %v2750
        %v2752 = vrot.slane %v2727, %v2751
        %v2753 = vlaneseq
        %v2754 = vshrl.u32 %v2753, 7
        %v2755 = vsub.s32 6, %v2754
        %v2756 = vrot.slane %v2727, %v2755
        %v2757 = vlaneseq
        %v2758 = vshrl.u32 %v2757, 7
        %v2759 = vsub.s32 7, %v2758
        %v2760 = vrot.slane %v2727, %v2759
        %2770 = vset.pattern.permute.xlu0 1
        %2771 = vperm.xlu0 %2770, %v2725
        %v2772 = vpop.permute.xlu0 %2771
        %v2774 = vadd.f32 %v2732, %v2772
        %v2775 = vadd.f32 %v2736, %v2772
        %v2776 = vadd.f32 %v2740, %v2772
        %v2777 = vadd.f32 %v2744, %v2772
        %v2778 = vadd.f32 %v2748, %v2772
        %v2779 = vadd.f32 %v2752, %v2772
        %v2780 = vadd.f32 %v2756, %v2772
        %v2781 = vadd.f32 %v2760, %v2772
        %s2782 = scalar_lea.vmem %s302, 1
        %v2783 = vld [vmem:[%s2782] ss:$2 sm:$0xff]
        %v2785 = vlaneseq
        %v2786 = vshrl.u32 %v2785, 7
        %v2787 = vsub.s32 0, %v2786
        %v2788 = vrot.slane %v2783, %v2787
        %v2789 = vlaneseq
        %v2790 = vshrl.u32 %v2789, 7
        %v2791 = vsub.s32 1, %v2790
        %v2792 = vrot.slane %v2783, %v2791
        %v2793 = vlaneseq
        %v2794 = vshrl.u32 %v2793, 7
        %v2795 = vsub.s32 2, %v2794
        %v2796 = vrot.slane %v2783, %v2795
        %v2797 = vlaneseq
        %v2798 = vshrl.u32 %v2797, 7
        %v2799 = vsub.s32 3, %v2798
        %v2800 = vrot.slane %v2783, %v2799
        %v2801 = vlaneseq
        %v2802 = vshrl.u32 %v2801, 7
        %v2803 = vsub.s32 4, %v2802
        %v2804 = vrot.slane %v2783, %v2803
        %v2805 = vlaneseq
        %v2806 = vshrl.u32 %v2805, 7
        %v2807 = vsub.s32 5, %v2806
        %v2808 = vrot.slane %v2783, %v2807
        %v2809 = vlaneseq
        %v2810 = vshrl.u32 %v2809, 7
        %v2811 = vsub.s32 6, %v2810
        %v2812 = vrot.slane %v2783, %v2811
        %v2813 = vlaneseq
        %v2814 = vshrl.u32 %v2813, 7
        %v2815 = vsub.s32 7, %v2814
        %v2816 = vrot.slane %v2783, %v2815
        %2826 = vset.pattern.permute.xlu0 1
        %2827 = vperm.xlu0 %2826, %v2726
        %v2828 = vpop.permute.xlu0 %2827
        %v2830 = vadd.f32 %v2788, %v2828
        %v2831 = vadd.f32 %v2792, %v2828
        %v2832 = vadd.f32 %v2796, %v2828
        %v2833 = vadd.f32 %v2800, %v2828
        %v2834 = vadd.f32 %v2804, %v2828
        %v2835 = vadd.f32 %v2808, %v2828
        %v2836 = vadd.f32 %v2812, %v2828
        %v2837 = vadd.f32 %v2816, %v2828
        %2838 = vset.pattern.permute.xlu0 0
        %2839 = vperm.xlu0 %2838, %v2725
        %v2840 = vpop.permute.xlu0 %2839
        %v2842 = vmul.f32 %v2588, %v2840
        %v2843 = vmul.f32 %v2590, %v2840
        %v2844 = vmul.f32 %v2631, %v2840
        %v2845 = vmul.f32 %v2633, %v2840
        %v2846 = vmul.f32 %v2674, %v2840
        %v2847 = vmul.f32 %v2676, %v2840
        %v2848 = vmul.f32 %v2717, %v2840
        %v2849 = vmul.f32 %v2719, %v2840
        %v2850 = vadd.f32 %v2842, %v2774
        %v2851 = vadd.f32 %v2843, %v2775
        %v2852 = vadd.f32 %v2844, %v2776
        %v2853 = vadd.f32 %v2845, %v2777
        %v2854 = vadd.f32 %v2846, %v2778
        %v2855 = vadd.f32 %v2847, %v2779
        %v2856 = vadd.f32 %v2848, %v2780
        %v2857 = vadd.f32 %v2849, %v2781
        %2858 = vset.pattern.permute.xlu0 0
        %2859 = vperm.xlu0 %2858, %v2726
        %v2860 = vpop.permute.xlu0 %2859
        %v2861 = vrot.slane %v2860, 5
        %v2863 = vmul.f32 %v2588, %v2861
        %v2864 = vmul.f32 %v2590, %v2861
        %v2865 = vmul.f32 %v2631, %v2861
        %v2866 = vmul.f32 %v2633, %v2861
        %v2867 = vmul.f32 %v2674, %v2861
        %v2868 = vmul.f32 %v2676, %v2861
        %v2869 = vmul.f32 %v2717, %v2861
        %v2870 = vmul.f32 %v2719, %v2861
        %v2879 = vrot.slane %v2830, 5
        %v2880 = vrot.slane %v2831, 5
        %v2881 = vrot.slane %v2832, 5
        %v2882 = vrot.slane %v2833, 5
        %v2883 = vrot.slane %v2834, 5
        %v2884 = vrot.slane %v2835, 5
        %v2885 = vrot.slane %v2836, 5
        %v2886 = vrot.slane %v2837, 5
        %v2895 = vadd.f32 %v2863, %v2879
        %v2896 = vadd.f32 %v2864, %v2880
        %v2897 = vadd.f32 %v2865, %v2881
        %v2898 = vadd.f32 %v2866, %v2882
        %v2899 = vadd.f32 %v2867, %v2883
        %v2900 = vadd.f32 %v2868, %v2884
        %v2901 = vadd.f32 %v2869, %v2885
        %v2902 = vadd.f32 %v2870, %v2886
        %v2903 = vmin.f32 %v2588, 4.1351666
        %v2904 = vmin.f32 %v2590, 4.1351666
        %v2905 = vmin.f32 %v2631, 4.1351666
        %v2906 = vmin.f32 %v2633, 4.1351666
        %v2907 = vmin.f32 %v2674, 4.1351666
        %v2908 = vmin.f32 %v2676, 4.1351666
        %v2909 = vmin.f32 %v2717, 4.1351666
        %v2910 = vmin.f32 %v2719, 4.1351666
        %v2911 = vmin.f32 %v2592, 4.1351666
        %v2912 = vmin.f32 %v2594, 4.1351666
        %v2913 = vmin.f32 %v2635, 4.1351666
        %v2914 = vmin.f32 %v2637, 4.1351666
        %v2915 = vmin.f32 %v2678, 4.1351666
        %v2916 = vmin.f32 %v2680, 4.1351666
        %v2917 = vmin.f32 %v2721, 4.1351666
        %v2918 = vmin.f32 %v2723, 4.1351666
        %v2919 = vmul.f32 %v2903, 1.442695
        %v2920 = vpow.pop %v2919
        %v2921 = vmul.f32 %v2904, 1.442695
        %v2922 = vpow.pop %v2921
        %v2923 = vmul.f32 %v2905, 1.442695
        %v2924 = vpow.pop %v2923
        %v2925 = vmul.f32 %v2906, 1.442695
        %v2926 = vpow.pop %v2925
        %v2927 = vmul.f32 %v2907, 1.442695
        %v2928 = vpow.pop %v2927
        %v2929 = vmul.f32 %v2908, 1.442695
        %v2930 = vpow.pop %v2929
        %v2931 = vmul.f32 %v2909, 1.442695
        %v2932 = vpow.pop %v2931
        %v2933 = vmul.f32 %v2910, 1.442695
        %v2934 = vpow.pop %v2933
        %v2935 = vmul.f32 %v2911, 1.442695
        %v2936 = vpow.pop %v2935
        %v2937 = vmul.f32 %v2912, 1.442695
        %v2938 = vpow.pop %v2937
        %v2939 = vmul.f32 %v2913, 1.442695
        %v2940 = vpow.pop %v2939
        %v2941 = vmul.f32 %v2914, 1.442695
        %v2942 = vpow.pop %v2941
        %v2943 = vmul.f32 %v2915, 1.442695
        %v2944 = vpow.pop %v2943
        %v2945 = vmul.f32 %v2916, 1.442695
        %v2946 = vpow.pop %v2945
        %v2947 = vmul.f32 %v2917, 1.442695
        %v2948 = vpow.pop %v2947
        %v2949 = vmul.f32 %v2918, 1.442695
        %v2950 = vpow.pop %v2949
        %v2951 = vrot.slane %v2840, 2
        %v2953 = vmul.f32 %v2920, %v2951
        %v2954 = vmul.f32 %v2922, %v2951
        %v2955 = vmul.f32 %v2924, %v2951
        %v2956 = vmul.f32 %v2926, %v2951
        %v2957 = vmul.f32 %v2928, %v2951
        %v2958 = vmul.f32 %v2930, %v2951
        %v2959 = vmul.f32 %v2932, %v2951
        %v2960 = vmul.f32 %v2934, %v2951
        %v2961 = vmul.f32 %v2936, %v2951
        %v2962 = vmul.f32 %v2938, %v2951
        %v2963 = vmul.f32 %v2940, %v2951
        %v2964 = vmul.f32 %v2942, %v2951
        %v2965 = vmul.f32 %v2944, %v2951
        %v2966 = vmul.f32 %v2946, %v2951
        %v2967 = vmul.f32 %v2948, %v2951
        %v2968 = vmul.f32 %v2950, %v2951
        %v2969 = vrot.slane %v2860, 7
        %v2971 = vmul.f32 %v2936, %v2969
        %v2972 = vmul.f32 %v2938, %v2969
        %v2973 = vmul.f32 %v2940, %v2969
        %v2974 = vmul.f32 %v2942, %v2969
        %v2975 = vmul.f32 %v2944, %v2969
        %v2976 = vmul.f32 %v2946, %v2969
        %v2977 = vmul.f32 %v2948, %v2969
        %v2978 = vmul.f32 %v2950, %v2969
        %v2979 = vmul.f32 %v2953, 0.5
        %v2980 = vmul.f32 %v2954, 0.5
        %v2981 = vmul.f32 %v2955, 0.5
        %v2982 = vmul.f32 %v2956, 0.5
        %v2983 = vmul.f32 %v2957, 0.5
        %v2984 = vmul.f32 %v2958, 0.5
        %v2985 = vmul.f32 %v2959, 0.5
        %v2986 = vmul.f32 %v2960, 0.5
        %v2987 = vmul.f32 %v2961, 0.5
        %v2988 = vmul.f32 %v2962, 0.5
        %v2989 = vmul.f32 %v2963, 0.5
        %v2990 = vmul.f32 %v2964, 0.5
        %v2991 = vmul.f32 %v2965, 0.5
        %v2992 = vmul.f32 %v2966, 0.5
        %v2993 = vmul.f32 %v2967, 0.5
        %v2994 = vmul.f32 %v2968, 0.5
        %vm3011 = vcmask 1041408
        %v3012 = vrot.slane %v2979, 6
        %v3013 = vrot.slane %v2987, 6
        %v3014 = vsel %vm3011, %v3012, %v3013
        %v3015 = vrot.slane %v2980, 6
        %v3016 = vrot.slane %v2988, 6
        %v3017 = vsel %vm3011, %v3015, %v3016
        %v3018 = vrot.slane %v2981, 6
        %v3019 = vrot.slane %v2989, 6
        %v3020 = vsel %vm3011, %v3018, %v3019
        %v3021 = vrot.slane %v2982, 6
        %v3022 = vrot.slane %v2990, 6
        %v3023 = vsel %vm3011, %v3021, %v3022
        %v3024 = vrot.slane %v2983, 6
        %v3025 = vrot.slane %v2991, 6
        %v3026 = vsel %vm3011, %v3024, %v3025
        %v3027 = vrot.slane %v2984, 6
        %v3028 = vrot.slane %v2992, 6
        %v3029 = vsel %vm3011, %v3027, %v3028
        %v3030 = vrot.slane %v2985, 6
        %v3031 = vrot.slane %v2993, 6
        %v3032 = vsel %vm3011, %v3030, %v3031
        %v3033 = vrot.slane %v2986, 6
        %v3034 = vrot.slane %v2994, 6
        %v3035 = vsel %vm3011, %v3033, %v3034
        %v3044 = vsub.f32 %v2850, %v3014
        %v3045 = vsub.f32 %v2851, %v3017
        %v3046 = vsub.f32 %v2852, %v3020
        %v3047 = vsub.f32 %v2853, %v3023
        %v3048 = vsub.f32 %v2854, %v3026
        %v3049 = vsub.f32 %v2855, %v3029
        %v3050 = vsub.f32 %v2856, %v3032
        %v3051 = vsub.f32 %v2857, %v3035
        %3052 = vst [vmem:[%s286] sm:$0x7] %v3044
        %3053 = vst [vmem:[%s286 + $0x8] sm:$0x7] %v3045
        %3054 = vst [vmem:[%s286 + $0x10] sm:$0x7] %v3046
        %3055 = vst [vmem:[%s286 + $0x18] sm:$0x7] %v3047
        %3056 = vst [vmem:[%s286 + $0x20] sm:$0x7] %v3048
        %3057 = vst [vmem:[%s286 + $0x28] sm:$0x7] %v3049
        %3058 = vst [vmem:[%s286 + $0x30] sm:$0x7] %v3050
        %3059 = vst [vmem:[%s286 + $0x38] sm:$0x7] %v3051
        %v3060 = vmul.f32 %v2971, 0.5
        %v3061 = vmul.f32 %v2972, 0.5
        %v3062 = vmul.f32 %v2973, 0.5
        %v3063 = vmul.f32 %v2974, 0.5
        %v3064 = vmul.f32 %v2975, 0.5
        %v3065 = vmul.f32 %v2976, 0.5
        %v3066 = vmul.f32 %v2977, 0.5
        %v3067 = vmul.f32 %v2978, 0.5
        %v3076 = vrot.slane %v3060, 6
        %v3077 = vrot.slane %v3061, 6
        %v3078 = vrot.slane %v3062, 6
        %v3079 = vrot.slane %v3063, 6
        %v3080 = vrot.slane %v3064, 6
        %v3081 = vrot.slane %v3065, 6
        %v3082 = vrot.slane %v3066, 6
        %v3083 = vrot.slane %v3067, 6
        %v3092 = vsub.f32 %v2895, %v3076
        %v3093 = vsub.f32 %v2896, %v3077
        %v3094 = vsub.f32 %v2897, %v3078
        %v3095 = vsub.f32 %v2898, %v3079
        %v3096 = vsub.f32 %v2899, %v3080
        %v3097 = vsub.f32 %v2900, %v3081
        %v3098 = vsub.f32 %v2901, %v3082
        %v3099 = vsub.f32 %v2902, %v3083
        %3100 = vst [vmem:[%s286] sm:$0x38] %v3092
        %3101 = vst [vmem:[%s286 + $0x8] sm:$0x38] %v3093
        %3102 = vst [vmem:[%s286 + $0x10] sm:$0x38] %v3094
        %3103 = vst [vmem:[%s286 + $0x18] sm:$0x38] %v3095
        %3104 = vst [vmem:[%s286 + $0x20] sm:$0x38] %v3096
        %3105 = vst [vmem:[%s286 + $0x28] sm:$0x38] %v3097
        %3106 = vst [vmem:[%s286 + $0x30] sm:$0x38] %v3098
        %3107 = vst [vmem:[%s286 + $0x38] sm:$0x38] %v3099
        %v3108 = vadd.f32 %v2850, %v3014
        %v3109 = vadd.f32 %v2851, %v3017
        %v3110 = vadd.f32 %v2852, %v3020
        %v3111 = vadd.f32 %v2853, %v3023
        %v3112 = vadd.f32 %v2854, %v3026
        %v3113 = vadd.f32 %v2855, %v3029
        %v3114 = vadd.f32 %v2856, %v3032
        %v3115 = vadd.f32 %v2857, %v3035
        %v3124 = vrot.slane %v3108, 2
        %v3125 = vrot.slane %v3109, 2
        %v3126 = vrot.slane %v3110, 2
        %v3127 = vrot.slane %v3111, 2
        %v3128 = vrot.slane %v3112, 2
        %v3129 = vrot.slane %v3113, 2
        %v3130 = vrot.slane %v3114, 2
        %v3131 = vrot.slane %v3115, 2
        %3140 = vst [vmem:[%s286] sm:$0xc0] %v3124
        %3141 = vst [vmem:[%s286 + $0x8] sm:$0xc0] %v3125
        %3142 = vst [vmem:[%s286 + $0x10] sm:$0xc0] %v3126
        %3143 = vst [vmem:[%s286 + $0x18] sm:$0xc0] %v3127
        %3144 = vst [vmem:[%s286 + $0x20] sm:$0xc0] %v3128
        %3145 = vst [vmem:[%s286 + $0x28] sm:$0xc0] %v3129
        %3146 = vst [vmem:[%s286 + $0x30] sm:$0xc0] %v3130
        %3147 = vst [vmem:[%s286 + $0x38] sm:$0xc0] %v3131
        %3148 = vst [vmem:[%s286 + $0x40] sm:$0x1] %v3124
        %3149 = vst [vmem:[%s286 + $0x48] sm:$0x1] %v3125
        %3150 = vst [vmem:[%s286 + $0x50] sm:$0x1] %v3126
        %3151 = vst [vmem:[%s286 + $0x58] sm:$0x1] %v3127
        %3152 = vst [vmem:[%s286 + $0x60] sm:$0x1] %v3128
        %3153 = vst [vmem:[%s286 + $0x68] sm:$0x1] %v3129
        %3154 = vst [vmem:[%s286 + $0x70] sm:$0x1] %v3130
        %3155 = vst [vmem:[%s286 + $0x78] sm:$0x1] %v3131
        %v3156 = vadd.f32 %v2895, %v3076
        %v3157 = vadd.f32 %v2896, %v3077
        %v3158 = vadd.f32 %v2897, %v3078
        %v3159 = vadd.f32 %v2898, %v3079
        %v3160 = vadd.f32 %v2899, %v3080
        %v3161 = vadd.f32 %v2900, %v3081
        %v3162 = vadd.f32 %v2901, %v3082
        %v3163 = vadd.f32 %v2902, %v3083
        %v3172 = vrot.slane %v3156, 2
        %v3173 = vrot.slane %v3157, 2
        %v3174 = vrot.slane %v3158, 2
        %v3175 = vrot.slane %v3159, 2
        %v3176 = vrot.slane %v3160, 2
        %v3177 = vrot.slane %v3161, 2
        %v3178 = vrot.slane %v3162, 2
        %v3179 = vrot.slane %v3163, 2
        %3188 = vst [vmem:[%s286 + $0x40] sm:$0xe] %v3172
        %3189 = vst [vmem:[%s286 + $0x48] sm:$0xe] %v3173
        %3190 = vst [vmem:[%s286 + $0x50] sm:$0xe] %v3174
        %3191 = vst [vmem:[%s286 + $0x58] sm:$0xe] %v3175
        %3192 = vst [vmem:[%s286 + $0x60] sm:$0xe] %v3176
        %3193 = vst [vmem:[%s286 + $0x68] sm:$0xe] %v3177
        %3194 = vst [vmem:[%s286 + $0x70] sm:$0xe] %v3178
        %3195 = vst [vmem:[%s286 + $0x78] sm:$0xe] %v3179
        %v3196 = vxor.u32 %v2592, 2147483648
        %v3197 = vxor.u32 %v2594, 2147483648
        %v3198 = vxor.u32 %v2635, 2147483648
        %v3199 = vxor.u32 %v2637, 2147483648
        %v3200 = vxor.u32 %v2678, 2147483648
        %v3201 = vxor.u32 %v2680, 2147483648
        %v3202 = vxor.u32 %v2721, 2147483648
        %v3203 = vxor.u32 %v2723, 2147483648
        %v3204 = vmul.f32 %v3196, 1.442695
        %v3205 = vpow.pop %v3204
        %v3206 = vmul.f32 %v3197, 1.442695
        %v3207 = vpow.pop %v3206
        %v3208 = vmul.f32 %v3198, 1.442695
        %v3209 = vpow.pop %v3208
        %v3210 = vmul.f32 %v3199, 1.442695
        %v3211 = vpow.pop %v3210
        %v3212 = vmul.f32 %v3200, 1.442695
        %v3213 = vpow.pop %v3212
        %v3214 = vmul.f32 %v3201, 1.442695
        %v3215 = vpow.pop %v3214
        %v3216 = vmul.f32 %v3202, 1.442695
        %v3217 = vpow.pop %v3216
        %v3218 = vmul.f32 %v3203, 1.442695
        %v3219 = vpow.pop %v3218
        %v3220 = vadd.f32 %v3205, 1.0
        %v3221 = vadd.f32 %v3207, 1.0
        %v3222 = vadd.f32 %v3209, 1.0
        %v3223 = vadd.f32 %v3211, 1.0
        %v3224 = vadd.f32 %v3213, 1.0
        %v3225 = vadd.f32 %v3215, 1.0
        %v3226 = vadd.f32 %v3217, 1.0
        %v3227 = vadd.f32 %v3219, 1.0
        %v3228 = vrcp.pop %v3220
        %v3229 = vmul.f32 1.0, %v3228
        %v3230 = vrcp.pop %v3221
        %v3231 = vmul.f32 1.0, %v3230
        %v3232 = vrcp.pop %v3222
        %v3233 = vmul.f32 1.0, %v3232
        %v3234 = vrcp.pop %v3223
        %v3235 = vmul.f32 1.0, %v3234
        %v3236 = vrcp.pop %v3224
        %v3237 = vmul.f32 1.0, %v3236
        %v3238 = vrcp.pop %v3225
        %v3239 = vmul.f32 1.0, %v3238
        %v3240 = vrcp.pop %v3226
        %v3241 = vmul.f32 1.0, %v3240
        %v3242 = vrcp.pop %v3227
        %v3243 = vmul.f32 1.0, %v3242
        %v3252 = vcombine.high %v3229, %v3231
        %v3253 = vcombine.high %v3233, %v3235
        %v3254 = vcombine.high %v3237, %v3239
        %v3255 = vcombine.high %v3241, %v3243
        %3260 = vst [vmem:[%s313] sm:$0x77] %v3252
        %3261 = vst [vmem:[%s313 + $0x8] sm:$0x77] %v3253
        %3262 = vst [vmem:[%s313 + $0x10] sm:$0x77] %v3254
        %3263 = vst [vmem:[%s313 + $0x18] sm:$0x77] %v3255
        %s3264 = sand.u32 %s173, 1
        %s3265 = sand.u32 %s173, 1
        %s3266 = smul.addr %s3265, 128
        %s3267 = scalar_lea.vmem [#allocation4], %s3266
        %s3268 = smul.u32 8, %s25
        %p3269 = scmp.lt.s32.totalorder %s24, 1
        %s3270 = scalar_select %p3269, %s24, 1
        %p3271 = scmp.lt.s32.totalorder %s3268, 15
        %s3272 = scalar_select %p3271, %s3268, 15
        %s3273 = smul.addr %s3270, 16
        %s3274 = sadd.s32 %s3272, %s3273
        %s3275 = smul.addr %s3274, 4
        %s3276 = scalar_lea.vmem %s8, %s3275
        // Predicated region
        $region61: #{tpu_custom_call.1} parent=43 // pred_check
          %p3277 = pneg %p183
        $region62: #{tpu_custom_call.1} parent=43 // pred_check_branch
          %3279 = sbr.rel (%p3277) target = $region64
        $region63: #{tpu_custom_call.1} parent=43 // pred_region
          %s3280 = smul.u32 8, %s25
          %s3281 = smul.addr %s24, 32
          %s3282 = sadd.s32 %s3280, %s3281
          %s3283 = smul.addr %s3282, 8
          %s3284 = scalar_lea.vmem %s7, %s3283
          // Predicated region
          $region65: #{tpu_custom_call.1} parent=63 // pred_check
            _
          $region66: #{tpu_custom_call.1} parent=63 // pred_check_branch
            %3286 = sbr.rel (0) target = $region68
          $region67: #{tpu_custom_call.1} parent=63 // pred_region
            // Predicated region
            $region69: #{tpu_custom_call.1} parent=67 // pred_check
              _
            $region70: #{tpu_custom_call.1} parent=67 // pred_check_branch
              %3288 = sbr.rel (0) target = $region72
            $region71: #{tpu_custom_call.1} parent=67 // pred_region
              loop: start=0, step=1, limit=1
              $region73: #{tpu_custom_call.1} parent=71 // loop_pre_header
                _
              $region74: #{tpu_custom_call.1} parent=71 // loop_header
                %s3290 = sphi 0, %s3294
                %p3291 = scmp.ge.s32.totalorder %s3290, 1
                %s3295 = sphi %s3267, %s3267
                %s3296 = sphi %s3284, %s3284
              $region75: #{tpu_custom_call.1} parent=71 // loop_header_branch
                %3293 = sbr.rel (%p3291) target = $region79
              $region76: #{tpu_custom_call.1} parent=71 // loop_body
                %v3297 = vld [vmem:[%s3295] sm:$0xff]
                %3298 = vst [vmem:[%s3296] sm:$0xff] %v3297
                %v3299 = vld [vmem:[%s3295 + $0x8] sm:$0xff]
                %3300 = vst [vmem:[%s3296 + $0x8] sm:$0xff] %v3299
                %v3301 = vld [vmem:[%s3295 + $0x10] sm:$0xff]
                %3302 = vst [vmem:[%s3296 + $0x10] sm:$0xff] %v3301
                %v3303 = vld [vmem:[%s3295 + $0x18] sm:$0xff]
                %3304 = vst [vmem:[%s3296 + $0x18] sm:$0xff] %v3303
                %v3305 = vld [vmem:[%s3295 + $0x20] sm:$0xff]
                %3306 = vst [vmem:[%s3296 + $0x20] sm:$0xff] %v3305
                %v3307 = vld [vmem:[%s3295 + $0x28] sm:$0xff]
                %3308 = vst [vmem:[%s3296 + $0x28] sm:$0xff] %v3307
                %v3309 = vld [vmem:[%s3295 + $0x30] sm:$0xff]
                %3310 = vst [vmem:[%s3296 + $0x30] sm:$0xff] %v3309
                %v3311 = vld [vmem:[%s3295 + $0x38] sm:$0xff]
                %3312 = vst [vmem:[%s3296 + $0x38] sm:$0xff] %v3311
                %v3313 = vld [vmem:[%s3295 + $0x40] sm:$0xff]
                %3314 = vst [vmem:[%s3296 + $0x80] sm:$0xff] %v3313
                %v3315 = vld [vmem:[%s3295 + $0x48] sm:$0xff]
                %3316 = vst [vmem:[%s3296 + $0x88] sm:$0xff] %v3315
                %v3317 = vld [vmem:[%s3295 + $0x50] sm:$0xff]
                %3318 = vst [vmem:[%s3296 + $0x90] sm:$0xff] %v3317
                %v3319 = vld [vmem:[%s3295 + $0x58] sm:$0xff]
                %3320 = vst [vmem:[%s3296 + $0x98] sm:$0xff] %v3319
                %v3321 = vld [vmem:[%s3295 + $0x60] sm:$0xff]
                %3322 = vst [vmem:[%s3296 + $0xa0] sm:$0xff] %v3321
                %v3323 = vld [vmem:[%s3295 + $0x68] sm:$0xff]
                %3324 = vst [vmem:[%s3296 + $0xa8] sm:$0xff] %v3323
                %v3325 = vld [vmem:[%s3295 + $0x70] sm:$0xff]
                %3326 = vst [vmem:[%s3296 + $0xb0] sm:$0xff] %v3325
                %v3327 = vld [vmem:[%s3295 + $0x78] sm:$0xff]
                %3328 = vst [vmem:[%s3296 + $0xb8] sm:$0xff] %v3327
              $region77: #{tpu_custom_call.1} parent=71 // loop_footer
                %s3294 = sadd.s32 1, %s3290
              $region78: #{tpu_custom_call.1} parent=71 // loop_footer_branch
                %3289 = sbr.rel target = $region74
              $region79: #{tpu_custom_call.1} parent=71 // loop_exit
                _
            $region72: #{tpu_custom_call.1} parent=67 // pred_fallthru
              _
            // Predicated region
            $region80: #{tpu_custom_call.1} parent=67 // pred_check
              _
            $region81: #{tpu_custom_call.1} parent=67 // pred_check_branch
              %3330 = sbr.rel target = $region83
            $region82: #{tpu_custom_call.1} parent=67 // pred_region
              _
            $region83: #{tpu_custom_call.1} parent=67 // pred_fallthru
              _
          $region68: #{tpu_custom_call.1} parent=63 // pred_fallthru
            _
          %3331 = vnop
        $region64: #{tpu_custom_call.1} parent=43 // pred_fallthru
          _
        // Predicated region
        $region84: #{tpu_custom_call.1} parent=43 // pred_check
          %p3332 = pneg %p211
        $region85: #{tpu_custom_call.1} parent=43 // pred_check_branch
          %3334 = sbr.rel (%p3332) target = $region87
        $region86: #{tpu_custom_call.1} parent=43 // pred_region
          %s3335 = smul.u32 8, %s25
        $region87: #{tpu_custom_call.1} parent=43 // pred_fallthru
          _
      $region44: #{tpu_custom_call.1} parent=5 // pred_fallthru
        _
      %p3336 = scmp.le.s32.totalorder 2, %s15
      // Predicated region
      $region88: #{tpu_custom_call.1} parent=5 // pred_check
        %p3337 = pneg %p3336
      $region89: #{tpu_custom_call.1} parent=5 // pred_check_branch
        %3339 = sbr.rel (%p3337) target = $region91
      $region90: #{tpu_custom_call.1} parent=5 // pred_region
        %s3340 = ssub.s32 %s15, 2
        // Predicated region
        $region92: #{tpu_custom_call.1} parent=90 // pred_check
          %p3341 = pneg %p189
        $region93: #{tpu_custom_call.1} parent=90 // pred_check_branch
          %3343 = sbr.rel (%p3341) target = $region95
        $region94: #{tpu_custom_call.1} parent=90 // pred_region
          %s3344 = sand.u32 %s174, 1
          %s3345 = sand.u32 %s174, 1
          %s3346 = smul.addr %s3345, 128
          %s3347 = scalar_lea.vmem [#allocation4], %s3346
        $region95: #{tpu_custom_call.1} parent=90 // pred_fallthru
          _
        // Predicated region
        $region96: #{tpu_custom_call.1} parent=90 // pred_check
          %p3348 = pneg %p217
        $region97: #{tpu_custom_call.1} parent=90 // pred_check_branch
          %3350 = sbr.rel (%p3348) target = $region99
        $region98: #{tpu_custom_call.1} parent=90 // pred_region
          %s3351 = smul.u32 8, %s27
          %p3352 = scmp.lt.s32.totalorder %s26, 1
          %s3353 = scalar_select %p3352, %s26, 1
          %p3354 = scmp.lt.s32.totalorder %s3351, 15
          %s3355 = scalar_select %p3354, %s3351, 15
          %s3356 = smul.addr %s3353, 16
          %s3357 = sadd.s32 %s3355, %s3356
          %s3358 = smul.addr %s3357, 4
          %s3359 = scalar_lea.vmem %s8, %s3358
        $region99: #{tpu_custom_call.1} parent=90 // pred_fallthru
          _
      $region91: #{tpu_custom_call.1} parent=5 // pred_fallthru
        _
    $region6: #{tpu_custom_call.1} parent=1 // loop_footer
      %s19 = sadd.s32 1, %s15
    $region7: #{tpu_custom_call.1} parent=1 // loop_footer_branch
      %14 = sbr.rel target = $region3
    $region8: #{tpu_custom_call.1} parent=1 // loop_exit
      _
  %3360 = vsyncmov [#allocation3]
  %s3361 = vpop.sfrf %3360
  %p3362 = scmp.eq.s32.totalorder %s3361, 0
  %p3363 = pneg %p3362
  %3365 = shalt.err (%p3363)
  %s3366 = scalar_lea.sflag [#allocation3], 1
  %3367 = vsyncmov %s3366
  %s3368 = vpop.sfrf %3367
  %p3369 = scmp.eq.s32.totalorder %s3368, 0
  %p3370 = pneg %p3369
  %3372 = shalt.err (%p3370)

</llo_original>
